<compile_context>
chip_gen: v5e
topology: v5e:2x2
jax: 0.10.0
libtpu: 0.0.40
codegen_flags: <defaults>
</compile_context>

<pallas_src>
import functools

import jax
import jax.numpy as jnp
from jax.experimental import pallas as pl
from jax.experimental.pallas import tpu as pltpu

_BN_EPS = 1e-5
_LANE = 128                       # lane-dense padding for channel / kdim axes
_BLOCK_M = 512                    # max GEMM row-tile size
_VMEM_LIMIT = 32 * 1024 * 1024    # fits scoped VMEM on v5e / v6e / v7x


def _round_up(x, m):
    return (x + m - 1) // m * m


# ------------------------------ Pallas kernels -------------------------------

def _fused_gen_kernel(p_ref, w_ref, b_ref, g_ref, bt_ref, o_ref,
                      y_sc, sum_sc, ssq_sc, *, block_m, m_true):
    """Fused ConvTranspose-as-GEMM + bias + BatchNorm(batch stats) + ReLU.

    Grid iterates over M row-tiles ("arbitrary").  Each step runs the bf16
    MXU GEMM with f32 accumulation, parks the f32 tile in a resident VMEM
    scratch and accumulates per-channel sum / sum-of-squares (padded tail
    rows masked).  The last step folds gamma/beta with the exact batch stats
    and writes the normalized + ReLU'd activation (bf16) for the whole M
    range -- no HBM round trip of the pre-BN activation.
    """
    i = pl.program_id(0)

    @pl.when(i == 0)
    def _():
        sum_sc[...] = jnp.zeros_like(sum_sc)
        ssq_sc[...] = jnp.zeros_like(ssq_sc)

    y = jnp.dot(p_ref[...], w_ref[...], preferred_element_type=jnp.float32)
    y = y + b_ref[...]
    y_sc[i] = y                                     # keep exact f32 tile resident

    # Mask padded tail rows out of the statistics (m_true is a static int).
    rows = i * block_m + jax.lax.broadcasted_iota(jnp.int32, (block_m, 1), 0)
    ym = jnp.where(rows < m_true, y, 0.0)
    sum_sc[...] += jnp.sum(ym, axis=0, keepdims=True)
    ssq_sc[...] += jnp.sum(ym * ym, axis=0, keepdims=True)

    @pl.when(i == pl.num_programs(0) - 1)
    def _():
        inv_m = 1.0 / m_true
        mean = sum_sc[...] * inv_m
        var = jnp.maximum(ssq_sc[...] * inv_m - mean * mean, 0.0)
        scale = g_ref[...] * jax.lax.rsqrt(var + _BN_EPS)
        shift = bt_ref[...] - mean * scale
        o_ref[...] = jnp.maximum(y_sc[...] * scale + shift, 0.0
                                 ).astype(o_ref.dtype)


def _final_kernel(p_ref, w_ref, b_ref, o_ref):
    """Final ConvTranspose-as-GEMM + bias + tanh (lane-dense padded Cout)."""
    y = jnp.dot(p_ref[...], w_ref[...], preferred_element_type=jnp.float32)
    o_ref[...] = jnp.tanh(y + b_ref[...])


# ------------------------- JAX-side glue (layout) ----------------------------

def _convT_im2col(x_nhwc, K, stride):
    """Im2col patches for ConvTranspose2d(kernel=K, stride, padding=0):
    zero-dilate the input by `stride`, pad by K-1, gather the K*K windows.
    Channel layout of the flattened patch dim is [kh][kw][cin] (tight, no
    per-tap channel padding)."""
    N, H, W, C = x_nhwc.shape
    Hd = (H - 1) * stride + 1
    Wd = (W - 1) * stride + 1
    if stride > 1:
        xd = jnp.zeros((N, Hd, Wd, C), x_nhwc.dtype)
        xd = xd.at[:, ::stride, ::stride, :].set(x_nhwc)
    else:
        xd = x_nhwc
    p = K - 1
    xp = jnp.pad(xd, ((0, 0), (p, p), (p, p), (0, 0)))
    Ho = Hd + p                    # == (H - 1) * stride + K  (PyTorch formula)
    Wo = Wd + p
    cols = [xp[:, kh:kh + Ho, kw:kw + Wo, :]
            for kh in range(K) for kw in range(K)]
    patches = jnp.concatenate(cols, axis=-1)            # (N, Ho, Wo, K*K*C)
    return patches.reshape(N * Ho * Wo, K * K * C), (N, Ho, Wo)


def _gen_block(x_nhwc, lp, cout, k, s):
    """ConvTranspose2d -> BatchNorm2d(train-mode batch stats) -> ReLU (fused)."""
    patches, (n, ho, wo) = _convT_im2col(x_nhwc, k, s)
    m_true, kdim = patches.shape
    kpad, cpad = lp["w_gemm"].shape

    block_m = min(_BLOCK_M, _round_up(m_true, 16))
    m_pad = _round_up(m_true, block_m)
    grid_m = m_pad // block_m
    patches = jnp.pad(patches, ((0, m_pad - m_true), (0, kpad - kdim)))

    # Resident-activation footprint must fit VMEM for the single fused pass.
    # TODO(synk): spill to a two-pass (stats kernel + bn/relu kernel) HBM path
    # once m_pad * cpad outgrows the VMEM budget at large batch sizes.
    assert m_pad * cpad * 6 < 24 * 1024 * 1024

    act = pl.pallas_call(
        functools.partial(_fused_gen_kernel, block_m=block_m, m_true=m_true),
        grid=(grid_m,),
        in_specs=(
            pl.BlockSpec((block_m, kpad), lambda i: (i, 0)),   # patch row tile
            pl.BlockSpec((kpad, cpad), lambda i: (0, 0)),      # weights resident
            pl.BlockSpec((1, cpad), lambda i: (0, 0)),         # bias resident
            pl.BlockSpec((1, cpad), lambda i: (0, 0)),         # gamma resident
            pl.BlockSpec((1, cpad), lambda i: (0, 0)),         # beta resident
        ),
        out_specs=pl.BlockSpec((grid_m, block_m, cpad), lambda i: (0, 0, 0)),
        out_shape=jax.ShapeDtypeStruct((grid_m, block_m, cpad), jnp.bfloat16),
        scratch_shapes=[
            pltpu.VMEM((grid_m, block_m, cpad), jnp.float32),  # resident f32 y
            pltpu.VMEM((1, cpad), jnp.float32),                # per-channel sum
            pltpu.VMEM((1, cpad), jnp.float32),                # per-channel ssq
        ],
        compiler_params=pltpu.CompilerParams(
            dimension_semantics=("arbitrary",),   # stats/output accumulate over M
            vmem_limit_bytes=_VMEM_LIMIT),
    )(patches, lp["w_gemm"], lp["bias"], lp["gamma"], lp["beta"])

    act = act.reshape(m_pad, cpad)[:m_true, :cout]
    return act.reshape(n, ho, wo, cout)


def _final_block(x_nhwc, lp, cout, k, s):
    """ConvTranspose2d -> Tanh, Cout zero-padded to 128 (lane-dense writes)."""
    patches, (n, ho, wo) = _convT_im2col(x_nhwc, k, s)
    m_true, kdim = patches.shape
    kpad, cpad = lp["w_gemm"].shape

    # Aim for >=2 grid steps so a v7x megacore can split the "parallel" axis.
    block_m = min(_BLOCK_M, max(16, _round_up((m_true + 1) // 2, 16)))
    m_pad = _round_up(m_true, block_m)
    grid_m = m_pad // block_m
    patches = jnp.pad(patches, ((0, m_pad - m_true), (0, kpad - kdim)))

    y = pl.pallas_call(
        _final_kernel,
        grid=(grid_m,),
        in_specs=(
            pl.BlockSpec((block_m, kpad), lambda i: (i, 0)),
            pl.BlockSpec((kpad, cpad), lambda i: (0, 0)),
            pl.BlockSpec((1, cpad), lambda i: (0, 0)),
        ),
        out_specs=pl.BlockSpec((block_m, cpad), lambda i: (i, 0)),
        out_shape=jax.ShapeDtypeStruct((m_pad, cpad), jnp.float32),
        compiler_params=pltpu.CompilerParams(
            dimension_semantics=("parallel",),
            vmem_limit_bytes=_VMEM_LIMIT),
    )(patches, lp["w_gemm"], lp["bias"])

    return y[:m_true, :cout].reshape(n, ho, wo, cout)


# -------------------------------- Generator ----------------------------------

def make_layer_specs(z_dim=64, im_chan=3, hidden_dim=64):
    # (in_channels, out_channels, kernel_size, stride, final_layer)
    return (
        (z_dim,          hidden_dim * 4, 3, 2, False),
        (hidden_dim * 4, hidden_dim * 2, 2, 2, False),
        (hidden_dim * 2, hidden_dim,     3, 2, False),
        (hidden_dim,     im_chan,        4, 1, True),
    )


def init_generator_params(key, specs):
    """Synthetic params matching the PyTorch __init__ shapes; GEMM weights are
    pre-flipped / tightly packed / padded / cast to bf16 at init."""
    params = []
    for cin, cout, k, s, final in specs:
        key, wk, bk = jax.random.split(key, 3)
        w = jax.random.normal(wk, (cin, cout, k, k), jnp.float32)
        w = w / jnp.sqrt(jnp.float32(cin * k * k))
        b = jax.random.normal(bk, (cout,), jnp.float32) * 0.01
        kdim = k * k * cin
        kpad = _round_up(kdim, _LANE)
        cpad = _round_up(cout, _LANE)
        # Equivalent stride-1 conv GEMM matrix: flip spatially, (K,K,Cin,Cout)
        # layout, flatten contraction dim TIGHTLY (no per-tap Cin padding),
        # then pad only K*K*Cin and Cout up to lane multiples; cast to bf16.
        wg = jnp.transpose(w[:, :, ::-1, ::-1], (2, 3, 0, 1)).reshape(kdim, cout)
        wg = jnp.pad(wg, ((0, kpad - kdim), (0, cpad - cout))).astype(jnp.bfloat16)
        lp = dict(
            w_gemm=wg,
            bias=jnp.pad(b, (0, cpad - cout)).reshape(1, cpad),
            w_torch=w, b_torch=b,               # f32 originals for the reference
        )
        if not final:
            # Padded channels get gamma=0 / beta=0 so they stay exactly zero.
            lp["gamma"] = jnp.pad(jnp.ones((cout,), jnp.float32),
                                  (0, cpad - cout)).reshape(1, cpad)
            lp["beta"] = jnp.zeros((1, cpad), jnp.float32)
        params.append(lp)
    return params


def generator_forward(noise, params, specs):
    """noise: (N, z_dim) -> images (N, im_chan, 16, 16) in NCHW."""
    n, z_dim = noise.shape
    x = noise.astype(jnp.bfloat16).reshape(n, 1, 1, z_dim)  # view(N,z,1,1), NHWC
    for lp, (cin, cout, k, s, final) in zip(params, specs):
        if final:
            x = _final_block(x, lp, cout, k, s)
        else:
            x = _gen_block(x, lp, cout, k, s)
    return jnp.transpose(x, (0, 3, 1, 2))                   # NHWC -> NCHW


def generator_reference(noise, params, specs):
    """Pure-XLA f32 reference (conv_general_dilated) for validation."""
    n, z_dim = noise.shape
    x = noise.reshape(n, 1, 1, z_dim).astype(jnp.float32)
    for lp, (cin, cout, k, s, final) in zip(params, specs):
        w_hwio = jnp.transpose(lp["w_torch"][:, :, ::-1, ::-1], (2, 3, 0, 1))
        y = jax.lax.conv_general_dilated(
            x, w_hwio, window_strides=(1, 1),
            padding=[(k - 1, k - 1), (k - 1, k - 1)],
            lhs_dilation=(s, s),
            dimension_numbers=("NHWC", "HWIO", "NHWC"))
        y = y + lp["b_torch"].reshape(1, 1, 1, cout)
        if final:
            x = jnp.tanh(y)
        else:
            mean = jnp.mean(y, axis=(0, 1, 2), keepdims=True)
            var = jnp.mean((y - mean) ** 2, axis=(0, 1, 2), keepdims=True)
            x = jnp.maximum((y - mean) * jax.lax.rsqrt(var + _BN_EPS), 0.0)
    return jnp.transpose(x, (0, 3, 1, 2))


# ----------------------------------- main -------------------------------------

if __name__ == "__main__":
    # Small, module-consistent sizes: z_dim=32, hidden_dim=16, im_chan=3, batch=2.
    Z_DIM, IM_CHAN, HIDDEN = 32, 3, 16
    BATCH = 2

    key = jax.random.PRNGKey(0)
    pkey, nkey = jax.random.split(key)
    specs = make_layer_specs(Z_DIM, IM_CHAN, HIDDEN)
    params = init_generator_params(pkey, specs)
    noise = jax.random.normal(nkey, (BATCH, Z_DIM), jnp.float32)

    fwd = jax.jit(functools.partial(generator_forward, specs=specs))
    out = jax.block_until_ready(fwd(noise, params))

    # Spatial progression: 1 -> 3 -> 6 -> 13 -> 16, matching the PyTorch module.
    assert out.shape == (BATCH, IM_CHAN, 16, 16), out.shape
    assert bool(jnp.all(jnp.isfinite(out)))
    assert bool(jnp.all(jnp.abs(out) <= 1.0))   # final tanh range

    ref = generator_reference(noise, params, specs)
    err = float(jnp.max(jnp.abs(out - ref)))
    assert err < 0.1, f"max abs err vs reference: {err}"   # bf16 GEMM tolerance

    print("KERNEL_OK")
</pallas_src>

<mosaic_0001>
module attributes {stable_mosaic.version = 11 : i64} {
  func.func @_fused_gen_kernel(%arg0: i32, %arg1: memref<32x384xbf16, #tpu.memory_space<vmem>>, %arg2: memref<384x128xbf16, #tpu.memory_space<vmem>>, %arg3: memref<1x128xf32, #tpu.memory_space<vmem>>, %arg4: memref<1x128xf32, #tpu.memory_space<vmem>>, %arg5: memref<1x128xf32, #tpu.memory_space<vmem>>, %arg6: memref<1x32x128xbf16, #tpu.memory_space<vmem>>, %arg7: memref<1x32x128xf32, #tpu.memory_space<vmem>>, %arg8: memref<1x128xf32, #tpu.memory_space<vmem>>, %arg9: memref<1x128xf32, #tpu.memory_space<vmem>>) attributes {dimension_semantics = [#tpu.dimension_semantics<arbitrary>], iteration_bounds = array<i64: 1>, scalar_prefetch = 0 : i64, scratch_operands = 3 : i64, tpu.core_type = #tpu.core_type<tc>, window_params = [{transform_indices = @transform_0, window_bounds = array<i64: 32, 384>}, {pipeline_mode = #tpu.pipeline_mode<synchronous>, transform_indices = @transform_1, window_bounds = array<i64: 384, 128>}, {pipeline_mode = #tpu.pipeline_mode<synchronous>, transform_indices = @transform_2, window_bounds = array<i64: 1, 128>}, {pipeline_mode = #tpu.pipeline_mode<synchronous>, transform_indices = @transform_3, window_bounds = array<i64: 1, 128>}, {pipeline_mode = #tpu.pipeline_mode<synchronous>, transform_indices = @transform_4, window_bounds = array<i64: 1, 128>}, {pipeline_mode = #tpu.pipeline_mode<synchronous>, transform_indices = @transform_5, window_bounds = array<i64: 1, 32, 128>}]} {
    %c0_i32 = arith.constant 0 : i32
    %0 = arith.cmpi eq, %arg0, %c0_i32 : i32
    %1 = arith.extui %0 : i1 to i32
    %c0_i32_0 = arith.constant 0 : i32
    %2 = arith.cmpi ne, %1, %c0_i32_0 : i32
    scf.if %2 {
      %cst_21 = arith.constant 0.000000e+00 : f32
      %37 = vector.broadcast %cst_21 : f32 to vector<1x128xf32>
      %c0_22 = arith.constant 0 : index
      %c0_23 = arith.constant 0 : index
      %38 = vector.load %arg8[%c0_22, %c0_23] : memref<1x128xf32, #tpu.memory_space<vmem>>, vector<1x128xf32>
      tpu.vector_store %arg8[%c0_22, %c0_23], %37 {strides = array<i32>} : memref<1x128xf32, #tpu.memory_space<vmem>>, vector<1x128xf32>,
      %cst_24 = arith.constant 0.000000e+00 : f32
      %39 = vector.broadcast %cst_24 : f32 to vector<1x128xf32>
      %c0_25 = arith.constant 0 : index
      %c0_26 = arith.constant 0 : index
      %40 = vector.load %arg9[%c0_25, %c0_26] : memref<1x128xf32, #tpu.memory_space<vmem>>, vector<1x128xf32>
      tpu.vector_store %arg9[%c0_25, %c0_26], %39 {strides = array<i32>} : memref<1x128xf32, #tpu.memory_space<vmem>>, vector<1x128xf32>,
    } else {
    }
    %c0 = arith.constant 0 : index
    %c0_1 = arith.constant 0 : index
    %3 = vector.load %arg1[%c0, %c0_1] : memref<32x384xbf16, #tpu.memory_space<vmem>>, vector<32x384xbf16>
    %c0_2 = arith.constant 0 : index
    %c0_3 = arith.constant 0 : index
    %4 = vector.load %arg2[%c0_2, %c0_3] : memref<384x128xbf16, #tpu.memory_space<vmem>>, vector<384x128xbf16>
    %cst = arith.constant dense<0.000000e+00> : vector<32x128xf32>
    %5 = tpu.matmul %3, %4, %cst {dimension_numbers = #tpu.dot_dimension_numbers<[1], [0], [0], [1], [0, 0, 1, 1], [], []>} : vector<32x384xbf16>, vector<384x128xbf16>, vector<32x128xf32> -> vector<32x128xf32>
    %c0_4 = arith.constant 0 : index
    %c0_5 = arith.constant 0 : index
    %6 = vector.load %arg3[%c0_4, %c0_5] : memref<1x128xf32, #tpu.memory_space<vmem>>, vector<1x128xf32>
    %7 = vector.broadcast %6 : vector<1x128xf32> to vector<32x128xf32>
    %8 = arith.addf %5, %7 : vector<32x128xf32>
    %9 = arith.index_cast %arg0 : i32 to index
    %c0_6 = arith.constant 0 : index
    %c0_7 = arith.constant 0 : index
    %10 = vector.load %arg7[%9, %c0_6, %c0_7] : memref<1x32x128xf32, #tpu.memory_space<vmem>>, vector<1x32x128xf32>
    %11 = vector.shape_cast %10 : vector<1x32x128xf32> to vector<32x128xf32>
    %12 = vector.shape_cast %8 : vector<32x128xf32> to vector<1x32x128xf32>
    tpu.vector_store %arg7[%9, %c0_6, %c0_7], %12 {strides = array<i32>} : memref<1x32x128xf32, #tpu.memory_space<vmem>>, vector<1x32x128xf32>,
    %c32_i32 = arith.constant 32 : i32
    %13 = arith.muli %arg0, %c32_i32 : i32
    %14 = tpu.iota {dimensions = array<i32: 0>} : vector<32x1xi32>
    %15 = vector.broadcast %13 : i32 to vector<32x1xi32>
    %16 = arith.addi %15, %14 : vector<32x1xi32>
    %c18_i32 = arith.constant 18 : i32
    %17 = vector.broadcast %c18_i32 : i32 to vector<32x1xi32>
    %18 = arith.cmpi slt, %16, %17 : vector<32x1xi32>
    %cst_8 = arith.constant 0.000000e+00 : f32
    %19 = vector.shape_cast %18 : vector<32x1xi1> to vector<32x1xi1>
    %20 = vector.broadcast %19 : vector<32x1xi1> to vector<32x128xi1>
    %21 = vector.broadcast %cst_8 : f32 to vector<32x128xf32>
    %22 = arith.select %20, %8, %21 : vector<32x128xi1>, vector<32x128xf32>
    %c0_9 = arith.constant 0 : index
    %c0_10 = arith.constant 0 : index
    %23 = vector.load %arg8[%c0_9, %c0_10] : memref<1x128xf32, #tpu.memory_space<vmem>>, vector<1x128xf32>
    %cst_11 = arith.constant dense<0.000000e+00> : vector<128xf32>
    %24 = vector.multi_reduction <add>, %22, %cst_11 [0] : vector<32x128xf32> to vector<128xf32>
    %25 = vector.shape_cast %24 : vector<128xf32> to vector<1x128xf32>
    %26 = arith.addf %23, %25 : vector<1x128xf32>
    %c0_12 = arith.constant 0 : index
    %c0_13 = arith.constant 0 : index
    %27 = vector.load %arg8[%c0_12, %c0_13] : memref<1x128xf32, #tpu.memory_space<vmem>>, vector<1x128xf32>
    tpu.vector_store %arg8[%c0_12, %c0_13], %26 {strides = array<i32>} : memref<1x128xf32, #tpu.memory_space<vmem>>, vector<1x128xf32>,
    %c0_14 = arith.constant 0 : index
    %c0_15 = arith.constant 0 : index
    %28 = vector.load %arg9[%c0_14, %c0_15] : memref<1x128xf32, #tpu.memory_space<vmem>>, vector<1x128xf32>
    %29 = arith.mulf %22, %22 : vector<32x128xf32>
    %cst_16 = arith.constant dense<0.000000e+00> : vector<128xf32>
    %30 = vector.multi_reduction <add>, %29, %cst_16 [0] : vector<32x128xf32> to vector<128xf32>
    %31 = vector.shape_cast %30 : vector<128xf32> to vector<1x128xf32>
    %32 = arith.addf %28, %31 : vector<1x128xf32>
    %c0_17 = arith.constant 0 : index
    %c0_18 = arith.constant 0 : index
    %33 = vector.load %arg9[%c0_17, %c0_18] : memref<1x128xf32, #tpu.memory_space<vmem>>, vector<1x128xf32>
    tpu.vector_store %arg9[%c0_17, %c0_18], %32 {strides = array<i32>} : memref<1x128xf32, #tpu.memory_space<vmem>>, vector<1x128xf32>,
    %c0_i32_19 = arith.constant 0 : i32
    %34 = arith.cmpi eq, %arg0, %c0_i32_19 : i32
    %35 = arith.extui %34 : i1 to i32
    %c0_i32_20 = arith.constant 0 : i32
    %36 = arith.cmpi ne, %35, %c0_i32_20 : i32
    scf.if %36 {
      %c0_21 = arith.constant 0 : index
      %c0_22 = arith.constant 0 : index
      %37 = vector.load %arg8[%c0_21, %c0_22] : memref<1x128xf32, #tpu.memory_space<vmem>>, vector<1x128xf32>
      %cst_23 = arith.constant 0.055555556 : f32
      %38 = vector.broadcast %cst_23 : f32 to vector<1x128xf32>
      %39 = arith.mulf %37, %38 : vector<1x128xf32>
      %c0_24 = arith.constant 0 : index
      %c0_25 = arith.constant 0 : index
      %40 = vector.load %arg9[%c0_24, %c0_25] : memref<1x128xf32, #tpu.memory_space<vmem>>, vector<1x128xf32>
      %cst_26 = arith.constant 0.055555556 : f32
      %41 = vector.broadcast %cst_26 : f32 to vector<1x128xf32>
      %42 = arith.mulf %40, %41 : vector<1x128xf32>
      %43 = arith.mulf %39, %39 : vector<1x128xf32>
      %44 = arith.subf %42, %43 : vector<1x128xf32>
      %cst_27 = arith.constant 0.000000e+00 : f32
      %45 = vector.broadcast %cst_27 : f32 to vector<1x128xf32>
      %46 = arith.maximumf %44, %45 : vector<1x128xf32>
      %c0_28 = arith.constant 0 : index
      %c0_29 = arith.constant 0 : index
      %47 = vector.load %arg4[%c0_28, %c0_29] : memref<1x128xf32, #tpu.memory_space<vmem>>, vector<1x128xf32>
      %cst_30 = arith.constant 9.99999974E-6 : f32
      %48 = vector.broadcast %cst_30 : f32 to vector<1x128xf32>
      %49 = arith.addf %46, %48 : vector<1x128xf32>
      %50 = math.rsqrt %49 : vector<1x128xf32>
      %51 = arith.mulf %47, %50 : vector<1x128xf32>
      %c0_31 = arith.constant 0 : index
      %c0_32 = arith.constant 0 : index
      %52 = vector.load %arg5[%c0_31, %c0_32] : memref<1x128xf32, #tpu.memory_space<vmem>>, vector<1x128xf32>
      %53 = arith.mulf %39, %51 : vector<1x128xf32>
      %54 = arith.subf %52, %53 : vector<1x128xf32>
      %c0_33 = arith.constant 0 : index
      %c0_34 = arith.constant 0 : index
      %c0_35 = arith.constant 0 : index
      %55 = vector.load %arg7[%c0_33, %c0_34, %c0_35] : memref<1x32x128xf32, #tpu.memory_space<vmem>>, vector<1x32x128xf32>
      %56 = vector.shape_cast %51 : vector<1x128xf32> to vector<1x1x128xf32>
      %57 = vector.broadcast %56 : vector<1x1x128xf32> to vector<1x32x128xf32>
      %58 = arith.mulf %55, %57 : vector<1x32x128xf32>
      %59 = vector.shape_cast %54 : vector<1x128xf32> to vector<1x1x128xf32>
      %60 = vector.broadcast %59 : vector<1x1x128xf32> to vector<1x32x128xf32>
      %61 = arith.addf %58, %60 : vector<1x32x128xf32>
      %cst_36 = arith.constant 0.000000e+00 : f32
      %62 = vector.broadcast %cst_36 : f32 to vector<1x32x128xf32>
      %63 = arith.maximumf %61, %62 : vector<1x32x128xf32>
      %64 = arith.truncf %63 : vector<1x32x128xf32> to vector<1x32x128xbf16>
      %c0_37 = arith.constant 0 : index
      %c0_38 = arith.constant 0 : index
      %c0_39 = arith.constant 0 : index
      %65 = vector.load %arg6[%c0_37, %c0_38, %c0_39] : memref<1x32x128xbf16, #tpu.memory_space<vmem>>, vector<1x32x128xbf16>
      tpu.vector_store %arg6[%c0_37, %c0_38, %c0_39], %64 {strides = array<i32>} : memref<1x32x128xbf16, #tpu.memory_space<vmem>>, vector<1x32x128xbf16>,
    } else {
    }
    return
  }
  func.func @transform_0(%arg0: i32) -> (i32, i32) {
    %c0_i32 = arith.constant 0 : i32
    %c0_i32_0 = arith.constant 0 : i32
    return %arg0, %c0_i32 : i32, i32
  }
  func.func @transform_1(%arg0: i32) -> (i32, i32) {
    %c0_i32 = arith.constant 0 : i32
    %c0_i32_0 = arith.constant 0 : i32
    %c0_i32_1 = arith.constant 0 : i32
    return %c0_i32, %c0_i32_0 : i32, i32
  }
  func.func @transform_2(%arg0: i32) -> (i32, i32) {
    %c0_i32 = arith.constant 0 : i32
    %c0_i32_0 = arith.constant 0 : i32
    %c0_i32_1 = arith.constant 0 : i32
    return %c0_i32, %c0_i32_0 : i32, i32
  }
  func.func @transform_3(%arg0: i32) -> (i32, i32) {
    %c0_i32 = arith.constant 0 : i32
    %c0_i32_0 = arith.constant 0 : i32
    %c0_i32_1 = arith.constant 0 : i32
    return %c0_i32, %c0_i32_0 : i32, i32
  }
  func.func @transform_4(%arg0: i32) -> (i32, i32) {
    %c0_i32 = arith.constant 0 : i32
    %c0_i32_0 = arith.constant 0 : i32
    %c0_i32_1 = arith.constant 0 : i32
    return %c0_i32, %c0_i32_0 : i32, i32
  }
  func.func @transform_5(%arg0: i32) -> (i32, i32, i32) {
    %c0_i32 = arith.constant 0 : i32
    %c0_i32_0 = arith.constant 0 : i32
    %c0_i32_1 = arith.constant 0 : i32
    %c0_i32_2 = arith.constant 0 : i32
    return %c0_i32, %c0_i32_0, %c0_i32_1 : i32, i32, i32
  }
}

module attributes {stable_mosaic.version = 11 : i64} {
  func.func @_fused_gen_kernel(%arg0: i32, %arg1: memref<80x256xbf16, #tpu.memory_space<vmem>>, %arg2: memref<256x128xbf16, #tpu.memory_space<vmem>>, %arg3: memref<1x128xf32, #tpu.memory_space<vmem>>, %arg4: memref<1x128xf32, #tpu.memory_space<vmem>>, %arg5: memref<1x128xf32, #tpu.memory_space<vmem>>, %arg6: memref<1x80x128xbf16, #tpu.memory_space<vmem>>, %arg7: memref<1x80x128xf32, #tpu.memory_space<vmem>>, %arg8: memref<1x128xf32, #tpu.memory_space<vmem>>, %arg9: memref<1x128xf32, #tpu.memory_space<vmem>>) attributes {dimension_semantics = [#tpu.dimension_semantics<arbitrary>], iteration_bounds = array<i64: 1>, scalar_prefetch = 0 : i64, scratch_operands = 3 : i64, tpu.core_type = #tpu.core_type<tc>, window_params = [{transform_indices = @transform_0, window_bounds = array<i64: 80, 256>}, {pipeline_mode = #tpu.pipeline_mode<synchronous>, transform_indices = @transform_1, window_bounds = array<i64: 256, 128>}, {pipeline_mode = #tpu.pipeline_mode<synchronous>, transform_indices = @transform_2, window_bounds = array<i64: 1, 128>}, {pipeline_mode = #tpu.pipeline_mode<synchronous>, transform_indices = @transform_3, window_bounds = array<i64: 1, 128>}, {pipeline_mode = #tpu.pipeline_mode<synchronous>, transform_indices = @transform_4, window_bounds = array<i64: 1, 128>}, {pipeline_mode = #tpu.pipeline_mode<synchronous>, transform_indices = @transform_5, window_bounds = array<i64: 1, 80, 128>}]} {
    %c0_i32 = arith.constant 0 : i32
    %0 = arith.cmpi eq, %arg0, %c0_i32 : i32
    %1 = arith.extui %0 : i1 to i32
    %c0_i32_0 = arith.constant 0 : i32
    %2 = arith.cmpi ne, %1, %c0_i32_0 : i32
    scf.if %2 {
      %cst_21 = arith.constant 0.000000e+00 : f32
      %37 = vector.broadcast %cst_21 : f32 to vector<1x128xf32>
      %c0_22 = arith.constant 0 : index
      %c0_23 = arith.constant 0 : index
      %38 = vector.load %arg8[%c0_22, %c0_23] : memref<1x128xf32, #tpu.memory_space<vmem>>, vector<1x128xf32>
      tpu.vector_store %arg8[%c0_22, %c0_23], %37 {strides = array<i32>} : memref<1x128xf32, #tpu.memory_space<vmem>>, vector<1x128xf32>,
      %cst_24 = arith.constant 0.000000e+00 : f32
      %39 = vector.broadcast %cst_24 : f32 to vector<1x128xf32>
      %c0_25 = arith.constant 0 : index
      %c0_26 = arith.constant 0 : index
      %40 = vector.load %arg9[%c0_25, %c0_26] : memref<1x128xf32, #tpu.memory_space<vmem>>, vector<1x128xf32>
      tpu.vector_store %arg9[%c0_25, %c0_26], %39 {strides = array<i32>} : memref<1x128xf32, #tpu.memory_space<vmem>>, vector<1x128xf32>,
    } else {
    }
    %c0 = arith.constant 0 : index
    %c0_1 = arith.constant 0 : index
    %3 = vector.load %arg1[%c0, %c0_1] : memref<80x256xbf16, #tpu.memory_space<vmem>>, vector<80x256xbf16>
    %c0_2 = arith.constant 0 : index
    %c0_3 = arith.constant 0 : index
    %4 = vector.load %arg2[%c0_2, %c0_3] : memref<256x128xbf16, #tpu.memory_space<vmem>>, vector<256x128xbf16>
    %cst = arith.constant dense<0.000000e+00> : vector<80x128xf32>
    %5 = tpu.matmul %3, %4, %cst {dimension_numbers = #tpu.dot_dimension_numbers<[1], [0], [0], [1], [0, 0, 1, 1], [], []>} : vector<80x256xbf16>, vector<256x128xbf16>, vector<80x128xf32> -> vector<80x128xf32>
    %c0_4 = arith.constant 0 : index
    %c0_5 = arith.constant 0 : index
    %6 = vector.load %arg3[%c0_4, %c0_5] : memref<1x128xf32, #tpu.memory_space<vmem>>, vector<1x128xf32>
    %7 = vector.broadcast %6 : vector<1x128xf32> to vector<80x128xf32>
    %8 = arith.addf %5, %7 : vector<80x128xf32>
    %9 = arith.index_cast %arg0 : i32 to index
    %c0_6 = arith.constant 0 : index
    %c0_7 = arith.constant 0 : index
    %10 = vector.load %arg7[%9, %c0_6, %c0_7] : memref<1x80x128xf32, #tpu.memory_space<vmem>>, vector<1x80x128xf32>
    %11 = vector.shape_cast %10 : vector<1x80x128xf32> to vector<80x128xf32>
    %12 = vector.shape_cast %8 : vector<80x128xf32> to vector<1x80x128xf32>
    tpu.vector_store %arg7[%9, %c0_6, %c0_7], %12 {strides = array<i32>} : memref<1x80x128xf32, #tpu.memory_space<vmem>>, vector<1x80x128xf32>,
    %c80_i32 = arith.constant 80 : i32
    %13 = arith.muli %arg0, %c80_i32 : i32
    %14 = tpu.iota {dimensions = array<i32: 0>} : vector<80x1xi32>
    %15 = vector.broadcast %13 : i32 to vector<80x1xi32>
    %16 = arith.addi %15, %14 : vector<80x1xi32>
    %c72_i32 = arith.constant 72 : i32
    %17 = vector.broadcast %c72_i32 : i32 to vector<80x1xi32>
    %18 = arith.cmpi slt, %16, %17 : vector<80x1xi32>
    %cst_8 = arith.constant 0.000000e+00 : f32
    %19 = vector.shape_cast %18 : vector<80x1xi1> to vector<80x1xi1>
    %20 = vector.broadcast %19 : vector<80x1xi1> to vector<80x128xi1>
    %21 = vector.broadcast %cst_8 : f32 to vector<80x128xf32>
    %22 = arith.select %20, %8, %21 : vector<80x128xi1>, vector<80x128xf32>
    %c0_9 = arith.constant 0 : index
    %c0_10 = arith.constant 0 : index
    %23 = vector.load %arg8[%c0_9, %c0_10] : memref<1x128xf32, #tpu.memory_space<vmem>>, vector<1x128xf32>
    %cst_11 = arith.constant dense<0.000000e+00> : vector<128xf32>
    %24 = vector.multi_reduction <add>, %22, %cst_11 [0] : vector<80x128xf32> to vector<128xf32>
    %25 = vector.shape_cast %24 : vector<128xf32> to vector<1x128xf32>
    %26 = arith.addf %23, %25 : vector<1x128xf32>
    %c0_12 = arith.constant 0 : index
    %c0_13 = arith.constant 0 : index
    %27 = vector.load %arg8[%c0_12, %c0_13] : memref<1x128xf32, #tpu.memory_space<vmem>>, vector<1x128xf32>
    tpu.vector_store %arg8[%c0_12, %c0_13], %26 {strides = array<i32>} : memref<1x128xf32, #tpu.memory_space<vmem>>, vector<1x128xf32>,
    %c0_14 = arith.constant 0 : index
    %c0_15 = arith.constant 0 : index
    %28 = vector.load %arg9[%c0_14, %c0_15] : memref<1x128xf32, #tpu.memory_space<vmem>>, vector<1x128xf32>
    %29 = arith.mulf %22, %22 : vector<80x128xf32>
    %cst_16 = arith.constant dense<0.000000e+00> : vector<128xf32>
    %30 = vector.multi_reduction <add>, %29, %cst_16 [0] : vector<80x128xf32> to vector<128xf32>
    %31 = vector.shape_cast %30 : vector<128xf32> to vector<1x128xf32>
    %32 = arith.addf %28, %31 : vector<1x128xf32>
    %c0_17 = arith.constant 0 : index
    %c0_18 = arith.constant 0 : index
    %33 = vector.load %arg9[%c0_17, %c0_18] : memref<1x128xf32, #tpu.memory_space<vmem>>, vector<1x128xf32>
    tpu.vector_store %arg9[%c0_17, %c0_18], %32 {strides = array<i32>} : memref<1x128xf32, #tpu.memory_space<vmem>>, vector<1x128xf32>,
    %c0_i32_19 = arith.constant 0 : i32
    %34 = arith.cmpi eq, %arg0, %c0_i32_19 : i32
    %35 = arith.extui %34 : i1 to i32
    %c0_i32_20 = arith.constant 0 : i32
    %36 = arith.cmpi ne, %35, %c0_i32_20 : i32
    scf.if %36 {
      %c0_21 = arith.constant 0 : index
      %c0_22 = arith.constant 0 : index
      %37 = vector.load %arg8[%c0_21, %c0_22] : memref<1x128xf32, #tpu.memory_space<vmem>>, vector<1x128xf32>
      %cst_23 = arith.constant 0.013888889 : f32
      %38 = vector.broadcast %cst_23 : f32 to vector<1x128xf32>
      %39 = arith.mulf %37, %38 : vector<1x128xf32>
      %c0_24 = arith.constant 0 : index
      %c0_25 = arith.constant 0 : index
      %40 = vector.load %arg9[%c0_24, %c0_25] : memref<1x128xf32, #tpu.memory_space<vmem>>, vector<1x128xf32>
      %cst_26 = arith.constant 0.013888889 : f32
      %41 = vector.broadcast %cst_26 : f32 to vector<1x128xf32>
      %42 = arith.mulf %40, %41 : vector<1x128xf32>
      %43 = arith.mulf %39, %39 : vector<1x128xf32>
      %44 = arith.subf %42, %43 : vector<1x128xf32>
      %cst_27 = arith.constant 0.000000e+00 : f32
      %45 = vector.broadcast %cst_27 : f32 to vector<1x128xf32>
      %46 = arith.maximumf %44, %45 : vector<1x128xf32>
      %c0_28 = arith.constant 0 : index
      %c0_29 = arith.constant 0 : index
      %47 = vector.load %arg4[%c0_28, %c0_29] : memref<1x128xf32, #tpu.memory_space<vmem>>, vector<1x128xf32>
      %cst_30 = arith.constant 9.99999974E-6 : f32
      %48 = vector.broadcast %cst_30 : f32 to vector<1x128xf32>
      %49 = arith.addf %46, %48 : vector<1x128xf32>
      %50 = math.rsqrt %49 : vector<1x128xf32>
      %51 = arith.mulf %47, %50 : vector<1x128xf32>
      %c0_31 = arith.constant 0 : index
      %c0_32 = arith.constant 0 : index
      %52 = vector.load %arg5[%c0_31, %c0_32] : memref<1x128xf32, #tpu.memory_space<vmem>>, vector<1x128xf32>
      %53 = arith.mulf %39, %51 : vector<1x128xf32>
      %54 = arith.subf %52, %53 : vector<1x128xf32>
      %c0_33 = arith.constant 0 : index
      %c0_34 = arith.constant 0 : index
      %c0_35 = arith.constant 0 : index
      %55 = vector.load %arg7[%c0_33, %c0_34, %c0_35] : memref<1x80x128xf32, #tpu.memory_space<vmem>>, vector<1x80x128xf32>
      %56 = vector.shape_cast %51 : vector<1x128xf32> to vector<1x1x128xf32>
      %57 = vector.broadcast %56 : vector<1x1x128xf32> to vector<1x80x128xf32>
      %58 = arith.mulf %55, %57 : vector<1x80x128xf32>
      %59 = vector.shape_cast %54 : vector<1x128xf32> to vector<1x1x128xf32>
      %60 = vector.broadcast %59 : vector<1x1x128xf32> to vector<1x80x128xf32>
      %61 = arith.addf %58, %60 : vector<1x80x128xf32>
      %cst_36 = arith.constant 0.000000e+00 : f32
      %62 = vector.broadcast %cst_36 : f32 to vector<1x80x128xf32>
      %63 = arith.maximumf %61, %62 : vector<1x80x128xf32>
      %64 = arith.truncf %63 : vector<1x80x128xf32> to vector<1x80x128xbf16>
      %c0_37 = arith.constant 0 : index
      %c0_38 = arith.constant 0 : index
      %c0_39 = arith.constant 0 : index
      %65 = vector.load %arg6[%c0_37, %c0_38, %c0_39] : memref<1x80x128xbf16, #tpu.memory_space<vmem>>, vector<1x80x128xbf16>
      tpu.vector_store %arg6[%c0_37, %c0_38, %c0_39], %64 {strides = array<i32>} : memref<1x80x128xbf16, #tpu.memory_space<vmem>>, vector<1x80x128xbf16>,
    } else {
    }
    return
  }
  func.func @transform_0(%arg0: i32) -> (i32, i32) {
    %c0_i32 = arith.constant 0 : i32
    %c0_i32_0 = arith.constant 0 : i32
    return %arg0, %c0_i32 : i32, i32
  }
  func.func @transform_1(%arg0: i32) -> (i32, i32) {
    %c0_i32 = arith.constant 0 : i32
    %c0_i32_0 = arith.constant 0 : i32
    %c0_i32_1 = arith.constant 0 : i32
    return %c0_i32, %c0_i32_0 : i32, i32
  }
  func.func @transform_2(%arg0: i32) -> (i32, i32) {
    %c0_i32 = arith.constant 0 : i32
    %c0_i32_0 = arith.constant 0 : i32
    %c0_i32_1 = arith.constant 0 : i32
    return %c0_i32, %c0_i32_0 : i32, i32
  }
  func.func @transform_3(%arg0: i32) -> (i32, i32) {
    %c0_i32 = arith.constant 0 : i32
    %c0_i32_0 = arith.constant 0 : i32
    %c0_i32_1 = arith.constant 0 : i32
    return %c0_i32, %c0_i32_0 : i32, i32
  }
  func.func @transform_4(%arg0: i32) -> (i32, i32) {
    %c0_i32 = arith.constant 0 : i32
    %c0_i32_0 = arith.constant 0 : i32
    %c0_i32_1 = arith.constant 0 : i32
    return %c0_i32, %c0_i32_0 : i32, i32
  }
  func.func @transform_5(%arg0: i32) -> (i32, i32, i32) {
    %c0_i32 = arith.constant 0 : i32
    %c0_i32_0 = arith.constant 0 : i32
    %c0_i32_1 = arith.constant 0 : i32
    %c0_i32_2 = arith.constant 0 : i32
    return %c0_i32, %c0_i32_0, %c0_i32_1 : i32, i32, i32
  }
}

module attributes {stable_mosaic.version = 11 : i64} {
  func.func @_fused_gen_kernel(%arg0: i32, %arg1: memref<352x384xbf16, #tpu.memory_space<vmem>>, %arg2: memref<384x128xbf16, #tpu.memory_space<vmem>>, %arg3: memref<1x128xf32, #tpu.memory_space<vmem>>, %arg4: memref<1x128xf32, #tpu.memory_space<vmem>>, %arg5: memref<1x128xf32, #tpu.memory_space<vmem>>, %arg6: memref<1x352x128xbf16, #tpu.memory_space<vmem>>, %arg7: memref<1x352x128xf32, #tpu.memory_space<vmem>>, %arg8: memref<1x128xf32, #tpu.memory_space<vmem>>, %arg9: memref<1x128xf32, #tpu.memory_space<vmem>>) attributes {dimension_semantics = [#tpu.dimension_semantics<arbitrary>], iteration_bounds = array<i64: 1>, scalar_prefetch = 0 : i64, scratch_operands = 3 : i64, tpu.core_type = #tpu.core_type<tc>, window_params = [{transform_indices = @transform_0, window_bounds = array<i64: 352, 384>}, {pipeline_mode = #tpu.pipeline_mode<synchronous>, transform_indices = @transform_1, window_bounds = array<i64: 384, 128>}, {pipeline_mode = #tpu.pipeline_mode<synchronous>, transform_indices = @transform_2, window_bounds = array<i64: 1, 128>}, {pipeline_mode = #tpu.pipeline_mode<synchronous>, transform_indices = @transform_3, window_bounds = array<i64: 1, 128>}, {pipeline_mode = #tpu.pipeline_mode<synchronous>, transform_indices = @transform_4, window_bounds = array<i64: 1, 128>}, {pipeline_mode = #tpu.pipeline_mode<synchronous>, transform_indices = @transform_5, window_bounds = array<i64: 1, 352, 128>}]} {
    %c0_i32 = arith.constant 0 : i32
    %0 = arith.cmpi eq, %arg0, %c0_i32 : i32
    %1 = arith.extui %0 : i1 to i32
    %c0_i32_0 = arith.constant 0 : i32
    %2 = arith.cmpi ne, %1, %c0_i32_0 : i32
    scf.if %2 {
      %cst_21 = arith.constant 0.000000e+00 : f32
      %37 = vector.broadcast %cst_21 : f32 to vector<1x128xf32>
      %c0_22 = arith.constant 0 : index
      %c0_23 = arith.constant 0 : index
      %38 = vector.load %arg8[%c0_22, %c0_23] : memref<1x128xf32, #tpu.memory_space<vmem>>, vector<1x128xf32>
      tpu.vector_store %arg8[%c0_22, %c0_23], %37 {strides = array<i32>} : memref<1x128xf32, #tpu.memory_space<vmem>>, vector<1x128xf32>,
      %cst_24 = arith.constant 0.000000e+00 : f32
      %39 = vector.broadcast %cst_24 : f32 to vector<1x128xf32>
      %c0_25 = arith.constant 0 : index
      %c0_26 = arith.constant 0 : index
      %40 = vector.load %arg9[%c0_25, %c0_26] : memref<1x128xf32, #tpu.memory_space<vmem>>, vector<1x128xf32>
      tpu.vector_store %arg9[%c0_25, %c0_26], %39 {strides = array<i32>} : memref<1x128xf32, #tpu.memory_space<vmem>>, vector<1x128xf32>,
    } else {
    }
    %c0 = arith.constant 0 : index
    %c0_1 = arith.constant 0 : index
    %3 = vector.load %arg1[%c0, %c0_1] : memref<352x384xbf16, #tpu.memory_space<vmem>>, vector<352x384xbf16>
    %c0_2 = arith.constant 0 : index
    %c0_3 = arith.constant 0 : index
    %4 = vector.load %arg2[%c0_2, %c0_3] : memref<384x128xbf16, #tpu.memory_space<vmem>>, vector<384x128xbf16>
    %cst = arith.constant dense<0.000000e+00> : vector<352x128xf32>
    %5 = tpu.matmul %3, %4, %cst {dimension_numbers = #tpu.dot_dimension_numbers<[1], [0], [0], [1], [0, 0, 1, 1], [], []>} : vector<352x384xbf16>, vector<384x128xbf16>, vector<352x128xf32> -> vector<352x128xf32>
    %c0_4 = arith.constant 0 : index
    %c0_5 = arith.constant 0 : index
    %6 = vector.load %arg3[%c0_4, %c0_5] : memref<1x128xf32, #tpu.memory_space<vmem>>, vector<1x128xf32>
    %7 = vector.broadcast %6 : vector<1x128xf32> to vector<352x128xf32>
    %8 = arith.addf %5, %7 : vector<352x128xf32>
    %9 = arith.index_cast %arg0 : i32 to index
    %c0_6 = arith.constant 0 : index
    %c0_7 = arith.constant 0 : index
    %10 = vector.load %arg7[%9, %c0_6, %c0_7] : memref<1x352x128xf32, #tpu.memory_space<vmem>>, vector<1x352x128xf32>
    %11 = vector.shape_cast %10 : vector<1x352x128xf32> to vector<352x128xf32>
    %12 = vector.shape_cast %8 : vector<352x128xf32> to vector<1x352x128xf32>
    tpu.vector_store %arg7[%9, %c0_6, %c0_7], %12 {strides = array<i32>} : memref<1x352x128xf32, #tpu.memory_space<vmem>>, vector<1x352x128xf32>,
    %c352_i32 = arith.constant 352 : i32
    %13 = arith.muli %arg0, %c352_i32 : i32
    %14 = tpu.iota {dimensions = array<i32: 0>} : vector<352x1xi32>
    %15 = vector.broadcast %13 : i32 to vector<352x1xi32>
    %16 = arith.addi %15, %14 : vector<352x1xi32>
    %c338_i32 = arith.constant 338 : i32
    %17 = vector.broadcast %c338_i32 : i32 to vector<352x1xi32>
    %18 = arith.cmpi slt, %16, %17 : vector<352x1xi32>
    %cst_8 = arith.constant 0.000000e+00 : f32
    %19 = vector.shape_cast %18 : vector<352x1xi1> to vector<352x1xi1>
    %20 = vector.broadcast %19 : vector<352x1xi1> to vector<352x128xi1>
    %21 = vector.broadcast %cst_8 : f32 to vector<352x128xf32>
    %22 = arith.select %20, %8, %21 : vector<352x128xi1>, vector<352x128xf32>
    %c0_9 = arith.constant 0 : index
    %c0_10 = arith.constant 0 : index
    %23 = vector.load %arg8[%c0_9, %c0_10] : memref<1x128xf32, #tpu.memory_space<vmem>>, vector<1x128xf32>
    %cst_11 = arith.constant dense<0.000000e+00> : vector<128xf32>
    %24 = vector.multi_reduction <add>, %22, %cst_11 [0] : vector<352x128xf32> to vector<128xf32>
    %25 = vector.shape_cast %24 : vector<128xf32> to vector<1x128xf32>
    %26 = arith.addf %23, %25 : vector<1x128xf32>
    %c0_12 = arith.constant 0 : index
    %c0_13 = arith.constant 0 : index
    %27 = vector.load %arg8[%c0_12, %c0_13] : memref<1x128xf32, #tpu.memory_space<vmem>>, vector<1x128xf32>
    tpu.vector_store %arg8[%c0_12, %c0_13], %26 {strides = array<i32>} : memref<1x128xf32, #tpu.memory_space<vmem>>, vector<1x128xf32>,
    %c0_14 = arith.constant 0 : index
    %c0_15 = arith.constant 0 : index
    %28 = vector.load %arg9[%c0_14, %c0_15] : memref<1x128xf32, #tpu.memory_space<vmem>>, vector<1x128xf32>
    %29 = arith.mulf %22, %22 : vector<352x128xf32>
    %cst_16 = arith.constant dense<0.000000e+00> : vector<128xf32>
    %30 = vector.multi_reduction <add>, %29, %cst_16 [0] : vector<352x128xf32> to vector<128xf32>
    %31 = vector.shape_cast %30 : vector<128xf32> to vector<1x128xf32>
    %32 = arith.addf %28, %31 : vector<1x128xf32>
    %c0_17 = arith.constant 0 : index
    %c0_18 = arith.constant 0 : index
    %33 = vector.load %arg9[%c0_17, %c0_18] : memref<1x128xf32, #tpu.memory_space<vmem>>, vector<1x128xf32>
    tpu.vector_store %arg9[%c0_17, %c0_18], %32 {strides = array<i32>} : memref<1x128xf32, #tpu.memory_space<vmem>>, vector<1x128xf32>,
    %c0_i32_19 = arith.constant 0 : i32
    %34 = arith.cmpi eq, %arg0, %c0_i32_19 : i32
    %35 = arith.extui %34 : i1 to i32
    %c0_i32_20 = arith.constant 0 : i32
    %36 = arith.cmpi ne, %35, %c0_i32_20 : i32
    scf.if %36 {
      %c0_21 = arith.constant 0 : index
      %c0_22 = arith.constant 0 : index
      %37 = vector.load %arg8[%c0_21, %c0_22] : memref<1x128xf32, #tpu.memory_space<vmem>>, vector<1x128xf32>
      %cst_23 = arith.constant 2.958580e-03 : f32
      %38 = vector.broadcast %cst_23 : f32 to vector<1x128xf32>
      %39 = arith.mulf %37, %38 : vector<1x128xf32>
      %c0_24 = arith.constant 0 : index
      %c0_25 = arith.constant 0 : index
      %40 = vector.load %arg9[%c0_24, %c0_25] : memref<1x128xf32, #tpu.memory_space<vmem>>, vector<1x128xf32>
      %cst_26 = arith.constant 2.958580e-03 : f32
      %41 = vector.broadcast %cst_26 : f32 to vector<1x128xf32>
      %42 = arith.mulf %40, %41 : vector<1x128xf32>
      %43 = arith.mulf %39, %39 : vector<1x128xf32>
      %44 = arith.subf %42, %43 : vector<1x128xf32>
      %cst_27 = arith.constant 0.000000e+00 : f32
      %45 = vector.broadcast %cst_27 : f32 to vector<1x128xf32>
      %46 = arith.maximumf %44, %45 : vector<1x128xf32>
      %c0_28 = arith.constant 0 : index
      %c0_29 = arith.constant 0 : index
      %47 = vector.load %arg4[%c0_28, %c0_29] : memref<1x128xf32, #tpu.memory_space<vmem>>, vector<1x128xf32>
      %cst_30 = arith.constant 9.99999974E-6 : f32
      %48 = vector.broadcast %cst_30 : f32 to vector<1x128xf32>
      %49 = arith.addf %46, %48 : vector<1x128xf32>
      %50 = math.rsqrt %49 : vector<1x128xf32>
      %51 = arith.mulf %47, %50 : vector<1x128xf32>
      %c0_31 = arith.constant 0 : index
      %c0_32 = arith.constant 0 : index
      %52 = vector.load %arg5[%c0_31, %c0_32] : memref<1x128xf32, #tpu.memory_space<vmem>>, vector<1x128xf32>
      %53 = arith.mulf %39, %51 : vector<1x128xf32>
      %54 = arith.subf %52, %53 : vector<1x128xf32>
      %c0_33 = arith.constant 0 : index
      %c0_34 = arith.constant 0 : index
      %c0_35 = arith.constant 0 : index
      %55 = vector.load %arg7[%c0_33, %c0_34, %c0_35] : memref<1x352x128xf32, #tpu.memory_space<vmem>>, vector<1x352x128xf32>
      %56 = vector.shape_cast %51 : vector<1x128xf32> to vector<1x1x128xf32>
      %57 = vector.broadcast %56 : vector<1x1x128xf32> to vector<1x352x128xf32>
      %58 = arith.mulf %55, %57 : vector<1x352x128xf32>
      %59 = vector.shape_cast %54 : vector<1x128xf32> to vector<1x1x128xf32>
      %60 = vector.broadcast %59 : vector<1x1x128xf32> to vector<1x352x128xf32>
      %61 = arith.addf %58, %60 : vector<1x352x128xf32>
      %cst_36 = arith.constant 0.000000e+00 : f32
      %62 = vector.broadcast %cst_36 : f32 to vector<1x352x128xf32>
      %63 = arith.maximumf %61, %62 : vector<1x352x128xf32>
      %64 = arith.truncf %63 : vector<1x352x128xf32> to vector<1x352x128xbf16>
      %c0_37 = arith.constant 0 : index
      %c0_38 = arith.constant 0 : index
      %c0_39 = arith.constant 0 : index
      %65 = vector.load %arg6[%c0_37, %c0_38, %c0_39] : memref<1x352x128xbf16, #tpu.memory_space<vmem>>, vector<1x352x128xbf16>
      tpu.vector_store %arg6[%c0_37, %c0_38, %c0_39], %64 {strides = array<i32>} : memref<1x352x128xbf16, #tpu.memory_space<vmem>>, vector<1x352x128xbf16>,
    } else {
    }
    return
  }
  func.func @transform_0(%arg0: i32) -> (i32, i32) {
    %c0_i32 = arith.constant 0 : i32
    %c0_i32_0 = arith.constant 0 : i32
    return %arg0, %c0_i32 : i32, i32
  }
  func.func @transform_1(%arg0: i32) -> (i32, i32) {
    %c0_i32 = arith.constant 0 : i32
    %c0_i32_0 = arith.constant 0 : i32
    %c0_i32_1 = arith.constant 0 : i32
    return %c0_i32, %c0_i32_0 : i32, i32
  }
  func.func @transform_2(%arg0: i32) -> (i32, i32) {
    %c0_i32 = arith.constant 0 : i32
    %c0_i32_0 = arith.constant 0 : i32
    %c0_i32_1 = arith.constant 0 : i32
    return %c0_i32, %c0_i32_0 : i32, i32
  }
  func.func @transform_3(%arg0: i32) -> (i32, i32) {
    %c0_i32 = arith.constant 0 : i32
    %c0_i32_0 = arith.constant 0 : i32
    %c0_i32_1 = arith.constant 0 : i32
    return %c0_i32, %c0_i32_0 : i32, i32
  }
  func.func @transform_4(%arg0: i32) -> (i32, i32) {
    %c0_i32 = arith.constant 0 : i32
    %c0_i32_0 = arith.constant 0 : i32
    %c0_i32_1 = arith.constant 0 : i32
    return %c0_i32, %c0_i32_0 : i32, i32
  }
  func.func @transform_5(%arg0: i32) -> (i32, i32, i32) {
    %c0_i32 = arith.constant 0 : i32
    %c0_i32_0 = arith.constant 0 : i32
    %c0_i32_1 = arith.constant 0 : i32
    %c0_i32_2 = arith.constant 0 : i32
    return %c0_i32, %c0_i32_0, %c0_i32_1 : i32, i32, i32
  }
}

module attributes {stable_mosaic.version = 11 : i64} {
  func.func @_final_kernel(%arg0: i32, %arg1: memref<256x256xbf16, #tpu.memory_space<vmem>>, %arg2: memref<256x128xbf16, #tpu.memory_space<vmem>>, %arg3: memref<1x128xf32, #tpu.memory_space<vmem>>, %arg4: memref<256x128xf32, #tpu.memory_space<vmem>>) attributes {dimension_semantics = [#tpu.dimension_semantics<parallel>], iteration_bounds = array<i64: 2>, scalar_prefetch = 0 : i64, scratch_operands = 0 : i64, tpu.core_type = #tpu.core_type<tc>, window_params = [{transform_indices = @transform_0, window_bounds = array<i64: 256, 256>}, {pipeline_mode = #tpu.pipeline_mode<synchronous>, transform_indices = @transform_1, window_bounds = array<i64: 256, 128>}, {pipeline_mode = #tpu.pipeline_mode<synchronous>, transform_indices = @transform_2, window_bounds = array<i64: 1, 128>}, {transform_indices = @transform_3, window_bounds = array<i64: 256, 128>}]} {
    %c0 = arith.constant 0 : index
    %c0_0 = arith.constant 0 : index
    %0 = vector.load %arg1[%c0, %c0_0] : memref<256x256xbf16, #tpu.memory_space<vmem>>, vector<256x256xbf16>
    %c0_1 = arith.constant 0 : index
    %c0_2 = arith.constant 0 : index
    %1 = vector.load %arg2[%c0_1, %c0_2] : memref<256x128xbf16, #tpu.memory_space<vmem>>, vector<256x128xbf16>
    %cst = arith.constant dense<0.000000e+00> : vector<256x128xf32>
    %2 = tpu.matmul %0, %1, %cst {dimension_numbers = #tpu.dot_dimension_numbers<[1], [0], [0], [1], [0, 0, 1, 1], [], []>} : vector<256x256xbf16>, vector<256x128xbf16>, vector<256x128xf32> -> vector<256x128xf32>
    %c0_3 = arith.constant 0 : index
    %c0_4 = arith.constant 0 : index
    %3 = vector.load %arg3[%c0_3, %c0_4] : memref<1x128xf32, #tpu.memory_space<vmem>>, vector<1x128xf32>
    %4 = vector.broadcast %3 : vector<1x128xf32> to vector<256x128xf32>
    %5 = arith.addf %2, %4 : vector<256x128xf32>
    %6 = math.tanh %5 : vector<256x128xf32>
    %c0_5 = arith.constant 0 : index
    %c0_6 = arith.constant 0 : index
    %7 = vector.load %arg4[%c0_5, %c0_6] : memref<256x128xf32, #tpu.memory_space<vmem>>, vector<256x128xf32>
    tpu.vector_store %arg4[%c0_5, %c0_6], %6 {strides = array<i32>} : memref<256x128xf32, #tpu.memory_space<vmem>>, vector<256x128xf32>,
    return
  }
  func.func @transform_0(%arg0: i32) -> (i32, i32) {
    %c0_i32 = arith.constant 0 : i32
    %c0_i32_0 = arith.constant 0 : i32
    return %arg0, %c0_i32 : i32, i32
  }
  func.func @transform_1(%arg0: i32) -> (i32, i32) {
    %c0_i32 = arith.constant 0 : i32
    %c0_i32_0 = arith.constant 0 : i32
    %c0_i32_1 = arith.constant 0 : i32
    return %c0_i32, %c0_i32_0 : i32, i32
  }
  func.func @transform_2(%arg0: i32) -> (i32, i32) {
    %c0_i32 = arith.constant 0 : i32
    %c0_i32_0 = arith.constant 0 : i32
    %c0_i32_1 = arith.constant 0 : i32
    return %c0_i32, %c0_i32_0 : i32, i32
  }
  func.func @transform_3(%arg0: i32) -> (i32, i32) {
    %c0_i32 = arith.constant 0 : i32
    %c0_i32_0 = arith.constant 0 : i32
    return %arg0, %c0_i32 : i32, i32
  }
}

</mosaic_0001>

<llo_original>
// kernel: generator_forward.4
$region0: #{generator_forward.4}
  #allocation0 [shape = 'u32[]', space=smem, size = 0x4, offset = 0x4, fixed_abs, tag = 'smem constant byte address 0x4 - core index']
  #allocation1 [shape = 'u32[72,128]{1,0:T(1,128)}', space=vmem, size = 0x9000, scoped, tag = 'internal scratch']
  #allocation2 [shape = 'f32[1,32,128]{2,1,0:T(8,128)}', space=vmem, size = 0x4000, scoped, tag = 'scratch operand']
  #allocation3 [shape = 'f32[1,128]{1,0:T(1,128)}', space=vmem, size = 0x200, scoped, tag = 'scratch operand']
  #allocation4 [shape = 'f32[1,128]{1,0:T(1,128)}', space=vmem, size = 0x200, scoped, tag = 'scratch operand']
  %s0 = inlined_call_operand.vmem [shape: bf16[32,384], index: 0, kind: input, shape index: {}]
  %s1 = inlined_call_operand.vmem [shape: bf16[384,128], index: 1, kind: input, shape index: {}]
  %s2 = inlined_call_operand.vmem [shape: f32[1,128], index: 2, kind: input, shape index: {}]
  %s3 = inlined_call_operand.vmem [shape: f32[1,128], index: 3, kind: input, shape index: {}]
  %s4 = inlined_call_operand.vmem [shape: f32[1,128], index: 4, kind: input, shape index: {}]
  %s5 = inlined_call_operand.vmem [shape: bf16[1,32,128], index: 5, kind: output, shape index: {}]
  %s6 = sld [smem:[#allocation0]]
  $region38: #{generator_forward.4} parent=0
    _
  %s8 = ssub.s32 1, %s6
  %s9 = scalar_select 0, %s8, %s6
  // Predicated region
  $region2: #{generator_forward.4} parent=0 // pred_check
    _
  $region3: #{generator_forward.4} parent=0 // pred_check_branch
    %11 = sbr.rel (0) target = $region5
  $region4: #{generator_forward.4} parent=0 // pred_region
    _
  $region5: #{generator_forward.4} parent=0 // pred_fallthru
    _
  // Predicated region
  $region6: #{generator_forward.4} parent=0 // pred_check
    _
  $region7: #{generator_forward.4} parent=0 // pred_check_branch
    %13 = sbr.rel (0) target = $region9
  $region8: #{generator_forward.4} parent=0 // pred_region
    _
  $region9: #{generator_forward.4} parent=0 // pred_fallthru
    _
  // Predicated region
  $region10: #{generator_forward.4} parent=0 // pred_check
    _
  $region11: #{generator_forward.4} parent=0 // pred_check_branch
    %15 = sbr.rel (0) target = $region13
  $region12: #{generator_forward.4} parent=0 // pred_region
    _
  $region13: #{generator_forward.4} parent=0 // pred_fallthru
    _
  // Predicated region
  $region14: #{generator_forward.4} parent=0 // pred_check
    _
  $region15: #{generator_forward.4} parent=0 // pred_check_branch
    %17 = sbr.rel (0) target = $region17
  $region16: #{generator_forward.4} parent=0 // pred_region
    _
  $region17: #{generator_forward.4} parent=0 // pred_fallthru
    _
  // Predicated region
  $region18: #{generator_forward.4} parent=0 // pred_check
    _
  $region19: #{generator_forward.4} parent=0 // pred_check_branch
    %19 = sbr.rel (0) target = $region21
  $region20: #{generator_forward.4} parent=0 // pred_region
    _
  $region21: #{generator_forward.4} parent=0 // pred_fallthru
    _
  %p20 = scmp.eq.s32.totalorder 0, 0
  // Predicated region
  $region22: #{generator_forward.4} parent=0 // pred_check
    %p21 = pneg %p20
  $region23: #{generator_forward.4} parent=0 // pred_check_branch
    %23 = sbr.rel (%p21) target = $region25
  $region24: #{generator_forward.4} parent=0 // pred_region
    %24 = vst [vmem:[#allocation3] sm:$0x1] 0.0
    %25 = vst [vmem:[#allocation4] sm:$0x1] 0.0
  $region25: #{generator_forward.4} parent=0 // pred_fallthru
    _
  %v26 = vld [vmem:[%s0] sm:$0xff]
  %v27 = vld [vmem:[%s0 + $0x8] sm:$0xf]
  %v28 = vld [vmem:[%s0 + $0xc] sm:$0xff]
  %v29 = vld [vmem:[%s0 + $0x14] sm:$0xf]
  %v30 = vld [vmem:[%s0 + $0x18] sm:$0xff]
  %v31 = vld [vmem:[%s0 + $0x20] sm:$0xf]
  %v32 = vld [vmem:[%s0 + $0x24] sm:$0xff]
  %v33 = vld [vmem:[%s0 + $0x2c] sm:$0xf]
  %v34 = vld [vmem:[%s1] sm:$0xf]
  %v35 = vld [vmem:[%s1 + $0x4] sm:$0xf]
  %v36 = vld [vmem:[%s1 + $0x8] sm:$0xf]
  %v37 = vld [vmem:[%s1 + $0xc] sm:$0xf]
  %v38 = vld [vmem:[%s1 + $0x10] sm:$0xf]
  %v39 = vld [vmem:[%s1 + $0x14] sm:$0xf]
  %v40 = vld [vmem:[%s1 + $0x18] sm:$0xf]
  %v41 = vld [vmem:[%s1 + $0x1c] sm:$0xf]
  %v42 = vld [vmem:[%s1 + $0x20] sm:$0xf]
  %v43 = vld [vmem:[%s1 + $0x24] sm:$0xf]
  %v44 = vld [vmem:[%s1 + $0x28] sm:$0xf]
  %v45 = vld [vmem:[%s1 + $0x2c] sm:$0xf]
  %v46 = vld [vmem:[%s1 + $0x30] sm:$0xf]
  %v47 = vld [vmem:[%s1 + $0x34] sm:$0xf]
  %v48 = vld [vmem:[%s1 + $0x38] sm:$0xf]
  %v49 = vld [vmem:[%s1 + $0x3c] sm:$0xf]
  %v50 = vld [vmem:[%s1 + $0x40] sm:$0xf]
  %v51 = vld [vmem:[%s1 + $0x44] sm:$0xf]
  %v52 = vld [vmem:[%s1 + $0x48] sm:$0xf]
  %v53 = vld [vmem:[%s1 + $0x4c] sm:$0xf]
  %v54 = vld [vmem:[%s1 + $0x50] sm:$0xf]
  %v55 = vld [vmem:[%s1 + $0x54] sm:$0xf]
  %v56 = vld [vmem:[%s1 + $0x58] sm:$0xf]
  %v57 = vld [vmem:[%s1 + $0x5c] sm:$0xf]
  %v58 = vld [vmem:[%s1 + $0x60] sm:$0xf]
  %v59 = vld [vmem:[%s1 + $0x64] sm:$0xf]
  %v60 = vld [vmem:[%s1 + $0x68] sm:$0xf]
  %v61 = vld [vmem:[%s1 + $0x6c] sm:$0xf]
  %v62 = vld [vmem:[%s1 + $0x70] sm:$0xf]
  %v63 = vld [vmem:[%s1 + $0x74] sm:$0xf]
  %v64 = vld [vmem:[%s1 + $0x78] sm:$0xf]
  %v65 = vld [vmem:[%s1 + $0x7c] sm:$0xf]
  %v66 = vld [vmem:[%s1 + $0x80] sm:$0xf]
  %v67 = vld [vmem:[%s1 + $0x84] sm:$0xf]
  %v68 = vld [vmem:[%s1 + $0x88] sm:$0xf]
  %v69 = vld [vmem:[%s1 + $0x8c] sm:$0xf]
  %v70 = vld [vmem:[%s1 + $0x90] sm:$0xf]
  %v71 = vld [vmem:[%s1 + $0x94] sm:$0xf]
  %v72 = vld [vmem:[%s1 + $0x98] sm:$0xf]
  %v73 = vld [vmem:[%s1 + $0x9c] sm:$0xf]
  %v74 = vld [vmem:[%s1 + $0xa0] sm:$0xf]
  %v75 = vld [vmem:[%s1 + $0xa4] sm:$0xf]
  %v76 = vld [vmem:[%s1 + $0xa8] sm:$0xf]
  %v77 = vld [vmem:[%s1 + $0xac] sm:$0xf]
  %v78 = vld [vmem:[%s1 + $0xb0] sm:$0xf]
  %v79 = vld [vmem:[%s1 + $0xb4] sm:$0xf]
  %v80 = vld [vmem:[%s1 + $0xb8] sm:$0xf]
  %v81 = vld [vmem:[%s1 + $0xbc] sm:$0xf]
  %v82 = vld [vmem:[%s2] sm:$0x1]
  %v84 = vperm.slane %v82, 0
  %v94 = vunpack.c.l.b16 %v26
  %v95 = vunpack.c.h.b16 %v26
  %v96 = vunpack.c.l.b16 %v27
  %v97 = vunpack.c.l.b16 %v28
  %v98 = vunpack.c.h.b16 %v28
  %v99 = vunpack.c.l.b16 %v29
  %v100 = vunpack.c.l.b16 %v30
  %v101 = vunpack.c.h.b16 %v30
  %v102 = vunpack.c.l.b16 %v31
  %v103 = vunpack.c.l.b16 %v32
  %v104 = vunpack.c.h.b16 %v32
  %v105 = vunpack.c.l.b16 %v33
  %v106 = vpack.c.b16 %v97, %v94
  %v107 = vpack.c.b16 %v98, %v95
  %v108 = vpack.c.b16 %v99, %v96
  %v109 = vpack.c.b16 %v103, %v100
  %v110 = vpack.c.b16 %v104, %v101
  %v111 = vpack.c.b16 %v105, %v102
  %v166 = vunpack.c.l.b16 %v34
  %v167 = vunpack.c.l.b16 %v35
  %v168 = vunpack.c.l.b16 %v36
  %v169 = vunpack.c.l.b16 %v37
  %v170 = vunpack.c.l.b16 %v38
  %v171 = vunpack.c.l.b16 %v39
  %v172 = vunpack.c.l.b16 %v40
  %v173 = vunpack.c.l.b16 %v41
  %v174 = vunpack.c.l.b16 %v42
  %v175 = vunpack.c.l.b16 %v43
  %v176 = vunpack.c.l.b16 %v44
  %v177 = vunpack.c.l.b16 %v45
  %v178 = vunpack.c.l.b16 %v46
  %v179 = vunpack.c.l.b16 %v47
  %v180 = vunpack.c.l.b16 %v48
  %v181 = vunpack.c.l.b16 %v49
  %v182 = vunpack.c.l.b16 %v50
  %v183 = vunpack.c.l.b16 %v51
  %v184 = vunpack.c.l.b16 %v52
  %v185 = vunpack.c.l.b16 %v53
  %v186 = vunpack.c.l.b16 %v54
  %v187 = vunpack.c.l.b16 %v55
  %v188 = vunpack.c.l.b16 %v56
  %v189 = vunpack.c.l.b16 %v57
  %v190 = vunpack.c.l.b16 %v58
  %v191 = vunpack.c.l.b16 %v59
  %v192 = vunpack.c.l.b16 %v60
  %v193 = vunpack.c.l.b16 %v61
  %v194 = vunpack.c.l.b16 %v62
  %v195 = vunpack.c.l.b16 %v63
  %v196 = vunpack.c.l.b16 %v64
  %v197 = vunpack.c.l.b16 %v65
  %v198 = vunpack.c.l.b16 %v66
  %v199 = vunpack.c.l.b16 %v67
  %v200 = vunpack.c.l.b16 %v68
  %v201 = vunpack.c.l.b16 %v69
  %v202 = vunpack.c.l.b16 %v70
  %v203 = vunpack.c.l.b16 %v71
  %v204 = vunpack.c.l.b16 %v72
  %v205 = vunpack.c.l.b16 %v73
  %v206 = vunpack.c.l.b16 %v74
  %v207 = vunpack.c.l.b16 %v75
  %v208 = vunpack.c.l.b16 %v76
  %v209 = vunpack.c.l.b16 %v77
  %v210 = vunpack.c.l.b16 %v78
  %v211 = vunpack.c.l.b16 %v79
  %v212 = vunpack.c.l.b16 %v80
  %v213 = vunpack.c.l.b16 %v81
  %v214 = vpack.c.b16 %v167, %v166
  %v215 = vpack.c.b16 %v169, %v168
  %v216 = vpack.c.b16 %v171, %v170
  %v217 = vpack.c.b16 %v173, %v172
  %v218 = vpack.c.b16 %v175, %v174
  %v219 = vpack.c.b16 %v177, %v176
  %v220 = vpack.c.b16 %v179, %v178
  %v221 = vpack.c.b16 %v181, %v180
  %v222 = vpack.c.b16 %v183, %v182
  %v223 = vpack.c.b16 %v185, %v184
  %v224 = vpack.c.b16 %v187, %v186
  %v225 = vpack.c.b16 %v189, %v188
  %v226 = vpack.c.b16 %v191, %v190
  %v227 = vpack.c.b16 %v193, %v192
  %v228 = vpack.c.b16 %v195, %v194
  %v229 = vpack.c.b16 %v197, %v196
  %v230 = vpack.c.b16 %v199, %v198
  %v231 = vpack.c.b16 %v201, %v200
  %v232 = vpack.c.b16 %v203, %v202
  %v233 = vpack.c.b16 %v205, %v204
  %v234 = vpack.c.b16 %v207, %v206
  %v235 = vpack.c.b16 %v209, %v208
  %v236 = vpack.c.b16 %v211, %v210
  %v237 = vpack.c.b16 %v213, %v212
  %262 = vmatpush.bf16.msra.mxu0 %v221
  %263 = vmatpush.bf16.msra.mxu0 %v220
  %264 = vmatpush.bf16.msra.mxu0 %v219
  %265 = vmatpush.bf16.msra.mxu0 %v218
  %266 = vmatpush.bf16.msra.mxu0 %v217
  %267 = vmatpush.bf16.msra.mxu0 %v216
  %268 = vmatpush.bf16.msra.mxu0 %v215
  %269 = vmatpush.bf16.msra.mxu0 %v214
  %270 = vmatmul.bf16.gmra.mxu0 %v106
  %v271 = vpop.f32.mrf.mxu0
  %v272 = vadd.f32 %v84, %v271
  %v273 = vpop.f32.mrf.mxu0
  %v274 = vadd.f32 %v84, %v273
  %275 = vmatmul.bf16.gmra.mxu0 %v109
  %v276 = vpop.f32.mrf.mxu0
  %v277 = vadd.f32 %v84, %v276
  %v278 = vpop.f32.mrf.mxu0
  %v279 = vadd.f32 %v84, %v278
  %280 = vdwg.mxu0
  %281 = vmatpush.bf16.msra.mxu0 %v229
  %282 = vmatpush.bf16.msra.mxu0 %v228
  %283 = vmatpush.bf16.msra.mxu0 %v227
  %284 = vmatpush.bf16.msra.mxu0 %v226
  %285 = vmatpush.bf16.msra.mxu0 %v225
  %286 = vmatpush.bf16.msra.mxu0 %v224
  %287 = vmatpush.bf16.msra.mxu0 %v223
  %288 = vmatpush.bf16.msra.mxu0 %v222
  %289 = vmatmul.bf16.gmra.mxu0 %v107
  %v290 = vpop.f32.mrf.mxu0
  %v291 = vadd.f32 %v272, %v290
  %v292 = vpop.f32.mrf.mxu0
  %v293 = vadd.f32 %v274, %v292
  %294 = vmatmul.bf16.gmra.mxu0 %v110
  %v295 = vpop.f32.mrf.mxu0
  %v296 = vadd.f32 %v277, %v295
  %v297 = vpop.f32.mrf.mxu0
  %v298 = vadd.f32 %v279, %v297
  %299 = vdwg.mxu0
  %300 = vmatpush.bf16.msra.mxu0 %v237
  %301 = vmatpush.bf16.msra.mxu0 %v236
  %302 = vmatpush.bf16.msra.mxu0 %v235
  %303 = vmatpush.bf16.msra.mxu0 %v234
  %304 = vmatpush.bf16.msra.mxu0 %v233
  %305 = vmatpush.bf16.msra.mxu0 %v232
  %306 = vmatpush.bf16.msra.mxu0 %v231
  %307 = vmatpush.bf16.msra.mxu0 %v230
  %308 = vmatmul.bf16.gmra.mxu0 %v108
  %v309 = vpop.f32.mrf.mxu0
  %v310 = vadd.f32 %v291, %v309
  %v311 = vpop.f32.mrf.mxu0
  %v312 = vadd.f32 %v293, %v311
  %313 = vmatmul.bf16.gmra.mxu0 %v111
  %v314 = vpop.f32.mrf.mxu0
  %v315 = vadd.f32 %v296, %v314
  %v316 = vpop.f32.mrf.mxu0
  %v317 = vadd.f32 %v298, %v316
  %318 = vdwg.mxu0
  %s319 = smul.u32 0, 32
  %s320 = scalar_lea.vmem [#allocation2], %s319
  %321 = vst [vmem:[%s320] sm:$0xff] %v310
  %322 = vst [vmem:[%s320 + $0x8] sm:$0xff] %v312
  %323 = vst [vmem:[%s320 + $0x10] sm:$0xff] %v315
  %324 = vst [vmem:[%s320 + $0x18] sm:$0xff] %v317
  %v325 = vlaneseq
  %v326 = vshrl.u32 %v325, 7
  %v327 = vadd.s32 %v326, 8
  %v328 = vadd.s32 %v326, 16
  %v329 = vadd.s32 %v326, 24
  %v330 = vstv %s319
  %v331 = vadd.s32 %v330, %v326
  %v332 = vadd.s32 %v330, %v327
  %v333 = vadd.s32 %v330, %v328
  %v334 = vadd.s32 %v330, %v329
  %vm335 = vcmp.lt.s32.totalorder %v331, 18
  %vm336 = vcmp.lt.s32.totalorder %v332, 18
  %vm337 = vcmp.lt.s32.totalorder %v333, 18
  %vm338 = vcmp.lt.s32.totalorder %v334, 18
  %v339 = vsel %vm335, 1, 0
  %v340 = vsel %vm336, 1, 0
  %v341 = vsel %vm337, 1, 0
  %v342 = vsel %vm338, 1, 0
  %vm343 = vcmp.eq.s32.totalorder %v339, 1
  %vm344 = vcmp.eq.s32.totalorder %v340, 1
  %vm345 = vcmp.eq.s32.totalorder %v341, 1
  %vm346 = vcmp.eq.s32.totalorder %v342, 1
  %v347 = vsel %vm343, %v310, 0.0
  %v348 = vsel %vm344, %v312, 0.0
  %v349 = vsel %vm345, %v315, 0.0
  %v350 = vsel %vm346, %v317, 0.0
  %v351 = vld [vmem:[#allocation3] sm:$0x1]
  %v352 = vadd.f32 %v347, %v348
  %v353 = vadd.f32 %v352, %v349
  %v354 = vadd.f32 %v353, %v350
  %v355 = vrot.slane %v354, 4
  %v356 = vadd.f32 %v354, %v355
  %v357 = vrot.slane %v356, 2
  %v358 = vadd.f32 %v356, %v357
  %v359 = vrot.slane %v358, 1
  %v360 = vadd.f32 %v358, %v359
  %v361 = vadd.f32 %v351, %v360
  %362 = vst [vmem:[#allocation3] sm:$0x1] %v361
  %v363 = vld [vmem:[#allocation4] sm:$0x1]
  %v364 = vmul.f32 %v347, %v347
  %v365 = vmul.f32 %v348, %v348
  %v366 = vmul.f32 %v349, %v349
  %v367 = vmul.f32 %v350, %v350
  %v368 = vadd.f32 %v364, %v365
  %v369 = vadd.f32 %v368, %v366
  %v370 = vadd.f32 %v369, %v367
  %v371 = vrot.slane %v370, 4
  %v372 = vadd.f32 %v370, %v371
  %v373 = vrot.slane %v372, 2
  %v374 = vadd.f32 %v372, %v373
  %v375 = vrot.slane %v374, 1
  %v376 = vadd.f32 %v374, %v375
  %v377 = vadd.f32 %v363, %v376
  %378 = vst [vmem:[#allocation4] sm:$0x1] %v377
  // Predicated region
  $region26: #{generator_forward.4} parent=0 // pred_check
    %p379 = pneg %p20
  $region27: #{generator_forward.4} parent=0 // pred_check_branch
    %381 = sbr.rel (%p379) target = $region29
  $region28: #{generator_forward.4} parent=0 // pred_region
    %v382 = vld [vmem:[#allocation3] sm:$0x1]
    %v383 = vmul.f32 %v382, 0.055555556
    %v384 = vld [vmem:[#allocation4] sm:$0x1]
    %v385 = vmul.f32 %v384, 0.055555556
    %v386 = vmul.f32 %v383, %v383
    %v387 = vsub.f32 %v385, %v386
    %v388 = vmax.f32 %v387, 0.0
    %v389 = vld [vmem:[%s3] sm:$0x1]
    %v390 = vadd.f32 %v388, 1e-05
    %v391 = vrsqrt.pop %v390
    %v392 = vmul.f32 %v391, %v390
    %v393 = vmul.f32 %v392, %v391
    %v394 = vmul.f32 0.5, %v393
    %v395 = vsub.f32 1.5, %v394
    %v396 = vmul.f32 %v391, %v395
    %vm397 = vweird.f32 %v390
    %vm398 = vweird.f32 %v391
    %vm399 = vmor %vm397, %vm398
    %v400 = vsel %vm399, %v391, %v396
    %v401 = vmul.f32 %v389, %v400
    %v402 = vld [vmem:[%s4] sm:$0x1]
    %v403 = vmul.f32 %v383, %v401
    %v404 = vsub.f32 %v402, %v403
    %v405 = vld [vmem:[#allocation2] sm:$0xff]
    %v406 = vld [vmem:[#allocation2 + $0x8] sm:$0xff]
    %v407 = vld [vmem:[#allocation2 + $0x10] sm:$0xff]
    %v408 = vld [vmem:[#allocation2 + $0x18] sm:$0xff]
    %v410 = vperm.slane %v401, 0
    %v412 = vmul.f32 %v405, %v410
    %v413 = vmul.f32 %v406, %v410
    %v414 = vmul.f32 %v407, %v410
    %v415 = vmul.f32 %v408, %v410
    %v417 = vperm.slane %v404, 0
    %v419 = vadd.f32 %v412, %v417
    %v420 = vadd.f32 %v413, %v417
    %v421 = vadd.f32 %v414, %v417
    %v422 = vadd.f32 %v415, %v417
    %v423 = vmax.f32 %v419, 0.0
    %v424 = vmax.f32 %v420, 0.0
    %v425 = vmax.f32 %v421, 0.0
    %v426 = vmax.f32 %v422, 0.0
    %v427 = vpack.c.bf16 %v423, %v423
    %v428 = vpack.c.bf16 %v424, %v424
    %v429 = vpack.c.bf16 %v425, %v425
    %v430 = vpack.c.bf16 %v426, %v426
    %431 = vst [vmem:[%s5] sm:$0xf] %v427
    %432 = vst [vmem:[%s5 + $0x4] sm:$0xf] %v428
    %433 = vst [vmem:[%s5 + $0x8] sm:$0xf] %v429
    %434 = vst [vmem:[%s5 + $0xc] sm:$0xf] %v430
  $region29: #{generator_forward.4} parent=0 // pred_fallthru
    _
  // Predicated region
  $region30: #{generator_forward.4} parent=0 // pred_check
    _
  $region31: #{generator_forward.4} parent=0 // pred_check_branch
    %436 = sbr.rel (0) target = $region33
  $region32: #{generator_forward.4} parent=0 // pred_region
    _
  $region33: #{generator_forward.4} parent=0 // pred_fallthru
    _
  // Predicated region
  $region34: #{generator_forward.4} parent=0 // pred_check
    _
  $region35: #{generator_forward.4} parent=0 // pred_check_branch
    %438 = sbr.rel (0) target = $region37
  $region36: #{generator_forward.4} parent=0 // pred_region
    _
  $region37: #{generator_forward.4} parent=0 // pred_fallthru
    _

// kernel: generator_forward.5
$region0: #{generator_forward.5}
  #allocation0 [shape = 'u32[]', space=smem, size = 0x4, offset = 0x4, fixed_abs, tag = 'smem constant byte address 0x4 - core index']
  #allocation1 [shape = 'u32[72,128]{1,0:T(1,128)}', space=vmem, size = 0x9000, scoped, tag = 'internal scratch']
  #allocation2 [shape = 'f32[1,80,128]{2,1,0:T(8,128)}', space=vmem, size = 0xa000, scoped, tag = 'scratch operand']
  #allocation3 [shape = 'f32[1,128]{1,0:T(1,128)}', space=vmem, size = 0x200, scoped, tag = 'scratch operand']
  #allocation4 [shape = 'f32[1,128]{1,0:T(1,128)}', space=vmem, size = 0x200, scoped, tag = 'scratch operand']
  %s0 = inlined_call_operand.vmem [shape: bf16[80,256], index: 0, kind: input, shape index: {}]
  %s1 = inlined_call_operand.vmem [shape: bf16[256,128], index: 1, kind: input, shape index: {}]
  %s2 = inlined_call_operand.vmem [shape: f32[1,128], index: 2, kind: input, shape index: {}]
  %s3 = inlined_call_operand.vmem [shape: f32[1,128], index: 3, kind: input, shape index: {}]
  %s4 = inlined_call_operand.vmem [shape: f32[1,128], index: 4, kind: input, shape index: {}]
  %s5 = inlined_call_operand.vmem [shape: bf16[1,80,128], index: 5, kind: output, shape index: {}]
  %s6 = sld [smem:[#allocation0]]
  $region38: #{generator_forward.5} parent=0
    _
  %s8 = ssub.s32 1, %s6
  %s9 = scalar_select 0, %s8, %s6
  // Predicated region
  $region2: #{generator_forward.5} parent=0 // pred_check
    _
  $region3: #{generator_forward.5} parent=0 // pred_check_branch
    %11 = sbr.rel (0) target = $region5
  $region4: #{generator_forward.5} parent=0 // pred_region
    _
  $region5: #{generator_forward.5} parent=0 // pred_fallthru
    _
  // Predicated region
  $region6: #{generator_forward.5} parent=0 // pred_check
    _
  $region7: #{generator_forward.5} parent=0 // pred_check_branch
    %13 = sbr.rel (0) target = $region9
  $region8: #{generator_forward.5} parent=0 // pred_region
    _
  $region9: #{generator_forward.5} parent=0 // pred_fallthru
    _
  // Predicated region
  $region10: #{generator_forward.5} parent=0 // pred_check
    _
  $region11: #{generator_forward.5} parent=0 // pred_check_branch
    %15 = sbr.rel (0) target = $region13
  $region12: #{generator_forward.5} parent=0 // pred_region
    _
  $region13: #{generator_forward.5} parent=0 // pred_fallthru
    _
  // Predicated region
  $region14: #{generator_forward.5} parent=0 // pred_check
    _
  $region15: #{generator_forward.5} parent=0 // pred_check_branch
    %17 = sbr.rel (0) target = $region17
  $region16: #{generator_forward.5} parent=0 // pred_region
    _
  $region17: #{generator_forward.5} parent=0 // pred_fallthru
    _
  // Predicated region
  $region18: #{generator_forward.5} parent=0 // pred_check
    _
  $region19: #{generator_forward.5} parent=0 // pred_check_branch
    %19 = sbr.rel (0) target = $region21
  $region20: #{generator_forward.5} parent=0 // pred_region
    _
  $region21: #{generator_forward.5} parent=0 // pred_fallthru
    _
  %p20 = scmp.eq.s32.totalorder 0, 0
  // Predicated region
  $region22: #{generator_forward.5} parent=0 // pred_check
    %p21 = pneg %p20
  $region23: #{generator_forward.5} parent=0 // pred_check_branch
    %23 = sbr.rel (%p21) target = $region25
  $region24: #{generator_forward.5} parent=0 // pred_region
    %24 = vst [vmem:[#allocation3] sm:$0x1] 0.0
    %25 = vst [vmem:[#allocation4] sm:$0x1] 0.0
  $region25: #{generator_forward.5} parent=0 // pred_fallthru
    _
  %v26 = vld [vmem:[%s0] sm:$0xff]
  %v27 = vld [vmem:[%s0 + $0x8] sm:$0xff]
  %v28 = vld [vmem:[%s0 + $0x10] sm:$0xff]
  %v29 = vld [vmem:[%s0 + $0x18] sm:$0xff]
  %v30 = vld [vmem:[%s0 + $0x20] sm:$0xff]
  %v31 = vld [vmem:[%s0 + $0x28] sm:$0xff]
  %v32 = vld [vmem:[%s0 + $0x30] sm:$0xff]
  %v33 = vld [vmem:[%s0 + $0x38] sm:$0xff]
  %v34 = vld [vmem:[%s0 + $0x40] sm:$0xff]
  %v35 = vld [vmem:[%s0 + $0x48] sm:$0xff]
  %v36 = vld [vmem:[%s1] sm:$0xf]
  %v37 = vld [vmem:[%s1 + $0x4] sm:$0xf]
  %v38 = vld [vmem:[%s1 + $0x8] sm:$0xf]
  %v39 = vld [vmem:[%s1 + $0xc] sm:$0xf]
  %v40 = vld [vmem:[%s1 + $0x10] sm:$0xf]
  %v41 = vld [vmem:[%s1 + $0x14] sm:$0xf]
  %v42 = vld [vmem:[%s1 + $0x18] sm:$0xf]
  %v43 = vld [vmem:[%s1 + $0x1c] sm:$0xf]
  %v44 = vld [vmem:[%s1 + $0x20] sm:$0xf]
  %v45 = vld [vmem:[%s1 + $0x24] sm:$0xf]
  %v46 = vld [vmem:[%s1 + $0x28] sm:$0xf]
  %v47 = vld [vmem:[%s1 + $0x2c] sm:$0xf]
  %v48 = vld [vmem:[%s1 + $0x30] sm:$0xf]
  %v49 = vld [vmem:[%s1 + $0x34] sm:$0xf]
  %v50 = vld [vmem:[%s1 + $0x38] sm:$0xf]
  %v51 = vld [vmem:[%s1 + $0x3c] sm:$0xf]
  %v52 = vld [vmem:[%s1 + $0x40] sm:$0xf]
  %v53 = vld [vmem:[%s1 + $0x44] sm:$0xf]
  %v54 = vld [vmem:[%s1 + $0x48] sm:$0xf]
  %v55 = vld [vmem:[%s1 + $0x4c] sm:$0xf]
  %v56 = vld [vmem:[%s1 + $0x50] sm:$0xf]
  %v57 = vld [vmem:[%s1 + $0x54] sm:$0xf]
  %v58 = vld [vmem:[%s1 + $0x58] sm:$0xf]
  %v59 = vld [vmem:[%s1 + $0x5c] sm:$0xf]
  %v60 = vld [vmem:[%s1 + $0x60] sm:$0xf]
  %v61 = vld [vmem:[%s1 + $0x64] sm:$0xf]
  %v62 = vld [vmem:[%s1 + $0x68] sm:$0xf]
  %v63 = vld [vmem:[%s1 + $0x6c] sm:$0xf]
  %v64 = vld [vmem:[%s1 + $0x70] sm:$0xf]
  %v65 = vld [vmem:[%s1 + $0x74] sm:$0xf]
  %v66 = vld [vmem:[%s1 + $0x78] sm:$0xf]
  %v67 = vld [vmem:[%s1 + $0x7c] sm:$0xf]
  %v68 = vld [vmem:[%s2] sm:$0x1]
  %v70 = vperm.slane %v68, 0
  %v82 = vunpack.c.l.b16 %v26
  %v83 = vunpack.c.h.b16 %v26
  %v84 = vunpack.c.l.b16 %v27
  %v85 = vunpack.c.h.b16 %v27
  %v86 = vunpack.c.l.b16 %v28
  %v87 = vunpack.c.h.b16 %v28
  %v88 = vunpack.c.l.b16 %v29
  %v89 = vunpack.c.h.b16 %v29
  %v90 = vunpack.c.l.b16 %v30
  %v91 = vunpack.c.h.b16 %v30
  %v92 = vunpack.c.l.b16 %v31
  %v93 = vunpack.c.h.b16 %v31
  %v94 = vunpack.c.l.b16 %v32
  %v95 = vunpack.c.h.b16 %v32
  %v96 = vunpack.c.l.b16 %v33
  %v97 = vunpack.c.h.b16 %v33
  %v98 = vunpack.c.l.b16 %v34
  %v99 = vunpack.c.h.b16 %v34
  %v100 = vunpack.c.l.b16 %v35
  %v101 = vunpack.c.h.b16 %v35
  %v102 = vpack.c.b16 %v84, %v82
  %v103 = vpack.c.b16 %v85, %v83
  %v104 = vpack.c.b16 %v88, %v86
  %v105 = vpack.c.b16 %v89, %v87
  %v106 = vpack.c.b16 %v92, %v90
  %v107 = vpack.c.b16 %v93, %v91
  %v108 = vpack.c.b16 %v96, %v94
  %v109 = vpack.c.b16 %v97, %v95
  %v110 = vpack.c.b16 %v100, %v98
  %v111 = vpack.c.b16 %v101, %v99
  %v154 = vunpack.c.l.b16 %v36
  %v155 = vunpack.c.l.b16 %v37
  %v156 = vunpack.c.l.b16 %v38
  %v157 = vunpack.c.l.b16 %v39
  %v158 = vunpack.c.l.b16 %v40
  %v159 = vunpack.c.l.b16 %v41
  %v160 = vunpack.c.l.b16 %v42
  %v161 = vunpack.c.l.b16 %v43
  %v162 = vunpack.c.l.b16 %v44
  %v163 = vunpack.c.l.b16 %v45
  %v164 = vunpack.c.l.b16 %v46
  %v165 = vunpack.c.l.b16 %v47
  %v166 = vunpack.c.l.b16 %v48
  %v167 = vunpack.c.l.b16 %v49
  %v168 = vunpack.c.l.b16 %v50
  %v169 = vunpack.c.l.b16 %v51
  %v170 = vunpack.c.l.b16 %v52
  %v171 = vunpack.c.l.b16 %v53
  %v172 = vunpack.c.l.b16 %v54
  %v173 = vunpack.c.l.b16 %v55
  %v174 = vunpack.c.l.b16 %v56
  %v175 = vunpack.c.l.b16 %v57
  %v176 = vunpack.c.l.b16 %v58
  %v177 = vunpack.c.l.b16 %v59
  %v178 = vunpack.c.l.b16 %v60
  %v179 = vunpack.c.l.b16 %v61
  %v180 = vunpack.c.l.b16 %v62
  %v181 = vunpack.c.l.b16 %v63
  %v182 = vunpack.c.l.b16 %v64
  %v183 = vunpack.c.l.b16 %v65
  %v184 = vunpack.c.l.b16 %v66
  %v185 = vunpack.c.l.b16 %v67
  %v186 = vpack.c.b16 %v155, %v154
  %v187 = vpack.c.b16 %v157, %v156
  %v188 = vpack.c.b16 %v159, %v158
  %v189 = vpack.c.b16 %v161, %v160
  %v190 = vpack.c.b16 %v163, %v162
  %v191 = vpack.c.b16 %v165, %v164
  %v192 = vpack.c.b16 %v167, %v166
  %v193 = vpack.c.b16 %v169, %v168
  %v194 = vpack.c.b16 %v171, %v170
  %v195 = vpack.c.b16 %v173, %v172
  %v196 = vpack.c.b16 %v175, %v174
  %v197 = vpack.c.b16 %v177, %v176
  %v198 = vpack.c.b16 %v179, %v178
  %v199 = vpack.c.b16 %v181, %v180
  %v200 = vpack.c.b16 %v183, %v182
  %v201 = vpack.c.b16 %v185, %v184
  %218 = vmatpush.bf16.msra.mxu0 %v193
  %219 = vmatpush.bf16.msra.mxu0 %v192
  %220 = vmatpush.bf16.msra.mxu0 %v191
  %221 = vmatpush.bf16.msra.mxu0 %v190
  %222 = vmatpush.bf16.msra.mxu0 %v189
  %223 = vmatpush.bf16.msra.mxu0 %v188
  %224 = vmatpush.bf16.msra.mxu0 %v187
  %225 = vmatpush.bf16.msra.mxu0 %v186
  %226 = vmatmul.bf16.gmra.mxu0 %v102
  %v227 = vpop.f32.mrf.mxu0
  %v228 = vadd.f32 %v70, %v227
  %v229 = vpop.f32.mrf.mxu0
  %v230 = vadd.f32 %v70, %v229
  %231 = vmatmul.bf16.gmra.mxu0 %v104
  %v232 = vpop.f32.mrf.mxu0
  %v233 = vadd.f32 %v70, %v232
  %v234 = vpop.f32.mrf.mxu0
  %v235 = vadd.f32 %v70, %v234
  %236 = vmatmul.bf16.gmra.mxu0 %v106
  %v237 = vpop.f32.mrf.mxu0
  %v238 = vadd.f32 %v70, %v237
  %v239 = vpop.f32.mrf.mxu0
  %v240 = vadd.f32 %v70, %v239
  %241 = vmatmul.bf16.gmra.mxu0 %v108
  %v242 = vpop.f32.mrf.mxu0
  %v243 = vadd.f32 %v70, %v242
  %v244 = vpop.f32.mrf.mxu0
  %v245 = vadd.f32 %v70, %v244
  %246 = vmatmul.bf16.gmra.mxu0 %v110
  %v247 = vpop.f32.mrf.mxu0
  %v248 = vadd.f32 %v70, %v247
  %v249 = vpop.f32.mrf.mxu0
  %v250 = vadd.f32 %v70, %v249
  %251 = vdwg.mxu0
  %252 = vmatpush.bf16.msra.mxu0 %v201
  %253 = vmatpush.bf16.msra.mxu0 %v200
  %254 = vmatpush.bf16.msra.mxu0 %v199
  %255 = vmatpush.bf16.msra.mxu0 %v198
  %256 = vmatpush.bf16.msra.mxu0 %v197
  %257 = vmatpush.bf16.msra.mxu0 %v196
  %258 = vmatpush.bf16.msra.mxu0 %v195
  %259 = vmatpush.bf16.msra.mxu0 %v194
  %260 = vmatmul.bf16.gmra.mxu0 %v103
  %v261 = vpop.f32.mrf.mxu0
  %v262 = vadd.f32 %v228, %v261
  %v263 = vpop.f32.mrf.mxu0
  %v264 = vadd.f32 %v230, %v263
  %265 = vmatmul.bf16.gmra.mxu0 %v105
  %v266 = vpop.f32.mrf.mxu0
  %v267 = vadd.f32 %v233, %v266
  %v268 = vpop.f32.mrf.mxu0
  %v269 = vadd.f32 %v235, %v268
  %270 = vmatmul.bf16.gmra.mxu0 %v107
  %v271 = vpop.f32.mrf.mxu0
  %v272 = vadd.f32 %v238, %v271
  %v273 = vpop.f32.mrf.mxu0
  %v274 = vadd.f32 %v240, %v273
  %275 = vmatmul.bf16.gmra.mxu0 %v109
  %v276 = vpop.f32.mrf.mxu0
  %v277 = vadd.f32 %v243, %v276
  %v278 = vpop.f32.mrf.mxu0
  %v279 = vadd.f32 %v245, %v278
  %280 = vmatmul.bf16.gmra.mxu0 %v111
  %v281 = vpop.f32.mrf.mxu0
  %v282 = vadd.f32 %v248, %v281
  %v283 = vpop.f32.mrf.mxu0
  %v284 = vadd.f32 %v250, %v283
  %285 = vdwg.mxu0
  %s286 = smul.u32 0, 80
  %s287 = scalar_lea.vmem [#allocation2], %s286
  %288 = vst [vmem:[%s287] sm:$0xff] %v262
  %289 = vst [vmem:[%s287 + $0x8] sm:$0xff] %v264
  %290 = vst [vmem:[%s287 + $0x10] sm:$0xff] %v267
  %291 = vst [vmem:[%s287 + $0x18] sm:$0xff] %v269
  %292 = vst [vmem:[%s287 + $0x20] sm:$0xff] %v272
  %293 = vst [vmem:[%s287 + $0x28] sm:$0xff] %v274
  %294 = vst [vmem:[%s287 + $0x30] sm:$0xff] %v277
  %295 = vst [vmem:[%s287 + $0x38] sm:$0xff] %v279
  %296 = vst [vmem:[%s287 + $0x40] sm:$0xff] %v282
  %297 = vst [vmem:[%s287 + $0x48] sm:$0xff] %v284
  %v298 = vlaneseq
  %v299 = vshrl.u32 %v298, 7
  %v300 = vadd.s32 %v299, 8
  %v301 = vadd.s32 %v299, 16
  %v302 = vadd.s32 %v299, 24
  %v303 = vadd.s32 %v299, 32
  %v304 = vadd.s32 %v299, 40
  %v305 = vadd.s32 %v299, 48
  %v306 = vadd.s32 %v299, 56
  %v307 = vadd.s32 %v299, 64
  %v308 = vadd.s32 %v299, 72
  %v309 = vstv %s286
  %v310 = vadd.s32 %v309, %v299
  %v311 = vadd.s32 %v309, %v300
  %v312 = vadd.s32 %v309, %v301
  %v313 = vadd.s32 %v309, %v302
  %v314 = vadd.s32 %v309, %v303
  %v315 = vadd.s32 %v309, %v304
  %v316 = vadd.s32 %v309, %v305
  %v317 = vadd.s32 %v309, %v306
  %v318 = vadd.s32 %v309, %v307
  %v319 = vadd.s32 %v309, %v308
  %vm320 = vcmp.lt.s32.totalorder %v310, 72
  %vm321 = vcmp.lt.s32.totalorder %v311, 72
  %vm322 = vcmp.lt.s32.totalorder %v312, 72
  %vm323 = vcmp.lt.s32.totalorder %v313, 72
  %vm324 = vcmp.lt.s32.totalorder %v314, 72
  %vm325 = vcmp.lt.s32.totalorder %v315, 72
  %vm326 = vcmp.lt.s32.totalorder %v316, 72
  %vm327 = vcmp.lt.s32.totalorder %v317, 72
  %vm328 = vcmp.lt.s32.totalorder %v318, 72
  %vm329 = vcmp.lt.s32.totalorder %v319, 72
  %v330 = vsel %vm320, 1, 0
  %v331 = vsel %vm321, 1, 0
  %v332 = vsel %vm322, 1, 0
  %v333 = vsel %vm323, 1, 0
  %v334 = vsel %vm324, 1, 0
  %v335 = vsel %vm325, 1, 0
  %v336 = vsel %vm326, 1, 0
  %v337 = vsel %vm327, 1, 0
  %v338 = vsel %vm328, 1, 0
  %v339 = vsel %vm329, 1, 0
  %vm340 = vcmp.eq.s32.totalorder %v330, 1
  %vm341 = vcmp.eq.s32.totalorder %v331, 1
  %vm342 = vcmp.eq.s32.totalorder %v332, 1
  %vm343 = vcmp.eq.s32.totalorder %v333, 1
  %vm344 = vcmp.eq.s32.totalorder %v334, 1
  %vm345 = vcmp.eq.s32.totalorder %v335, 1
  %vm346 = vcmp.eq.s32.totalorder %v336, 1
  %vm347 = vcmp.eq.s32.totalorder %v337, 1
  %vm348 = vcmp.eq.s32.totalorder %v338, 1
  %vm349 = vcmp.eq.s32.totalorder %v339, 1
  %v350 = vsel %vm340, %v262, 0.0
  %v351 = vsel %vm341, %v264, 0.0
  %v352 = vsel %vm342, %v267, 0.0
  %v353 = vsel %vm343, %v269, 0.0
  %v354 = vsel %vm344, %v272, 0.0
  %v355 = vsel %vm345, %v274, 0.0
  %v356 = vsel %vm346, %v277, 0.0
  %v357 = vsel %vm347, %v279, 0.0
  %v358 = vsel %vm348, %v282, 0.0
  %v359 = vsel %vm349, %v284, 0.0
  %v360 = vld [vmem:[#allocation3] sm:$0x1]
  %v361 = vadd.f32 %v350, %v351
  %v362 = vadd.f32 %v361, %v352
  %v363 = vadd.f32 %v362, %v353
  %v364 = vadd.f32 %v363, %v354
  %v365 = vadd.f32 %v364, %v355
  %v366 = vadd.f32 %v365, %v356
  %v367 = vadd.f32 %v366, %v357
  %v368 = vadd.f32 %v367, %v358
  %v369 = vadd.f32 %v368, %v359
  %v370 = vrot.slane %v369, 4
  %v371 = vadd.f32 %v369, %v370
  %v372 = vrot.slane %v371, 2
  %v373 = vadd.f32 %v371, %v372
  %v374 = vrot.slane %v373, 1
  %v375 = vadd.f32 %v373, %v374
  %v376 = vadd.f32 %v360, %v375
  %377 = vst [vmem:[#allocation3] sm:$0x1] %v376
  %v378 = vld [vmem:[#allocation4] sm:$0x1]
  %v379 = vmul.f32 %v350, %v350
  %v380 = vmul.f32 %v351, %v351
  %v381 = vmul.f32 %v352, %v352
  %v382 = vmul.f32 %v353, %v353
  %v383 = vmul.f32 %v354, %v354
  %v384 = vmul.f32 %v355, %v355
  %v385 = vmul.f32 %v356, %v356
  %v386 = vmul.f32 %v357, %v357
  %v387 = vmul.f32 %v358, %v358
  %v388 = vmul.f32 %v359, %v359
  %v389 = vadd.f32 %v379, %v380
  %v390 = vadd.f32 %v389, %v381
  %v391 = vadd.f32 %v390, %v382
  %v392 = vadd.f32 %v391, %v383
  %v393 = vadd.f32 %v392, %v384
  %v394 = vadd.f32 %v393, %v385
  %v395 = vadd.f32 %v394, %v386
  %v396 = vadd.f32 %v395, %v387
  %v397 = vadd.f32 %v396, %v388
  %v398 = vrot.slane %v397, 4
  %v399 = vadd.f32 %v397, %v398
  %v400 = vrot.slane %v399, 2
  %v401 = vadd.f32 %v399, %v400
  %v402 = vrot.slane %v401, 1
  %v403 = vadd.f32 %v401, %v402
  %v404 = vadd.f32 %v378, %v403
  %405 = vst [vmem:[#allocation4] sm:$0x1] %v404
  // Predicated region
  $region26: #{generator_forward.5} parent=0 // pred_check
    %p406 = pneg %p20
  $region27: #{generator_forward.5} parent=0 // pred_check_branch
    %408 = sbr.rel (%p406) target = $region29
  $region28: #{generator_forward.5} parent=0 // pred_region
    %v409 = vld [vmem:[#allocation3] sm:$0x1]
    %v410 = vmul.f32 %v409, 0.013888889
    %v411 = vld [vmem:[#allocation4] sm:$0x1]
    %v412 = vmul.f32 %v411, 0.013888889
    %v413 = vmul.f32 %v410, %v410
    %v414 = vsub.f32 %v412, %v413
    %v415 = vmax.f32 %v414, 0.0
    %v416 = vld [vmem:[%s3] sm:$0x1]
    %v417 = vadd.f32 %v415, 1e-05
    %v418 = vrsqrt.pop %v417
    %v419 = vmul.f32 %v418, %v417
    %v420 = vmul.f32 %v419, %v418
    %v421 = vmul.f32 0.5, %v420
    %v422 = vsub.f32 1.5, %v421
    %v423 = vmul.f32 %v418, %v422
    %vm424 = vweird.f32 %v417
    %vm425 = vweird.f32 %v418
    %vm426 = vmor %vm424, %vm425
    %v427 = vsel %vm426, %v418, %v423
    %v428 = vmul.f32 %v416, %v427
    %v429 = vld [vmem:[%s4] sm:$0x1]
    %v430 = vmul.f32 %v410, %v428
    %v431 = vsub.f32 %v429, %v430
    %v432 = vld [vmem:[#allocation2] sm:$0xff]
    %v433 = vld [vmem:[#allocation2 + $0x8] sm:$0xff]
    %v434 = vld [vmem:[#allocation2 + $0x10] sm:$0xff]
    %v435 = vld [vmem:[#allocation2 + $0x18] sm:$0xff]
    %v436 = vld [vmem:[#allocation2 + $0x20] sm:$0xff]
    %v437 = vld [vmem:[#allocation2 + $0x28] sm:$0xff]
    %v438 = vld [vmem:[#allocation2 + $0x30] sm:$0xff]
    %v439 = vld [vmem:[#allocation2 + $0x38] sm:$0xff]
    %v440 = vld [vmem:[#allocation2 + $0x40] sm:$0xff]
    %v441 = vld [vmem:[#allocation2 + $0x48] sm:$0xff]
    %v443 = vperm.slane %v428, 0
    %v445 = vmul.f32 %v432, %v443
    %v446 = vmul.f32 %v433, %v443
    %v447 = vmul.f32 %v434, %v443
    %v448 = vmul.f32 %v435, %v443
    %v449 = vmul.f32 %v436, %v443
    %v450 = vmul.f32 %v437, %v443
    %v451 = vmul.f32 %v438, %v443
    %v452 = vmul.f32 %v439, %v443
    %v453 = vmul.f32 %v440, %v443
    %v454 = vmul.f32 %v441, %v443
    %v456 = vperm.slane %v431, 0
    %v458 = vadd.f32 %v445, %v456
    %v459 = vadd.f32 %v446, %v456
    %v460 = vadd.f32 %v447, %v456
    %v461 = vadd.f32 %v448, %v456
    %v462 = vadd.f32 %v449, %v456
    %v463 = vadd.f32 %v450, %v456
    %v464 = vadd.f32 %v451, %v456
    %v465 = vadd.f32 %v452, %v456
    %v466 = vadd.f32 %v453, %v456
    %v467 = vadd.f32 %v454, %v456
    %v468 = vmax.f32 %v458, 0.0
    %v469 = vmax.f32 %v459, 0.0
    %v470 = vmax.f32 %v460, 0.0
    %v471 = vmax.f32 %v461, 0.0
    %v472 = vmax.f32 %v462, 0.0
    %v473 = vmax.f32 %v463, 0.0
    %v474 = vmax.f32 %v464, 0.0
    %v475 = vmax.f32 %v465, 0.0
    %v476 = vmax.f32 %v466, 0.0
    %v477 = vmax.f32 %v467, 0.0
    %v478 = vpack.c.bf16 %v468, %v468
    %v479 = vpack.c.bf16 %v469, %v469
    %v480 = vpack.c.bf16 %v470, %v470
    %v481 = vpack.c.bf16 %v471, %v471
    %v482 = vpack.c.bf16 %v472, %v472
    %v483 = vpack.c.bf16 %v473, %v473
    %v484 = vpack.c.bf16 %v474, %v474
    %v485 = vpack.c.bf16 %v475, %v475
    %v486 = vpack.c.bf16 %v476, %v476
    %v487 = vpack.c.bf16 %v477, %v477
    %488 = vst [vmem:[%s5] sm:$0xf] %v478
    %489 = vst [vmem:[%s5 + $0x4] sm:$0xf] %v479
    %490 = vst [vmem:[%s5 + $0x8] sm:$0xf] %v480
    %491 = vst [vmem:[%s5 + $0xc] sm:$0xf] %v481
    %492 = vst [vmem:[%s5 + $0x10] sm:$0xf] %v482
    %493 = vst [vmem:[%s5 + $0x14] sm:$0xf] %v483
    %494 = vst [vmem:[%s5 + $0x18] sm:$0xf] %v484
    %495 = vst [vmem:[%s5 + $0x1c] sm:$0xf] %v485
    %496 = vst [vmem:[%s5 + $0x20] sm:$0xf] %v486
    %497 = vst [vmem:[%s5 + $0x24] sm:$0xf] %v487
  $region29: #{generator_forward.5} parent=0 // pred_fallthru
    _
  // Predicated region
  $region30: #{generator_forward.5} parent=0 // pred_check
    _
  $region31: #{generator_forward.5} parent=0 // pred_check_branch
    %499 = sbr.rel (0) target = $region33
  $region32: #{generator_forward.5} parent=0 // pred_region
    _
  $region33: #{generator_forward.5} parent=0 // pred_fallthru
    _
  // Predicated region
  $region34: #{generator_forward.5} parent=0 // pred_check
    _
  $region35: #{generator_forward.5} parent=0 // pred_check_branch
    %501 = sbr.rel (0) target = $region37
  $region36: #{generator_forward.5} parent=0 // pred_region
    _
  $region37: #{generator_forward.5} parent=0 // pred_fallthru
    _

// kernel: generator_forward.6
$region0: #{generator_forward.6}
  #allocation0 [shape = 'u32[]', space=smem, size = 0x4, offset = 0x4, fixed_abs, tag = 'smem constant byte address 0x4 - core index']
  #allocation1 [shape = 'u32[72,128]{1,0:T(1,128)}', space=vmem, size = 0x9000, scoped, tag = 'internal scratch']
  #allocation2 [shape = 'f32[1,352,128]{2,1,0:T(8,128)}', space=vmem, size = 0x2c000, scoped, tag = 'scratch operand']
  #allocation3 [shape = 'f32[1,128]{1,0:T(1,128)}', space=vmem, size = 0x200, scoped, tag = 'scratch operand']
  #allocation4 [shape = 'f32[1,128]{1,0:T(1,128)}', space=vmem, size = 0x200, scoped, tag = 'scratch operand']
  %s0 = inlined_call_operand.vmem [shape: bf16[352,384], index: 0, kind: input, shape index: {}]
  %s1 = inlined_call_operand.vmem [shape: bf16[384,128], index: 1, kind: input, shape index: {}]
  %s2 = inlined_call_operand.vmem [shape: f32[1,128], index: 2, kind: input, shape index: {}]
  %s3 = inlined_call_operand.vmem [shape: f32[1,128], index: 3, kind: input, shape index: {}]
  %s4 = inlined_call_operand.vmem [shape: f32[1,128], index: 4, kind: input, shape index: {}]
  %s5 = inlined_call_operand.vmem [shape: bf16[1,352,128], index: 5, kind: output, shape index: {}]
  %s6 = sld [smem:[#allocation0]]
  $region38: #{generator_forward.6} parent=0
    _
  %s8 = ssub.s32 1, %s6
  %s9 = scalar_select 0, %s8, %s6
  // Predicated region
  $region2: #{generator_forward.6} parent=0 // pred_check
    _
  $region3: #{generator_forward.6} parent=0 // pred_check_branch
    %11 = sbr.rel (0) target = $region5
  $region4: #{generator_forward.6} parent=0 // pred_region
    _
  $region5: #{generator_forward.6} parent=0 // pred_fallthru
    _
  // Predicated region
  $region6: #{generator_forward.6} parent=0 // pred_check
    _
  $region7: #{generator_forward.6} parent=0 // pred_check_branch
    %13 = sbr.rel (0) target = $region9
  $region8: #{generator_forward.6} parent=0 // pred_region
    _
  $region9: #{generator_forward.6} parent=0 // pred_fallthru
    _
  // Predicated region
  $region10: #{generator_forward.6} parent=0 // pred_check
    _
  $region11: #{generator_forward.6} parent=0 // pred_check_branch
    %15 = sbr.rel (0) target = $region13
  $region12: #{generator_forward.6} parent=0 // pred_region
    _
  $region13: #{generator_forward.6} parent=0 // pred_fallthru
    _
  // Predicated region
  $region14: #{generator_forward.6} parent=0 // pred_check
    _
  $region15: #{generator_forward.6} parent=0 // pred_check_branch
    %17 = sbr.rel (0) target = $region17
  $region16: #{generator_forward.6} parent=0 // pred_region
    _
  $region17: #{generator_forward.6} parent=0 // pred_fallthru
    _
  // Predicated region
  $region18: #{generator_forward.6} parent=0 // pred_check
    _
  $region19: #{generator_forward.6} parent=0 // pred_check_branch
    %19 = sbr.rel (0) target = $region21
  $region20: #{generator_forward.6} parent=0 // pred_region
    _
  $region21: #{generator_forward.6} parent=0 // pred_fallthru
    _
  %p20 = scmp.eq.s32.totalorder 0, 0
  // Predicated region
  $region22: #{generator_forward.6} parent=0 // pred_check
    %p21 = pneg %p20
  $region23: #{generator_forward.6} parent=0 // pred_check_branch
    %23 = sbr.rel (%p21) target = $region25
  $region24: #{generator_forward.6} parent=0 // pred_region
    %24 = vst [vmem:[#allocation3] sm:$0x1] 0.0
    %25 = vst [vmem:[#allocation4] sm:$0x1] 0.0
  $region25: #{generator_forward.6} parent=0 // pred_fallthru
    _
  %v26 = vld [vmem:[%s0] sm:$0xff]
  %v27 = vld [vmem:[%s0 + $0x8] sm:$0xf]
  %v28 = vld [vmem:[%s0 + $0xc] sm:$0xff]
  %v29 = vld [vmem:[%s0 + $0x14] sm:$0xf]
  %v30 = vld [vmem:[%s0 + $0x18] sm:$0xff]
  %v31 = vld [vmem:[%s0 + $0x20] sm:$0xf]
  %v32 = vld [vmem:[%s0 + $0x24] sm:$0xff]
  %v33 = vld [vmem:[%s0 + $0x2c] sm:$0xf]
  %v34 = vld [vmem:[%s0 + $0x30] sm:$0xff]
  %v35 = vld [vmem:[%s0 + $0x38] sm:$0xf]
  %v36 = vld [vmem:[%s0 + $0x3c] sm:$0xff]
  %v37 = vld [vmem:[%s0 + $0x44] sm:$0xf]
  %v38 = vld [vmem:[%s0 + $0x48] sm:$0xff]
  %v39 = vld [vmem:[%s0 + $0x50] sm:$0xf]
  %v40 = vld [vmem:[%s0 + $0x54] sm:$0xff]
  %v41 = vld [vmem:[%s0 + $0x5c] sm:$0xf]
  %v42 = vld [vmem:[%s0 + $0x60] sm:$0xff]
  %v43 = vld [vmem:[%s0 + $0x68] sm:$0xf]
  %v44 = vld [vmem:[%s0 + $0x6c] sm:$0xff]
  %v45 = vld [vmem:[%s0 + $0x74] sm:$0xf]
  %v46 = vld [vmem:[%s0 + $0x78] sm:$0xff]
  %v47 = vld [vmem:[%s0 + $0x80] sm:$0xf]
  %v48 = vld [vmem:[%s0 + $0x84] sm:$0xff]
  %v49 = vld [vmem:[%s0 + $0x8c] sm:$0xf]
  %v50 = vld [vmem:[%s0 + $0x90] sm:$0xff]
  %v51 = vld [vmem:[%s0 + $0x98] sm:$0xf]
  %v52 = vld [vmem:[%s0 + $0x9c] sm:$0xff]
  %v53 = vld [vmem:[%s0 + $0xa4] sm:$0xf]
  %v54 = vld [vmem:[%s0 + $0xa8] sm:$0xff]
  %v55 = vld [vmem:[%s0 + $0xb0] sm:$0xf]
  %v56 = vld [vmem:[%s0 + $0xb4] sm:$0xff]
  %v57 = vld [vmem:[%s0 + $0xbc] sm:$0xf]
  %v58 = vld [vmem:[%s0 + $0xc0] sm:$0xff]
  %v59 = vld [vmem:[%s0 + $0xc8] sm:$0xf]
  %v60 = vld [vmem:[%s0 + $0xcc] sm:$0xff]
  %v61 = vld [vmem:[%s0 + $0xd4] sm:$0xf]
  %v62 = vld [vmem:[%s0 + $0xd8] sm:$0xff]
  %v63 = vld [vmem:[%s0 + $0xe0] sm:$0xf]
  %v64 = vld [vmem:[%s0 + $0xe4] sm:$0xff]
  %v65 = vld [vmem:[%s0 + $0xec] sm:$0xf]
  %v66 = vld [vmem:[%s0 + $0xf0] sm:$0xff]
  %v67 = vld [vmem:[%s0 + $0xf8] sm:$0xf]
  %v68 = vld [vmem:[%s0 + $0xfc] sm:$0xff]
  %v69 = vld [vmem:[%s0 + $0x104] sm:$0xf]
  %v70 = vld [vmem:[%s0 + $0x108] sm:$0xff]
  %v71 = vld [vmem:[%s0 + $0x110] sm:$0xf]
  %v72 = vld [vmem:[%s0 + $0x114] sm:$0xff]
  %v73 = vld [vmem:[%s0 + $0x11c] sm:$0xf]
  %v74 = vld [vmem:[%s0 + $0x120] sm:$0xff]
  %v75 = vld [vmem:[%s0 + $0x128] sm:$0xf]
  %v76 = vld [vmem:[%s0 + $0x12c] sm:$0xff]
  %v77 = vld [vmem:[%s0 + $0x134] sm:$0xf]
  %v78 = vld [vmem:[%s0 + $0x138] sm:$0xff]
  %v79 = vld [vmem:[%s0 + $0x140] sm:$0xf]
  %v80 = vld [vmem:[%s0 + $0x144] sm:$0xff]
  %v81 = vld [vmem:[%s0 + $0x14c] sm:$0xf]
  %v82 = vld [vmem:[%s0 + $0x150] sm:$0xff]
  %v83 = vld [vmem:[%s0 + $0x158] sm:$0xf]
  %v84 = vld [vmem:[%s0 + $0x15c] sm:$0xff]
  %v85 = vld [vmem:[%s0 + $0x164] sm:$0xf]
  %v86 = vld [vmem:[%s0 + $0x168] sm:$0xff]
  %v87 = vld [vmem:[%s0 + $0x170] sm:$0xf]
  %v88 = vld [vmem:[%s0 + $0x174] sm:$0xff]
  %v89 = vld [vmem:[%s0 + $0x17c] sm:$0xf]
  %v90 = vld [vmem:[%s0 + $0x180] sm:$0xff]
  %v91 = vld [vmem:[%s0 + $0x188] sm:$0xf]
  %v92 = vld [vmem:[%s0 + $0x18c] sm:$0xff]
  %v93 = vld [vmem:[%s0 + $0x194] sm:$0xf]
  %v94 = vld [vmem:[%s0 + $0x198] sm:$0xff]
  %v95 = vld [vmem:[%s0 + $0x1a0] sm:$0xf]
  %v96 = vld [vmem:[%s0 + $0x1a4] sm:$0xff]
  %v97 = vld [vmem:[%s0 + $0x1ac] sm:$0xf]
  %v98 = vld [vmem:[%s0 + $0x1b0] sm:$0xff]
  %v99 = vld [vmem:[%s0 + $0x1b8] sm:$0xf]
  %v100 = vld [vmem:[%s0 + $0x1bc] sm:$0xff]
  %v101 = vld [vmem:[%s0 + $0x1c4] sm:$0xf]
  %v102 = vld [vmem:[%s0 + $0x1c8] sm:$0xff]
  %v103 = vld [vmem:[%s0 + $0x1d0] sm:$0xf]
  %v104 = vld [vmem:[%s0 + $0x1d4] sm:$0xff]
  %v105 = vld [vmem:[%s0 + $0x1dc] sm:$0xf]
  %v106 = vld [vmem:[%s0 + $0x1e0] sm:$0xff]
  %v107 = vld [vmem:[%s0 + $0x1e8] sm:$0xf]
  %v108 = vld [vmem:[%s0 + $0x1ec] sm:$0xff]
  %v109 = vld [vmem:[%s0 + $0x1f4] sm:$0xf]
  %v110 = vld [vmem:[%s0 + $0x1f8] sm:$0xff]
  %v111 = vld [vmem:[%s0 + $0x200] sm:$0xf]
  %v112 = vld [vmem:[%s0 + $0x204] sm:$0xff]
  %v113 = vld [vmem:[%s0 + $0x20c] sm:$0xf]
  %v114 = vld [vmem:[%s1] sm:$0xf]
  %v115 = vld [vmem:[%s1 + $0x4] sm:$0xf]
  %v116 = vld [vmem:[%s1 + $0x8] sm:$0xf]
  %v117 = vld [vmem:[%s1 + $0xc] sm:$0xf]
  %v118 = vld [vmem:[%s1 + $0x10] sm:$0xf]
  %v119 = vld [vmem:[%s1 + $0x14] sm:$0xf]
  %v120 = vld [vmem:[%s1 + $0x18] sm:$0xf]
  %v121 = vld [vmem:[%s1 + $0x1c] sm:$0xf]
  %v122 = vld [vmem:[%s1 + $0x20] sm:$0xf]
  %v123 = vld [vmem:[%s1 + $0x24] sm:$0xf]
  %v124 = vld [vmem:[%s1 + $0x28] sm:$0xf]
  %v125 = vld [vmem:[%s1 + $0x2c] sm:$0xf]
  %v126 = vld [vmem:[%s1 + $0x30] sm:$0xf]
  %v127 = vld [vmem:[%s1 + $0x34] sm:$0xf]
  %v128 = vld [vmem:[%s1 + $0x38] sm:$0xf]
  %v129 = vld [vmem:[%s1 + $0x3c] sm:$0xf]
  %v130 = vld [vmem:[%s1 + $0x40] sm:$0xf]
  %v131 = vld [vmem:[%s1 + $0x44] sm:$0xf]
  %v132 = vld [vmem:[%s1 + $0x48] sm:$0xf]
  %v133 = vld [vmem:[%s1 + $0x4c] sm:$0xf]
  %v134 = vld [vmem:[%s1 + $0x50] sm:$0xf]
  %v135 = vld [vmem:[%s1 + $0x54] sm:$0xf]
  %v136 = vld [vmem:[%s1 + $0x58] sm:$0xf]
  %v137 = vld [vmem:[%s1 + $0x5c] sm:$0xf]
  %v138 = vld [vmem:[%s1 + $0x60] sm:$0xf]
  %v139 = vld [vmem:[%s1 + $0x64] sm:$0xf]
  %v140 = vld [vmem:[%s1 + $0x68] sm:$0xf]
  %v141 = vld [vmem:[%s1 + $0x6c] sm:$0xf]
  %v142 = vld [vmem:[%s1 + $0x70] sm:$0xf]
  %v143 = vld [vmem:[%s1 + $0x74] sm:$0xf]
  %v144 = vld [vmem:[%s1 + $0x78] sm:$0xf]
  %v145 = vld [vmem:[%s1 + $0x7c] sm:$0xf]
  %v146 = vld [vmem:[%s1 + $0x80] sm:$0xf]
  %v147 = vld [vmem:[%s1 + $0x84] sm:$0xf]
  %v148 = vld [vmem:[%s1 + $0x88] sm:$0xf]
  %v149 = vld [vmem:[%s1 + $0x8c] sm:$0xf]
  %v150 = vld [vmem:[%s1 + $0x90] sm:$0xf]
  %v151 = vld [vmem:[%s1 + $0x94] sm:$0xf]
  %v152 = vld [vmem:[%s1 + $0x98] sm:$0xf]
  %v153 = vld [vmem:[%s1 + $0x9c] sm:$0xf]
  %v154 = vld [vmem:[%s1 + $0xa0] sm:$0xf]
  %v155 = vld [vmem:[%s1 + $0xa4] sm:$0xf]
  %v156 = vld [vmem:[%s1 + $0xa8] sm:$0xf]
  %v157 = vld [vmem:[%s1 + $0xac] sm:$0xf]
  %v158 = vld [vmem:[%s1 + $0xb0] sm:$0xf]
  %v159 = vld [vmem:[%s1 + $0xb4] sm:$0xf]
  %v160 = vld [vmem:[%s1 + $0xb8] sm:$0xf]
  %v161 = vld [vmem:[%s1 + $0xbc] sm:$0xf]
  %v162 = vld [vmem:[%s2] sm:$0x1]
  %v164 = vperm.slane %v162, 0
  %v254 = vunpack.c.l.b16 %v26
  %v255 = vunpack.c.h.b16 %v26
  %v256 = vunpack.c.l.b16 %v27
  %v257 = vunpack.c.l.b16 %v28
  %v258 = vunpack.c.h.b16 %v28
  %v259 = vunpack.c.l.b16 %v29
  %v260 = vunpack.c.l.b16 %v30
  %v261 = vunpack.c.h.b16 %v30
  %v262 = vunpack.c.l.b16 %v31
  %v263 = vunpack.c.l.b16 %v32
  %v264 = vunpack.c.h.b16 %v32
  %v265 = vunpack.c.l.b16 %v33
  %v266 = vunpack.c.l.b16 %v34
  %v267 = vunpack.c.h.b16 %v34
  %v268 = vunpack.c.l.b16 %v35
  %v269 = vunpack.c.l.b16 %v36
  %v270 = vunpack.c.h.b16 %v36
  %v271 = vunpack.c.l.b16 %v37
  %v272 = vunpack.c.l.b16 %v38
  %v273 = vunpack.c.h.b16 %v38
  %v274 = vunpack.c.l.b16 %v39
  %v275 = vunpack.c.l.b16 %v40
  %v276 = vunpack.c.h.b16 %v40
  %v277 = vunpack.c.l.b16 %v41
  %v278 = vunpack.c.l.b16 %v42
  %v279 = vunpack.c.h.b16 %v42
  %v280 = vunpack.c.l.b16 %v43
  %v281 = vunpack.c.l.b16 %v44
  %v282 = vunpack.c.h.b16 %v44
  %v283 = vunpack.c.l.b16 %v45
  %v284 = vunpack.c.l.b16 %v46
  %v285 = vunpack.c.h.b16 %v46
  %v286 = vunpack.c.l.b16 %v47
  %v287 = vunpack.c.l.b16 %v48
  %v288 = vunpack.c.h.b16 %v48
  %v289 = vunpack.c.l.b16 %v49
  %v290 = vunpack.c.l.b16 %v50
  %v291 = vunpack.c.h.b16 %v50
  %v292 = vunpack.c.l.b16 %v51
  %v293 = vunpack.c.l.b16 %v52
  %v294 = vunpack.c.h.b16 %v52
  %v295 = vunpack.c.l.b16 %v53
  %v296 = vunpack.c.l.b16 %v54
  %v297 = vunpack.c.h.b16 %v54
  %v298 = vunpack.c.l.b16 %v55
  %v299 = vunpack.c.l.b16 %v56
  %v300 = vunpack.c.h.b16 %v56
  %v301 = vunpack.c.l.b16 %v57
  %v302 = vunpack.c.l.b16 %v58
  %v303 = vunpack.c.h.b16 %v58
  %v304 = vunpack.c.l.b16 %v59
  %v305 = vunpack.c.l.b16 %v60
  %v306 = vunpack.c.h.b16 %v60
  %v307 = vunpack.c.l.b16 %v61
  %v308 = vunpack.c.l.b16 %v62
  %v309 = vunpack.c.h.b16 %v62
  %v310 = vunpack.c.l.b16 %v63
  %v311 = vunpack.c.l.b16 %v64
  %v312 = vunpack.c.h.b16 %v64
  %v313 = vunpack.c.l.b16 %v65
  %v314 = vunpack.c.l.b16 %v66
  %v315 = vunpack.c.h.b16 %v66
  %v316 = vunpack.c.l.b16 %v67
  %v317 = vunpack.c.l.b16 %v68
  %v318 = vunpack.c.h.b16 %v68
  %v319 = vunpack.c.l.b16 %v69
  %v320 = vunpack.c.l.b16 %v70
  %v321 = vunpack.c.h.b16 %v70
  %v322 = vunpack.c.l.b16 %v71
  %v323 = vunpack.c.l.b16 %v72
  %v324 = vunpack.c.h.b16 %v72
  %v325 = vunpack.c.l.b16 %v73
  %v326 = vunpack.c.l.b16 %v74
  %v327 = vunpack.c.h.b16 %v74
  %v328 = vunpack.c.l.b16 %v75
  %v329 = vunpack.c.l.b16 %v76
  %v330 = vunpack.c.h.b16 %v76
  %v331 = vunpack.c.l.b16 %v77
  %v332 = vunpack.c.l.b16 %v78
  %v333 = vunpack.c.h.b16 %v78
  %v334 = vunpack.c.l.b16 %v79
  %v335 = vunpack.c.l.b16 %v80
  %v336 = vunpack.c.h.b16 %v80
  %v337 = vunpack.c.l.b16 %v81
  %v338 = vunpack.c.l.b16 %v82
  %v339 = vunpack.c.h.b16 %v82
  %v340 = vunpack.c.l.b16 %v83
  %v341 = vunpack.c.l.b16 %v84
  %v342 = vunpack.c.h.b16 %v84
  %v343 = vunpack.c.l.b16 %v85
  %v344 = vunpack.c.l.b16 %v86
  %v345 = vunpack.c.h.b16 %v86
  %v346 = vunpack.c.l.b16 %v87
  %v347 = vunpack.c.l.b16 %v88
  %v348 = vunpack.c.h.b16 %v88
  %v349 = vunpack.c.l.b16 %v89
  %v350 = vunpack.c.l.b16 %v90
  %v351 = vunpack.c.h.b16 %v90
  %v352 = vunpack.c.l.b16 %v91
  %v353 = vunpack.c.l.b16 %v92
  %v354 = vunpack.c.h.b16 %v92
  %v355 = vunpack.c.l.b16 %v93
  %v356 = vunpack.c.l.b16 %v94
  %v357 = vunpack.c.h.b16 %v94
  %v358 = vunpack.c.l.b16 %v95
  %v359 = vunpack.c.l.b16 %v96
  %v360 = vunpack.c.h.b16 %v96
  %v361 = vunpack.c.l.b16 %v97
  %v362 = vunpack.c.l.b16 %v98
  %v363 = vunpack.c.h.b16 %v98
  %v364 = vunpack.c.l.b16 %v99
  %v365 = vunpack.c.l.b16 %v100
  %v366 = vunpack.c.h.b16 %v100
  %v367 = vunpack.c.l.b16 %v101
  %v368 = vunpack.c.l.b16 %v102
  %v369 = vunpack.c.h.b16 %v102
  %v370 = vunpack.c.l.b16 %v103
  %v371 = vunpack.c.l.b16 %v104
  %v372 = vunpack.c.h.b16 %v104
  %v373 = vunpack.c.l.b16 %v105
  %v374 = vunpack.c.l.b16 %v106
  %v375 = vunpack.c.h.b16 %v106
  %v376 = vunpack.c.l.b16 %v107
  %v377 = vunpack.c.l.b16 %v108
  %v378 = vunpack.c.h.b16 %v108
  %v379 = vunpack.c.l.b16 %v109
  %v380 = vunpack.c.l.b16 %v110
  %v381 = vunpack.c.h.b16 %v110
  %v382 = vunpack.c.l.b16 %v111
  %v383 = vunpack.c.l.b16 %v112
  %v384 = vunpack.c.h.b16 %v112
  %v385 = vunpack.c.l.b16 %v113
  %v386 = vpack.c.b16 %v257, %v254
  %v387 = vpack.c.b16 %v258, %v255
  %v388 = vpack.c.b16 %v259, %v256
  %v389 = vpack.c.b16 %v263, %v260
  %v390 = vpack.c.b16 %v264, %v261
  %v391 = vpack.c.b16 %v265, %v262
  %v392 = vpack.c.b16 %v269, %v266
  %v393 = vpack.c.b16 %v270, %v267
  %v394 = vpack.c.b16 %v271, %v268
  %v395 = vpack.c.b16 %v275, %v272
  %v396 = vpack.c.b16 %v276, %v273
  %v397 = vpack.c.b16 %v277, %v274
  %v398 = vpack.c.b16 %v281, %v278
  %v399 = vpack.c.b16 %v282, %v279
  %v400 = vpack.c.b16 %v283, %v280
  %v401 = vpack.c.b16 %v287, %v284
  %v402 = vpack.c.b16 %v288, %v285
  %v403 = vpack.c.b16 %v289, %v286
  %v404 = vpack.c.b16 %v293, %v290
  %v405 = vpack.c.b16 %v294, %v291
  %v406 = vpack.c.b16 %v295, %v292
  %v407 = vpack.c.b16 %v299, %v296
  %v408 = vpack.c.b16 %v300, %v297
  %v409 = vpack.c.b16 %v301, %v298
  %v410 = vpack.c.b16 %v305, %v302
  %v411 = vpack.c.b16 %v306, %v303
  %v412 = vpack.c.b16 %v307, %v304
  %v413 = vpack.c.b16 %v311, %v308
  %v414 = vpack.c.b16 %v312, %v309
  %v415 = vpack.c.b16 %v313, %v310
  %v416 = vpack.c.b16 %v317, %v314
  %v417 = vpack.c.b16 %v318, %v315
  %v418 = vpack.c.b16 %v319, %v316
  %v419 = vpack.c.b16 %v323, %v320
  %v420 = vpack.c.b16 %v324, %v321
  %v421 = vpack.c.b16 %v325, %v322
  %v422 = vpack.c.b16 %v329, %v326
  %v423 = vpack.c.b16 %v330, %v327
  %v424 = vpack.c.b16 %v331, %v328
  %v425 = vpack.c.b16 %v335, %v332
  %v426 = vpack.c.b16 %v336, %v333
  %v427 = vpack.c.b16 %v337, %v334
  %v428 = vpack.c.b16 %v341, %v338
  %v429 = vpack.c.b16 %v342, %v339
  %v430 = vpack.c.b16 %v343, %v340
  %v431 = vpack.c.b16 %v347, %v344
  %v432 = vpack.c.b16 %v348, %v345
  %v433 = vpack.c.b16 %v349, %v346
  %v434 = vpack.c.b16 %v353, %v350
  %v435 = vpack.c.b16 %v354, %v351
  %v436 = vpack.c.b16 %v355, %v352
  %v437 = vpack.c.b16 %v359, %v356
  %v438 = vpack.c.b16 %v360, %v357
  %v439 = vpack.c.b16 %v361, %v358
  %v440 = vpack.c.b16 %v365, %v362
  %v441 = vpack.c.b16 %v366, %v363
  %v442 = vpack.c.b16 %v367, %v364
  %v443 = vpack.c.b16 %v371, %v368
  %v444 = vpack.c.b16 %v372, %v369
  %v445 = vpack.c.b16 %v373, %v370
  %v446 = vpack.c.b16 %v377, %v374
  %v447 = vpack.c.b16 %v378, %v375
  %v448 = vpack.c.b16 %v379, %v376
  %v449 = vpack.c.b16 %v383, %v380
  %v450 = vpack.c.b16 %v384, %v381
  %v451 = vpack.c.b16 %v385, %v382
  %v566 = vunpack.c.l.b16 %v114
  %v567 = vunpack.c.l.b16 %v115
  %v568 = vunpack.c.l.b16 %v116
  %v569 = vunpack.c.l.b16 %v117
  %v570 = vunpack.c.l.b16 %v118
  %v571 = vunpack.c.l.b16 %v119
  %v572 = vunpack.c.l.b16 %v120
  %v573 = vunpack.c.l.b16 %v121
  %v574 = vunpack.c.l.b16 %v122
  %v575 = vunpack.c.l.b16 %v123
  %v576 = vunpack.c.l.b16 %v124
  %v577 = vunpack.c.l.b16 %v125
  %v578 = vunpack.c.l.b16 %v126
  %v579 = vunpack.c.l.b16 %v127
  %v580 = vunpack.c.l.b16 %v128
  %v581 = vunpack.c.l.b16 %v129
  %v582 = vunpack.c.l.b16 %v130
  %v583 = vunpack.c.l.b16 %v131
  %v584 = vunpack.c.l.b16 %v132
  %v585 = vunpack.c.l.b16 %v133
  %v586 = vunpack.c.l.b16 %v134
  %v587 = vunpack.c.l.b16 %v135
  %v588 = vunpack.c.l.b16 %v136
  %v589 = vunpack.c.l.b16 %v137
  %v590 = vunpack.c.l.b16 %v138
  %v591 = vunpack.c.l.b16 %v139
  %v592 = vunpack.c.l.b16 %v140
  %v593 = vunpack.c.l.b16 %v141
  %v594 = vunpack.c.l.b16 %v142
  %v595 = vunpack.c.l.b16 %v143
  %v596 = vunpack.c.l.b16 %v144
  %v597 = vunpack.c.l.b16 %v145
  %v598 = vunpack.c.l.b16 %v146
  %v599 = vunpack.c.l.b16 %v147
  %v600 = vunpack.c.l.b16 %v148
  %v601 = vunpack.c.l.b16 %v149
  %v602 = vunpack.c.l.b16 %v150
  %v603 = vunpack.c.l.b16 %v151
  %v604 = vunpack.c.l.b16 %v152
  %v605 = vunpack.c.l.b16 %v153
  %v606 = vunpack.c.l.b16 %v154
  %v607 = vunpack.c.l.b16 %v155
  %v608 = vunpack.c.l.b16 %v156
  %v609 = vunpack.c.l.b16 %v157
  %v610 = vunpack.c.l.b16 %v158
  %v611 = vunpack.c.l.b16 %v159
  %v612 = vunpack.c.l.b16 %v160
  %v613 = vunpack.c.l.b16 %v161
  %v614 = vpack.c.b16 %v567, %v566
  %v615 = vpack.c.b16 %v569, %v568
  %v616 = vpack.c.b16 %v571, %v570
  %v617 = vpack.c.b16 %v573, %v572
  %v618 = vpack.c.b16 %v575, %v574
  %v619 = vpack.c.b16 %v577, %v576
  %v620 = vpack.c.b16 %v579, %v578
  %v621 = vpack.c.b16 %v581, %v580
  %v622 = vpack.c.b16 %v583, %v582
  %v623 = vpack.c.b16 %v585, %v584
  %v624 = vpack.c.b16 %v587, %v586
  %v625 = vpack.c.b16 %v589, %v588
  %v626 = vpack.c.b16 %v591, %v590
  %v627 = vpack.c.b16 %v593, %v592
  %v628 = vpack.c.b16 %v595, %v594
  %v629 = vpack.c.b16 %v597, %v596
  %v630 = vpack.c.b16 %v599, %v598
  %v631 = vpack.c.b16 %v601, %v600
  %v632 = vpack.c.b16 %v603, %v602
  %v633 = vpack.c.b16 %v605, %v604
  %v634 = vpack.c.b16 %v607, %v606
  %v635 = vpack.c.b16 %v609, %v608
  %v636 = vpack.c.b16 %v611, %v610
  %v637 = vpack.c.b16 %v613, %v612
  %662 = vmatpush.bf16.msra.mxu0 %v621
  %663 = vmatpush.bf16.msra.mxu0 %v620
  %664 = vmatpush.bf16.msra.mxu0 %v619
  %665 = vmatpush.bf16.msra.mxu0 %v618
  %666 = vmatpush.bf16.msra.mxu0 %v617
  %667 = vmatpush.bf16.msra.mxu0 %v616
  %668 = vmatpush.bf16.msra.mxu0 %v615
  %669 = vmatpush.bf16.msra.mxu0 %v614
  %670 = vmatmul.bf16.gmra.mxu0 %v386
  %v671 = vpop.f32.mrf.mxu0
  %v672 = vadd.f32 %v164, %v671
  %v673 = vpop.f32.mrf.mxu0
  %v674 = vadd.f32 %v164, %v673
  %675 = vmatmul.bf16.gmra.mxu0 %v389
  %v676 = vpop.f32.mrf.mxu0
  %v677 = vadd.f32 %v164, %v676
  %v678 = vpop.f32.mrf.mxu0
  %v679 = vadd.f32 %v164, %v678
  %680 = vmatmul.bf16.gmra.mxu0 %v392
  %v681 = vpop.f32.mrf.mxu0
  %v682 = vadd.f32 %v164, %v681
  %v683 = vpop.f32.mrf.mxu0
  %v684 = vadd.f32 %v164, %v683
  %685 = vmatmul.bf16.gmra.mxu0 %v395
  %v686 = vpop.f32.mrf.mxu0
  %v687 = vadd.f32 %v164, %v686
  %v688 = vpop.f32.mrf.mxu0
  %v689 = vadd.f32 %v164, %v688
  %690 = vmatmul.bf16.gmra.mxu0 %v398
  %v691 = vpop.f32.mrf.mxu0
  %v692 = vadd.f32 %v164, %v691
  %v693 = vpop.f32.mrf.mxu0
  %v694 = vadd.f32 %v164, %v693
  %695 = vmatmul.bf16.gmra.mxu0 %v401
  %v696 = vpop.f32.mrf.mxu0
  %v697 = vadd.f32 %v164, %v696
  %v698 = vpop.f32.mrf.mxu0
  %v699 = vadd.f32 %v164, %v698
  %700 = vmatmul.bf16.gmra.mxu0 %v404
  %v701 = vpop.f32.mrf.mxu0
  %v702 = vadd.f32 %v164, %v701
  %v703 = vpop.f32.mrf.mxu0
  %v704 = vadd.f32 %v164, %v703
  %705 = vmatmul.bf16.gmra.mxu0 %v407
  %v706 = vpop.f32.mrf.mxu0
  %v707 = vadd.f32 %v164, %v706
  %v708 = vpop.f32.mrf.mxu0
  %v709 = vadd.f32 %v164, %v708
  %710 = vmatmul.bf16.gmra.mxu0 %v410
  %v711 = vpop.f32.mrf.mxu0
  %v712 = vadd.f32 %v164, %v711
  %v713 = vpop.f32.mrf.mxu0
  %v714 = vadd.f32 %v164, %v713
  %715 = vmatmul.bf16.gmra.mxu0 %v413
  %v716 = vpop.f32.mrf.mxu0
  %v717 = vadd.f32 %v164, %v716
  %v718 = vpop.f32.mrf.mxu0
  %v719 = vadd.f32 %v164, %v718
  %720 = vmatmul.bf16.gmra.mxu0 %v416
  %v721 = vpop.f32.mrf.mxu0
  %v722 = vadd.f32 %v164, %v721
  %v723 = vpop.f32.mrf.mxu0
  %v724 = vadd.f32 %v164, %v723
  %725 = vmatmul.bf16.gmra.mxu0 %v419
  %v726 = vpop.f32.mrf.mxu0
  %v727 = vadd.f32 %v164, %v726
  %v728 = vpop.f32.mrf.mxu0
  %v729 = vadd.f32 %v164, %v728
  %730 = vmatmul.bf16.gmra.mxu0 %v422
  %v731 = vpop.f32.mrf.mxu0
  %v732 = vadd.f32 %v164, %v731
  %v733 = vpop.f32.mrf.mxu0
  %v734 = vadd.f32 %v164, %v733
  %735 = vmatmul.bf16.gmra.mxu0 %v425
  %v736 = vpop.f32.mrf.mxu0
  %v737 = vadd.f32 %v164, %v736
  %v738 = vpop.f32.mrf.mxu0
  %v739 = vadd.f32 %v164, %v738
  %740 = vmatmul.bf16.gmra.mxu0 %v428
  %v741 = vpop.f32.mrf.mxu0
  %v742 = vadd.f32 %v164, %v741
  %v743 = vpop.f32.mrf.mxu0
  %v744 = vadd.f32 %v164, %v743
  %745 = vmatmul.bf16.gmra.mxu0 %v431
  %v746 = vpop.f32.mrf.mxu0
  %v747 = vadd.f32 %v164, %v746
  %v748 = vpop.f32.mrf.mxu0
  %v749 = vadd.f32 %v164, %v748
  %750 = vmatmul.bf16.gmra.mxu0 %v434
  %v751 = vpop.f32.mrf.mxu0
  %v752 = vadd.f32 %v164, %v751
  %v753 = vpop.f32.mrf.mxu0
  %v754 = vadd.f32 %v164, %v753
  %755 = vmatmul.bf16.gmra.mxu0 %v437
  %v756 = vpop.f32.mrf.mxu0
  %v757 = vadd.f32 %v164, %v756
  %v758 = vpop.f32.mrf.mxu0
  %v759 = vadd.f32 %v164, %v758
  %760 = vmatmul.bf16.gmra.mxu0 %v440
  %v761 = vpop.f32.mrf.mxu0
  %v762 = vadd.f32 %v164, %v761
  %v763 = vpop.f32.mrf.mxu0
  %v764 = vadd.f32 %v164, %v763
  %765 = vmatmul.bf16.gmra.mxu0 %v443
  %v766 = vpop.f32.mrf.mxu0
  %v767 = vadd.f32 %v164, %v766
  %v768 = vpop.f32.mrf.mxu0
  %v769 = vadd.f32 %v164, %v768
  %770 = vmatmul.bf16.gmra.mxu0 %v446
  %v771 = vpop.f32.mrf.mxu0
  %v772 = vadd.f32 %v164, %v771
  %v773 = vpop.f32.mrf.mxu0
  %v774 = vadd.f32 %v164, %v773
  %775 = vmatmul.bf16.gmra.mxu0 %v449
  %v776 = vpop.f32.mrf.mxu0
  %v777 = vadd.f32 %v164, %v776
  %v778 = vpop.f32.mrf.mxu0
  %v779 = vadd.f32 %v164, %v778
  %780 = vdwg.mxu0
  %781 = vmatpush.bf16.msra.mxu0 %v629
  %782 = vmatpush.bf16.msra.mxu0 %v628
  %783 = vmatpush.bf16.msra.mxu0 %v627
  %784 = vmatpush.bf16.msra.mxu0 %v626
  %785 = vmatpush.bf16.msra.mxu0 %v625
  %786 = vmatpush.bf16.msra.mxu0 %v624
  %787 = vmatpush.bf16.msra.mxu0 %v623
  %788 = vmatpush.bf16.msra.mxu0 %v622
  %789 = vmatmul.bf16.gmra.mxu0 %v387
  %v790 = vpop.f32.mrf.mxu0
  %v791 = vadd.f32 %v672, %v790
  %v792 = vpop.f32.mrf.mxu0
  %v793 = vadd.f32 %v674, %v792
  %794 = vmatmul.bf16.gmra.mxu0 %v390
  %v795 = vpop.f32.mrf.mxu0
  %v796 = vadd.f32 %v677, %v795
  %v797 = vpop.f32.mrf.mxu0
  %v798 = vadd.f32 %v679, %v797
  %799 = vmatmul.bf16.gmra.mxu0 %v393
  %v800 = vpop.f32.mrf.mxu0
  %v801 = vadd.f32 %v682, %v800
  %v802 = vpop.f32.mrf.mxu0
  %v803 = vadd.f32 %v684, %v802
  %804 = vmatmul.bf16.gmra.mxu0 %v396
  %v805 = vpop.f32.mrf.mxu0
  %v806 = vadd.f32 %v687, %v805
  %v807 = vpop.f32.mrf.mxu0
  %v808 = vadd.f32 %v689, %v807
  %809 = vmatmul.bf16.gmra.mxu0 %v399
  %v810 = vpop.f32.mrf.mxu0
  %v811 = vadd.f32 %v692, %v810
  %v812 = vpop.f32.mrf.mxu0
  %v813 = vadd.f32 %v694, %v812
  %814 = vmatmul.bf16.gmra.mxu0 %v402
  %v815 = vpop.f32.mrf.mxu0
  %v816 = vadd.f32 %v697, %v815
  %v817 = vpop.f32.mrf.mxu0
  %v818 = vadd.f32 %v699, %v817
  %819 = vmatmul.bf16.gmra.mxu0 %v405
  %v820 = vpop.f32.mrf.mxu0
  %v821 = vadd.f32 %v702, %v820
  %v822 = vpop.f32.mrf.mxu0
  %v823 = vadd.f32 %v704, %v822
  %824 = vmatmul.bf16.gmra.mxu0 %v408
  %v825 = vpop.f32.mrf.mxu0
  %v826 = vadd.f32 %v707, %v825
  %v827 = vpop.f32.mrf.mxu0
  %v828 = vadd.f32 %v709, %v827
  %829 = vmatmul.bf16.gmra.mxu0 %v411
  %v830 = vpop.f32.mrf.mxu0
  %v831 = vadd.f32 %v712, %v830
  %v832 = vpop.f32.mrf.mxu0
  %v833 = vadd.f32 %v714, %v832
  %834 = vmatmul.bf16.gmra.mxu0 %v414
  %v835 = vpop.f32.mrf.mxu0
  %v836 = vadd.f32 %v717, %v835
  %v837 = vpop.f32.mrf.mxu0
  %v838 = vadd.f32 %v719, %v837
  %839 = vmatmul.bf16.gmra.mxu0 %v417
  %v840 = vpop.f32.mrf.mxu0
  %v841 = vadd.f32 %v722, %v840
  %v842 = vpop.f32.mrf.mxu0
  %v843 = vadd.f32 %v724, %v842
  %844 = vmatmul.bf16.gmra.mxu0 %v420
  %v845 = vpop.f32.mrf.mxu0
  %v846 = vadd.f32 %v727, %v845
  %v847 = vpop.f32.mrf.mxu0
  %v848 = vadd.f32 %v729, %v847
  %849 = vmatmul.bf16.gmra.mxu0 %v423
  %v850 = vpop.f32.mrf.mxu0
  %v851 = vadd.f32 %v732, %v850
  %v852 = vpop.f32.mrf.mxu0
  %v853 = vadd.f32 %v734, %v852
  %854 = vmatmul.bf16.gmra.mxu0 %v426
  %v855 = vpop.f32.mrf.mxu0
  %v856 = vadd.f32 %v737, %v855
  %v857 = vpop.f32.mrf.mxu0
  %v858 = vadd.f32 %v739, %v857
  %859 = vmatmul.bf16.gmra.mxu0 %v429
  %v860 = vpop.f32.mrf.mxu0
  %v861 = vadd.f32 %v742, %v860
  %v862 = vpop.f32.mrf.mxu0
  %v863 = vadd.f32 %v744, %v862
  %864 = vmatmul.bf16.gmra.mxu0 %v432
  %v865 = vpop.f32.mrf.mxu0
  %v866 = vadd.f32 %v747, %v865
  %v867 = vpop.f32.mrf.mxu0
  %v868 = vadd.f32 %v749, %v867
  %869 = vmatmul.bf16.gmra.mxu0 %v435
  %v870 = vpop.f32.mrf.mxu0
  %v871 = vadd.f32 %v752, %v870
  %v872 = vpop.f32.mrf.mxu0
  %v873 = vadd.f32 %v754, %v872
  %874 = vmatmul.bf16.gmra.mxu0 %v438
  %v875 = vpop.f32.mrf.mxu0
  %v876 = vadd.f32 %v757, %v875
  %v877 = vpop.f32.mrf.mxu0
  %v878 = vadd.f32 %v759, %v877
  %879 = vmatmul.bf16.gmra.mxu0 %v441
  %v880 = vpop.f32.mrf.mxu0
  %v881 = vadd.f32 %v762, %v880
  %v882 = vpop.f32.mrf.mxu0
  %v883 = vadd.f32 %v764, %v882
  %884 = vmatmul.bf16.gmra.mxu0 %v444
  %v885 = vpop.f32.mrf.mxu0
  %v886 = vadd.f32 %v767, %v885
  %v887 = vpop.f32.mrf.mxu0
  %v888 = vadd.f32 %v769, %v887
  %889 = vmatmul.bf16.gmra.mxu0 %v447
  %v890 = vpop.f32.mrf.mxu0
  %v891 = vadd.f32 %v772, %v890
  %v892 = vpop.f32.mrf.mxu0
  %v893 = vadd.f32 %v774, %v892
  %894 = vmatmul.bf16.gmra.mxu0 %v450
  %v895 = vpop.f32.mrf.mxu0
  %v896 = vadd.f32 %v777, %v895
  %v897 = vpop.f32.mrf.mxu0
  %v898 = vadd.f32 %v779, %v897
  %899 = vdwg.mxu0
  %900 = vmatpush.bf16.msra.mxu0 %v637
  %901 = vmatpush.bf16.msra.mxu0 %v636
  %902 = vmatpush.bf16.msra.mxu0 %v635
  %903 = vmatpush.bf16.msra.mxu0 %v634
  %904 = vmatpush.bf16.msra.mxu0 %v633
  %905 = vmatpush.bf16.msra.mxu0 %v632
  %906 = vmatpush.bf16.msra.mxu0 %v631
  %907 = vmatpush.bf16.msra.mxu0 %v630
  %908 = vmatmul.bf16.gmra.mxu0 %v388
  %v909 = vpop.f32.mrf.mxu0
  %v910 = vadd.f32 %v791, %v909
  %v911 = vpop.f32.mrf.mxu0
  %v912 = vadd.f32 %v793, %v911
  %913 = vmatmul.bf16.gmra.mxu0 %v391
  %v914 = vpop.f32.mrf.mxu0
  %v915 = vadd.f32 %v796, %v914
  %v916 = vpop.f32.mrf.mxu0
  %v917 = vadd.f32 %v798, %v916
  %918 = vmatmul.bf16.gmra.mxu0 %v394
  %v919 = vpop.f32.mrf.mxu0
  %v920 = vadd.f32 %v801, %v919
  %v921 = vpop.f32.mrf.mxu0
  %v922 = vadd.f32 %v803, %v921
  %923 = vmatmul.bf16.gmra.mxu0 %v397
  %v924 = vpop.f32.mrf.mxu0
  %v925 = vadd.f32 %v806, %v924
  %v926 = vpop.f32.mrf.mxu0
  %v927 = vadd.f32 %v808, %v926
  %928 = vmatmul.bf16.gmra.mxu0 %v400
  %v929 = vpop.f32.mrf.mxu0
  %v930 = vadd.f32 %v811, %v929
  %v931 = vpop.f32.mrf.mxu0
  %v932 = vadd.f32 %v813, %v931
  %933 = vmatmul.bf16.gmra.mxu0 %v403
  %v934 = vpop.f32.mrf.mxu0
  %v935 = vadd.f32 %v816, %v934
  %v936 = vpop.f32.mrf.mxu0
  %v937 = vadd.f32 %v818, %v936
  %938 = vmatmul.bf16.gmra.mxu0 %v406
  %v939 = vpop.f32.mrf.mxu0
  %v940 = vadd.f32 %v821, %v939
  %v941 = vpop.f32.mrf.mxu0
  %v942 = vadd.f32 %v823, %v941
  %943 = vmatmul.bf16.gmra.mxu0 %v409
  %v944 = vpop.f32.mrf.mxu0
  %v945 = vadd.f32 %v826, %v944
  %v946 = vpop.f32.mrf.mxu0
  %v947 = vadd.f32 %v828, %v946
  %948 = vmatmul.bf16.gmra.mxu0 %v412
  %v949 = vpop.f32.mrf.mxu0
  %v950 = vadd.f32 %v831, %v949
  %v951 = vpop.f32.mrf.mxu0
  %v952 = vadd.f32 %v833, %v951
  %953 = vmatmul.bf16.gmra.mxu0 %v415
  %v954 = vpop.f32.mrf.mxu0
  %v955 = vadd.f32 %v836, %v954
  %v956 = vpop.f32.mrf.mxu0
  %v957 = vadd.f32 %v838, %v956
  %958 = vmatmul.bf16.gmra.mxu0 %v418
  %v959 = vpop.f32.mrf.mxu0
  %v960 = vadd.f32 %v841, %v959
  %v961 = vpop.f32.mrf.mxu0
  %v962 = vadd.f32 %v843, %v961
  %963 = vmatmul.bf16.gmra.mxu0 %v421
  %v964 = vpop.f32.mrf.mxu0
  %v965 = vadd.f32 %v846, %v964
  %v966 = vpop.f32.mrf.mxu0
  %v967 = vadd.f32 %v848, %v966
  %968 = vmatmul.bf16.gmra.mxu0 %v424
  %v969 = vpop.f32.mrf.mxu0
  %v970 = vadd.f32 %v851, %v969
  %v971 = vpop.f32.mrf.mxu0
  %v972 = vadd.f32 %v853, %v971
  %973 = vmatmul.bf16.gmra.mxu0 %v427
  %v974 = vpop.f32.mrf.mxu0
  %v975 = vadd.f32 %v856, %v974
  %v976 = vpop.f32.mrf.mxu0
  %v977 = vadd.f32 %v858, %v976
  %978 = vmatmul.bf16.gmra.mxu0 %v430
  %v979 = vpop.f32.mrf.mxu0
  %v980 = vadd.f32 %v861, %v979
  %v981 = vpop.f32.mrf.mxu0
  %v982 = vadd.f32 %v863, %v981
  %983 = vmatmul.bf16.gmra.mxu0 %v433
  %v984 = vpop.f32.mrf.mxu0
  %v985 = vadd.f32 %v866, %v984
  %v986 = vpop.f32.mrf.mxu0
  %v987 = vadd.f32 %v868, %v986
  %988 = vmatmul.bf16.gmra.mxu0 %v436
  %v989 = vpop.f32.mrf.mxu0
  %v990 = vadd.f32 %v871, %v989
  %v991 = vpop.f32.mrf.mxu0
  %v992 = vadd.f32 %v873, %v991
  %993 = vmatmul.bf16.gmra.mxu0 %v439
  %v994 = vpop.f32.mrf.mxu0
  %v995 = vadd.f32 %v876, %v994
  %v996 = vpop.f32.mrf.mxu0
  %v997 = vadd.f32 %v878, %v996
  %998 = vmatmul.bf16.gmra.mxu0 %v442
  %v999 = vpop.f32.mrf.mxu0
  %v1000 = vadd.f32 %v881, %v999
  %v1001 = vpop.f32.mrf.mxu0
  %v1002 = vadd.f32 %v883, %v1001
  %1003 = vmatmul.bf16.gmra.mxu0 %v445
  %v1004 = vpop.f32.mrf.mxu0
  %v1005 = vadd.f32 %v886, %v1004
  %v1006 = vpop.f32.mrf.mxu0
  %v1007 = vadd.f32 %v888, %v1006
  %1008 = vmatmul.bf16.gmra.mxu0 %v448
  %v1009 = vpop.f32.mrf.mxu0
  %v1010 = vadd.f32 %v891, %v1009
  %v1011 = vpop.f32.mrf.mxu0
  %v1012 = vadd.f32 %v893, %v1011
  %1013 = vmatmul.bf16.gmra.mxu0 %v451
  %v1014 = vpop.f32.mrf.mxu0
  %v1015 = vadd.f32 %v896, %v1014
  %v1016 = vpop.f32.mrf.mxu0
  %v1017 = vadd.f32 %v898, %v1016
  %1018 = vdwg.mxu0
  %s1019 = smul.u32 0, 352
  %s1020 = scalar_lea.vmem [#allocation2], %s1019
  %1021 = vst [vmem:[%s1020] sm:$0xff] %v910
  %1022 = vst [vmem:[%s1020 + $0x8] sm:$0xff] %v912
  %1023 = vst [vmem:[%s1020 + $0x10] sm:$0xff] %v915
  %1024 = vst [vmem:[%s1020 + $0x18] sm:$0xff] %v917
  %1025 = vst [vmem:[%s1020 + $0x20] sm:$0xff] %v920
  %1026 = vst [vmem:[%s1020 + $0x28] sm:$0xff] %v922
  %1027 = vst [vmem:[%s1020 + $0x30] sm:$0xff] %v925
  %1028 = vst [vmem:[%s1020 + $0x38] sm:$0xff] %v927
  %1029 = vst [vmem:[%s1020 + $0x40] sm:$0xff] %v930
  %1030 = vst [vmem:[%s1020 + $0x48] sm:$0xff] %v932
  %1031 = vst [vmem:[%s1020 + $0x50] sm:$0xff] %v935
  %1032 = vst [vmem:[%s1020 + $0x58] sm:$0xff] %v937
  %1033 = vst [vmem:[%s1020 + $0x60] sm:$0xff] %v940
  %1034 = vst [vmem:[%s1020 + $0x68] sm:$0xff] %v942
  %1035 = vst [vmem:[%s1020 + $0x70] sm:$0xff] %v945
  %1036 = vst [vmem:[%s1020 + $0x78] sm:$0xff] %v947
  %1037 = vst [vmem:[%s1020 + $0x80] sm:$0xff] %v950
  %1038 = vst [vmem:[%s1020 + $0x88] sm:$0xff] %v952
  %1039 = vst [vmem:[%s1020 + $0x90] sm:$0xff] %v955
  %1040 = vst [vmem:[%s1020 + $0x98] sm:$0xff] %v957
  %1041 = vst [vmem:[%s1020 + $0xa0] sm:$0xff] %v960
  %1042 = vst [vmem:[%s1020 + $0xa8] sm:$0xff] %v962
  %1043 = vst [vmem:[%s1020 + $0xb0] sm:$0xff] %v965
  %1044 = vst [vmem:[%s1020 + $0xb8] sm:$0xff] %v967
  %1045 = vst [vmem:[%s1020 + $0xc0] sm:$0xff] %v970
  %1046 = vst [vmem:[%s1020 + $0xc8] sm:$0xff] %v972
  %1047 = vst [vmem:[%s1020 + $0xd0] sm:$0xff] %v975
  %1048 = vst [vmem:[%s1020 + $0xd8] sm:$0xff] %v977
  %1049 = vst [vmem:[%s1020 + $0xe0] sm:$0xff] %v980
  %1050 = vst [vmem:[%s1020 + $0xe8] sm:$0xff] %v982
  %1051 = vst [vmem:[%s1020 + $0xf0] sm:$0xff] %v985
  %1052 = vst [vmem:[%s1020 + $0xf8] sm:$0xff] %v987
  %1053 = vst [vmem:[%s1020 + $0x100] sm:$0xff] %v990
  %1054 = vst [vmem:[%s1020 + $0x108] sm:$0xff] %v992
  %1055 = vst [vmem:[%s1020 + $0x110] sm:$0xff] %v995
  %1056 = vst [vmem:[%s1020 + $0x118] sm:$0xff] %v997
  %1057 = vst [vmem:[%s1020 + $0x120] sm:$0xff] %v1000
  %1058 = vst [vmem:[%s1020 + $0x128] sm:$0xff] %v1002
  %1059 = vst [vmem:[%s1020 + $0x130] sm:$0xff] %v1005
  %1060 = vst [vmem:[%s1020 + $0x138] sm:$0xff] %v1007
  %1061 = vst [vmem:[%s1020 + $0x140] sm:$0xff] %v1010
  %1062 = vst [vmem:[%s1020 + $0x148] sm:$0xff] %v1012
  %1063 = vst [vmem:[%s1020 + $0x150] sm:$0xff] %v1015
  %1064 = vst [vmem:[%s1020 + $0x158] sm:$0xff] %v1017
  %v1065 = vlaneseq
  %v1066 = vshrl.u32 %v1065, 7
  %v1067 = vadd.s32 %v1066, 8
  %v1068 = vadd.s32 %v1066, 16
  %v1069 = vadd.s32 %v1066, 24
  %v1070 = vadd.s32 %v1066, 32
  %v1071 = vadd.s32 %v1066, 40
  %v1072 = vadd.s32 %v1066, 48
  %v1073 = vadd.s32 %v1066, 56
  %v1074 = vadd.s32 %v1066, 64
  %v1075 = vadd.s32 %v1066, 72
  %v1076 = vadd.s32 %v1066, 80
  %v1077 = vadd.s32 %v1066, 88
  %v1078 = vadd.s32 %v1066, 96
  %v1079 = vadd.s32 %v1066, 104
  %v1080 = vadd.s32 %v1066, 112
  %v1081 = vadd.s32 %v1066, 120
  %v1082 = vadd.s32 %v1066, 128
  %v1083 = vadd.s32 %v1066, 136
  %v1084 = vadd.s32 %v1066, 144
  %v1085 = vadd.s32 %v1066, 152
  %v1086 = vadd.s32 %v1066, 160
  %v1087 = vadd.s32 %v1066, 168
  %v1088 = vadd.s32 %v1066, 176
  %v1089 = vadd.s32 %v1066, 184
  %v1090 = vadd.s32 %v1066, 192
  %v1091 = vadd.s32 %v1066, 200
  %v1092 = vadd.s32 %v1066, 208
  %v1093 = vadd.s32 %v1066, 216
  %v1094 = vadd.s32 %v1066, 224
  %v1095 = vadd.s32 %v1066, 232
  %v1096 = vadd.s32 %v1066, 240
  %v1097 = vadd.s32 %v1066, 248
  %v1098 = vadd.s32 %v1066, 256
  %v1099 = vadd.s32 %v1066, 264
  %v1100 = vadd.s32 %v1066, 272
  %v1101 = vadd.s32 %v1066, 280
  %v1102 = vadd.s32 %v1066, 288
  %v1103 = vadd.s32 %v1066, 296
  %v1104 = vadd.s32 %v1066, 304
  %v1105 = vadd.s32 %v1066, 312
  %v1106 = vadd.s32 %v1066, 320
  %v1107 = vadd.s32 %v1066, 328
  %v1108 = vadd.s32 %v1066, 336
  %v1109 = vadd.s32 %v1066, 344
  %v1110 = vstv %s1019
  %v1111 = vadd.s32 %v1110, %v1066
  %v1112 = vadd.s32 %v1110, %v1067
  %v1113 = vadd.s32 %v1110, %v1068
  %v1114 = vadd.s32 %v1110, %v1069
  %v1115 = vadd.s32 %v1110, %v1070
  %v1116 = vadd.s32 %v1110, %v1071
  %v1117 = vadd.s32 %v1110, %v1072
  %v1118 = vadd.s32 %v1110, %v1073
  %v1119 = vadd.s32 %v1110, %v1074
  %v1120 = vadd.s32 %v1110, %v1075
  %v1121 = vadd.s32 %v1110, %v1076
  %v1122 = vadd.s32 %v1110, %v1077
  %v1123 = vadd.s32 %v1110, %v1078
  %v1124 = vadd.s32 %v1110, %v1079
  %v1125 = vadd.s32 %v1110, %v1080
  %v1126 = vadd.s32 %v1110, %v1081
  %v1127 = vadd.s32 %v1110, %v1082
  %v1128 = vadd.s32 %v1110, %v1083
  %v1129 = vadd.s32 %v1110, %v1084
  %v1130 = vadd.s32 %v1110, %v1085
  %v1131 = vadd.s32 %v1110, %v1086
  %v1132 = vadd.s32 %v1110, %v1087
  %v1133 = vadd.s32 %v1110, %v1088
  %v1134 = vadd.s32 %v1110, %v1089
  %v1135 = vadd.s32 %v1110, %v1090
  %v1136 = vadd.s32 %v1110, %v1091
  %v1137 = vadd.s32 %v1110, %v1092
  %v1138 = vadd.s32 %v1110, %v1093
  %v1139 = vadd.s32 %v1110, %v1094
  %v1140 = vadd.s32 %v1110, %v1095
  %v1141 = vadd.s32 %v1110, %v1096
  %v1142 = vadd.s32 %v1110, %v1097
  %v1143 = vadd.s32 %v1110, %v1098
  %v1144 = vadd.s32 %v1110, %v1099
  %v1145 = vadd.s32 %v1110, %v1100
  %v1146 = vadd.s32 %v1110, %v1101
  %v1147 = vadd.s32 %v1110, %v1102
  %v1148 = vadd.s32 %v1110, %v1103
  %v1149 = vadd.s32 %v1110, %v1104
  %v1150 = vadd.s32 %v1110, %v1105
  %v1151 = vadd.s32 %v1110, %v1106
  %v1152 = vadd.s32 %v1110, %v1107
  %v1153 = vadd.s32 %v1110, %v1108
  %v1154 = vadd.s32 %v1110, %v1109
  %vm1155 = vcmp.lt.s32.totalorder %v1111, 338
  %vm1156 = vcmp.lt.s32.totalorder %v1112, 338
  %vm1157 = vcmp.lt.s32.totalorder %v1113, 338
  %vm1158 = vcmp.lt.s32.totalorder %v1114, 338
  %vm1159 = vcmp.lt.s32.totalorder %v1115, 338
  %vm1160 = vcmp.lt.s32.totalorder %v1116, 338
  %vm1161 = vcmp.lt.s32.totalorder %v1117, 338
  %vm1162 = vcmp.lt.s32.totalorder %v1118, 338
  %vm1163 = vcmp.lt.s32.totalorder %v1119, 338
  %vm1164 = vcmp.lt.s32.totalorder %v1120, 338
  %vm1165 = vcmp.lt.s32.totalorder %v1121, 338
  %vm1166 = vcmp.lt.s32.totalorder %v1122, 338
  %vm1167 = vcmp.lt.s32.totalorder %v1123, 338
  %vm1168 = vcmp.lt.s32.totalorder %v1124, 338
  %vm1169 = vcmp.lt.s32.totalorder %v1125, 338
  %vm1170 = vcmp.lt.s32.totalorder %v1126, 338
  %vm1171 = vcmp.lt.s32.totalorder %v1127, 338
  %vm1172 = vcmp.lt.s32.totalorder %v1128, 338
  %vm1173 = vcmp.lt.s32.totalorder %v1129, 338
  %vm1174 = vcmp.lt.s32.totalorder %v1130, 338
  %vm1175 = vcmp.lt.s32.totalorder %v1131, 338
  %vm1176 = vcmp.lt.s32.totalorder %v1132, 338
  %vm1177 = vcmp.lt.s32.totalorder %v1133, 338
  %vm1178 = vcmp.lt.s32.totalorder %v1134, 338
  %vm1179 = vcmp.lt.s32.totalorder %v1135, 338
  %vm1180 = vcmp.lt.s32.totalorder %v1136, 338
  %vm1181 = vcmp.lt.s32.totalorder %v1137, 338
  %vm1182 = vcmp.lt.s32.totalorder %v1138, 338
  %vm1183 = vcmp.lt.s32.totalorder %v1139, 338
  %vm1184 = vcmp.lt.s32.totalorder %v1140, 338
  %vm1185 = vcmp.lt.s32.totalorder %v1141, 338
  %vm1186 = vcmp.lt.s32.totalorder %v1142, 338
  %vm1187 = vcmp.lt.s32.totalorder %v1143, 338
  %vm1188 = vcmp.lt.s32.totalorder %v1144, 338
  %vm1189 = vcmp.lt.s32.totalorder %v1145, 338
  %vm1190 = vcmp.lt.s32.totalorder %v1146, 338
  %vm1191 = vcmp.lt.s32.totalorder %v1147, 338
  %vm1192 = vcmp.lt.s32.totalorder %v1148, 338
  %vm1193 = vcmp.lt.s32.totalorder %v1149, 338
  %vm1194 = vcmp.lt.s32.totalorder %v1150, 338
  %vm1195 = vcmp.lt.s32.totalorder %v1151, 338
  %vm1196 = vcmp.lt.s32.totalorder %v1152, 338
  %vm1197 = vcmp.lt.s32.totalorder %v1153, 338
  %vm1198 = vcmp.lt.s32.totalorder %v1154, 338
  %v1199 = vsel %vm1155, 1, 0
  %v1200 = vsel %vm1156, 1, 0
  %v1201 = vsel %vm1157, 1, 0
  %v1202 = vsel %vm1158, 1, 0
  %v1203 = vsel %vm1159, 1, 0
  %v1204 = vsel %vm1160, 1, 0
  %v1205 = vsel %vm1161, 1, 0
  %v1206 = vsel %vm1162, 1, 0
  %v1207 = vsel %vm1163, 1, 0
  %v1208 = vsel %vm1164, 1, 0
  %v1209 = vsel %vm1165, 1, 0
  %v1210 = vsel %vm1166, 1, 0
  %v1211 = vsel %vm1167, 1, 0
  %v1212 = vsel %vm1168, 1, 0
  %v1213 = vsel %vm1169, 1, 0
  %v1214 = vsel %vm1170, 1, 0
  %v1215 = vsel %vm1171, 1, 0
  %v1216 = vsel %vm1172, 1, 0
  %v1217 = vsel %vm1173, 1, 0
  %v1218 = vsel %vm1174, 1, 0
  %v1219 = vsel %vm1175, 1, 0
  %v1220 = vsel %vm1176, 1, 0
  %v1221 = vsel %vm1177, 1, 0
  %v1222 = vsel %vm1178, 1, 0
  %v1223 = vsel %vm1179, 1, 0
  %v1224 = vsel %vm1180, 1, 0
  %v1225 = vsel %vm1181, 1, 0
  %v1226 = vsel %vm1182, 1, 0
  %v1227 = vsel %vm1183, 1, 0
  %v1228 = vsel %vm1184, 1, 0
  %v1229 = vsel %vm1185, 1, 0
  %v1230 = vsel %vm1186, 1, 0
  %v1231 = vsel %vm1187, 1, 0
  %v1232 = vsel %vm1188, 1, 0
  %v1233 = vsel %vm1189, 1, 0
  %v1234 = vsel %vm1190, 1, 0
  %v1235 = vsel %vm1191, 1, 0
  %v1236 = vsel %vm1192, 1, 0
  %v1237 = vsel %vm1193, 1, 0
  %v1238 = vsel %vm1194, 1, 0
  %v1239 = vsel %vm1195, 1, 0
  %v1240 = vsel %vm1196, 1, 0
  %v1241 = vsel %vm1197, 1, 0
  %v1242 = vsel %vm1198, 1, 0
  %vm1243 = vcmp.eq.s32.totalorder %v1199, 1
  %vm1244 = vcmp.eq.s32.totalorder %v1200, 1
  %vm1245 = vcmp.eq.s32.totalorder %v1201, 1
  %vm1246 = vcmp.eq.s32.totalorder %v1202, 1
  %vm1247 = vcmp.eq.s32.totalorder %v1203, 1
  %vm1248 = vcmp.eq.s32.totalorder %v1204, 1
  %vm1249 = vcmp.eq.s32.totalorder %v1205, 1
  %vm1250 = vcmp.eq.s32.totalorder %v1206, 1
  %vm1251 = vcmp.eq.s32.totalorder %v1207, 1
  %vm1252 = vcmp.eq.s32.totalorder %v1208, 1
  %vm1253 = vcmp.eq.s32.totalorder %v1209, 1
  %vm1254 = vcmp.eq.s32.totalorder %v1210, 1
  %vm1255 = vcmp.eq.s32.totalorder %v1211, 1
  %vm1256 = vcmp.eq.s32.totalorder %v1212, 1
  %vm1257 = vcmp.eq.s32.totalorder %v1213, 1
  %vm1258 = vcmp.eq.s32.totalorder %v1214, 1
  %vm1259 = vcmp.eq.s32.totalorder %v1215, 1
  %vm1260 = vcmp.eq.s32.totalorder %v1216, 1
  %vm1261 = vcmp.eq.s32.totalorder %v1217, 1
  %vm1262 = vcmp.eq.s32.totalorder %v1218, 1
  %vm1263 = vcmp.eq.s32.totalorder %v1219, 1
  %vm1264 = vcmp.eq.s32.totalorder %v1220, 1
  %vm1265 = vcmp.eq.s32.totalorder %v1221, 1
  %vm1266 = vcmp.eq.s32.totalorder %v1222, 1
  %vm1267 = vcmp.eq.s32.totalorder %v1223, 1
  %vm1268 = vcmp.eq.s32.totalorder %v1224, 1
  %vm1269 = vcmp.eq.s32.totalorder %v1225, 1
  %vm1270 = vcmp.eq.s32.totalorder %v1226, 1
  %vm1271 = vcmp.eq.s32.totalorder %v1227, 1
  %vm1272 = vcmp.eq.s32.totalorder %v1228, 1
  %vm1273 = vcmp.eq.s32.totalorder %v1229, 1
  %vm1274 = vcmp.eq.s32.totalorder %v1230, 1
  %vm1275 = vcmp.eq.s32.totalorder %v1231, 1
  %vm1276 = vcmp.eq.s32.totalorder %v1232, 1
  %vm1277 = vcmp.eq.s32.totalorder %v1233, 1
  %vm1278 = vcmp.eq.s32.totalorder %v1234, 1
  %vm1279 = vcmp.eq.s32.totalorder %v1235, 1
  %vm1280 = vcmp.eq.s32.totalorder %v1236, 1
  %vm1281 = vcmp.eq.s32.totalorder %v1237, 1
  %vm1282 = vcmp.eq.s32.totalorder %v1238, 1
  %vm1283 = vcmp.eq.s32.totalorder %v1239, 1
  %vm1284 = vcmp.eq.s32.totalorder %v1240, 1
  %vm1285 = vcmp.eq.s32.totalorder %v1241, 1
  %vm1286 = vcmp.eq.s32.totalorder %v1242, 1
  %v1287 = vsel %vm1243, %v910, 0.0
  %v1288 = vsel %vm1244, %v912, 0.0
  %v1289 = vsel %vm1245, %v915, 0.0
  %v1290 = vsel %vm1246, %v917, 0.0
  %v1291 = vsel %vm1247, %v920, 0.0
  %v1292 = vsel %vm1248, %v922, 0.0
  %v1293 = vsel %vm1249, %v925, 0.0
  %v1294 = vsel %vm1250, %v927, 0.0
  %v1295 = vsel %vm1251, %v930, 0.0
  %v1296 = vsel %vm1252, %v932, 0.0
  %v1297 = vsel %vm1253, %v935, 0.0
  %v1298 = vsel %vm1254, %v937, 0.0
  %v1299 = vsel %vm1255, %v940, 0.0
  %v1300 = vsel %vm1256, %v942, 0.0
  %v1301 = vsel %vm1257, %v945, 0.0
  %v1302 = vsel %vm1258, %v947, 0.0
  %v1303 = vsel %vm1259, %v950, 0.0
  %v1304 = vsel %vm1260, %v952, 0.0
  %v1305 = vsel %vm1261, %v955, 0.0
  %v1306 = vsel %vm1262, %v957, 0.0
  %v1307 = vsel %vm1263, %v960, 0.0
  %v1308 = vsel %vm1264, %v962, 0.0
  %v1309 = vsel %vm1265, %v965, 0.0
  %v1310 = vsel %vm1266, %v967, 0.0
  %v1311 = vsel %vm1267, %v970, 0.0
  %v1312 = vsel %vm1268, %v972, 0.0
  %v1313 = vsel %vm1269, %v975, 0.0
  %v1314 = vsel %vm1270, %v977, 0.0
  %v1315 = vsel %vm1271, %v980, 0.0
  %v1316 = vsel %vm1272, %v982, 0.0
  %v1317 = vsel %vm1273, %v985, 0.0
  %v1318 = vsel %vm1274, %v987, 0.0
  %v1319 = vsel %vm1275, %v990, 0.0
  %v1320 = vsel %vm1276, %v992, 0.0
  %v1321 = vsel %vm1277, %v995, 0.0
  %v1322 = vsel %vm1278, %v997, 0.0
  %v1323 = vsel %vm1279, %v1000, 0.0
  %v1324 = vsel %vm1280, %v1002, 0.0
  %v1325 = vsel %vm1281, %v1005, 0.0
  %v1326 = vsel %vm1282, %v1007, 0.0
  %v1327 = vsel %vm1283, %v1010, 0.0
  %v1328 = vsel %vm1284, %v1012, 0.0
  %v1329 = vsel %vm1285, %v1015, 0.0
  %v1330 = vsel %vm1286, %v1017, 0.0
  %v1331 = vld [vmem:[#allocation3] sm:$0x1]
  %v1332 = vadd.f32 %v1287, %v1288
  %v1333 = vadd.f32 %v1332, %v1289
  %v1334 = vadd.f32 %v1333, %v1290
  %v1335 = vadd.f32 %v1334, %v1291
  %v1336 = vadd.f32 %v1335, %v1292
  %v1337 = vadd.f32 %v1336, %v1293
  %v1338 = vadd.f32 %v1337, %v1294
  %v1339 = vadd.f32 %v1338, %v1295
  %v1340 = vadd.f32 %v1339, %v1296
  %v1341 = vadd.f32 %v1340, %v1297
  %v1342 = vadd.f32 %v1341, %v1298
  %v1343 = vadd.f32 %v1342, %v1299
  %v1344 = vadd.f32 %v1343, %v1300
  %v1345 = vadd.f32 %v1344, %v1301
  %v1346 = vadd.f32 %v1345, %v1302
  %v1347 = vadd.f32 %v1346, %v1303
  %v1348 = vadd.f32 %v1347, %v1304
  %v1349 = vadd.f32 %v1348, %v1305
  %v1350 = vadd.f32 %v1349, %v1306
  %v1351 = vadd.f32 %v1350, %v1307
  %v1352 = vadd.f32 %v1351, %v1308
  %v1353 = vadd.f32 %v1352, %v1309
  %v1354 = vadd.f32 %v1353, %v1310
  %v1355 = vadd.f32 %v1354, %v1311
  %v1356 = vadd.f32 %v1355, %v1312
  %v1357 = vadd.f32 %v1356, %v1313
  %v1358 = vadd.f32 %v1357, %v1314
  %v1359 = vadd.f32 %v1358, %v1315
  %v1360 = vadd.f32 %v1359, %v1316
  %v1361 = vadd.f32 %v1360, %v1317
  %v1362 = vadd.f32 %v1361, %v1318
  %v1363 = vadd.f32 %v1362, %v1319
  %v1364 = vadd.f32 %v1363, %v1320
  %v1365 = vadd.f32 %v1364, %v1321
  %v1366 = vadd.f32 %v1365, %v1322
  %v1367 = vadd.f32 %v1366, %v1323
  %v1368 = vadd.f32 %v1367, %v1324
  %v1369 = vadd.f32 %v1368, %v1325
  %v1370 = vadd.f32 %v1369, %v1326
  %v1371 = vadd.f32 %v1370, %v1327
  %v1372 = vadd.f32 %v1371, %v1328
  %v1373 = vadd.f32 %v1372, %v1329
  %v1374 = vadd.f32 %v1373, %v1330
  %v1375 = vrot.slane %v1374, 4
  %v1376 = vadd.f32 %v1374, %v1375
  %v1377 = vrot.slane %v1376, 2
  %v1378 = vadd.f32 %v1376, %v1377
  %v1379 = vrot.slane %v1378, 1
  %v1380 = vadd.f32 %v1378, %v1379
  %v1381 = vadd.f32 %v1331, %v1380
  %1382 = vst [vmem:[#allocation3] sm:$0x1] %v1381
  %v1383 = vld [vmem:[#allocation4] sm:$0x1]
  %v1384 = vmul.f32 %v1287, %v1287
  %v1385 = vmul.f32 %v1288, %v1288
  %v1386 = vmul.f32 %v1289, %v1289
  %v1387 = vmul.f32 %v1290, %v1290
  %v1388 = vmul.f32 %v1291, %v1291
  %v1389 = vmul.f32 %v1292, %v1292
  %v1390 = vmul.f32 %v1293, %v1293
  %v1391 = vmul.f32 %v1294, %v1294
  %v1392 = vmul.f32 %v1295, %v1295
  %v1393 = vmul.f32 %v1296, %v1296
  %v1394 = vmul.f32 %v1297, %v1297
  %v1395 = vmul.f32 %v1298, %v1298
  %v1396 = vmul.f32 %v1299, %v1299
  %v1397 = vmul.f32 %v1300, %v1300
  %v1398 = vmul.f32 %v1301, %v1301
  %v1399 = vmul.f32 %v1302, %v1302
  %v1400 = vmul.f32 %v1303, %v1303
  %v1401 = vmul.f32 %v1304, %v1304
  %v1402 = vmul.f32 %v1305, %v1305
  %v1403 = vmul.f32 %v1306, %v1306
  %v1404 = vmul.f32 %v1307, %v1307
  %v1405 = vmul.f32 %v1308, %v1308
  %v1406 = vmul.f32 %v1309, %v1309
  %v1407 = vmul.f32 %v1310, %v1310
  %v1408 = vmul.f32 %v1311, %v1311
  %v1409 = vmul.f32 %v1312, %v1312
  %v1410 = vmul.f32 %v1313, %v1313
  %v1411 = vmul.f32 %v1314, %v1314
  %v1412 = vmul.f32 %v1315, %v1315
  %v1413 = vmul.f32 %v1316, %v1316
  %v1414 = vmul.f32 %v1317, %v1317
  %v1415 = vmul.f32 %v1318, %v1318
  %v1416 = vmul.f32 %v1319, %v1319
  %v1417 = vmul.f32 %v1320, %v1320
  %v1418 = vmul.f32 %v1321, %v1321
  %v1419 = vmul.f32 %v1322, %v1322
  %v1420 = vmul.f32 %v1323, %v1323
  %v1421 = vmul.f32 %v1324, %v1324
  %v1422 = vmul.f32 %v1325, %v1325
  %v1423 = vmul.f32 %v1326, %v1326
  %v1424 = vmul.f32 %v1327, %v1327
  %v1425 = vmul.f32 %v1328, %v1328
  %v1426 = vmul.f32 %v1329, %v1329
  %v1427 = vmul.f32 %v1330, %v1330
  %v1428 = vadd.f32 %v1384, %v1385
  %v1429 = vadd.f32 %v1428, %v1386
  %v1430 = vadd.f32 %v1429, %v1387
  %v1431 = vadd.f32 %v1430, %v1388
  %v1432 = vadd.f32 %v1431, %v1389
  %v1433 = vadd.f32 %v1432, %v1390
  %v1434 = vadd.f32 %v1433, %v1391
  %v1435 = vadd.f32 %v1434, %v1392
  %v1436 = vadd.f32 %v1435, %v1393
  %v1437 = vadd.f32 %v1436, %v1394
  %v1438 = vadd.f32 %v1437, %v1395
  %v1439 = vadd.f32 %v1438, %v1396
  %v1440 = vadd.f32 %v1439, %v1397
  %v1441 = vadd.f32 %v1440, %v1398
  %v1442 = vadd.f32 %v1441, %v1399
  %v1443 = vadd.f32 %v1442, %v1400
  %v1444 = vadd.f32 %v1443, %v1401
  %v1445 = vadd.f32 %v1444, %v1402
  %v1446 = vadd.f32 %v1445, %v1403
  %v1447 = vadd.f32 %v1446, %v1404
  %v1448 = vadd.f32 %v1447, %v1405
  %v1449 = vadd.f32 %v1448, %v1406
  %v1450 = vadd.f32 %v1449, %v1407
  %v1451 = vadd.f32 %v1450, %v1408
  %v1452 = vadd.f32 %v1451, %v1409
  %v1453 = vadd.f32 %v1452, %v1410
  %v1454 = vadd.f32 %v1453, %v1411
  %v1455 = vadd.f32 %v1454, %v1412
  %v1456 = vadd.f32 %v1455, %v1413
  %v1457 = vadd.f32 %v1456, %v1414
  %v1458 = vadd.f32 %v1457, %v1415
  %v1459 = vadd.f32 %v1458, %v1416
  %v1460 = vadd.f32 %v1459, %v1417
  %v1461 = vadd.f32 %v1460, %v1418
  %v1462 = vadd.f32 %v1461, %v1419
  %v1463 = vadd.f32 %v1462, %v1420
  %v1464 = vadd.f32 %v1463, %v1421
  %v1465 = vadd.f32 %v1464, %v1422
  %v1466 = vadd.f32 %v1465, %v1423
  %v1467 = vadd.f32 %v1466, %v1424
  %v1468 = vadd.f32 %v1467, %v1425
  %v1469 = vadd.f32 %v1468, %v1426
  %v1470 = vadd.f32 %v1469, %v1427
  %v1471 = vrot.slane %v1470, 4
  %v1472 = vadd.f32 %v1470, %v1471
  %v1473 = vrot.slane %v1472, 2
  %v1474 = vadd.f32 %v1472, %v1473
  %v1475 = vrot.slane %v1474, 1
  %v1476 = vadd.f32 %v1474, %v1475
  %v1477 = vadd.f32 %v1383, %v1476
  %1478 = vst [vmem:[#allocation4] sm:$0x1] %v1477
  // Predicated region
  $region26: #{generator_forward.6} parent=0 // pred_check
    %p1479 = pneg %p20
  $region27: #{generator_forward.6} parent=0 // pred_check_branch
    %1481 = sbr.rel (%p1479) target = $region29
  $region28: #{generator_forward.6} parent=0 // pred_region
    %v1482 = vld [vmem:[#allocation3] sm:$0x1]
    %v1483 = vmul.f32 %v1482, 0.00295858
    %v1484 = vld [vmem:[#allocation4] sm:$0x1]
    %v1485 = vmul.f32 %v1484, 0.00295858
    %v1486 = vmul.f32 %v1483, %v1483
    %v1487 = vsub.f32 %v1485, %v1486
    %v1488 = vmax.f32 %v1487, 0.0
    %v1489 = vld [vmem:[%s3] sm:$0x1]
    %v1490 = vadd.f32 %v1488, 1e-05
    %v1491 = vrsqrt.pop %v1490
    %v1492 = vmul.f32 %v1491, %v1490
    %v1493 = vmul.f32 %v1492, %v1491
    %v1494 = vmul.f32 0.5, %v1493
    %v1495 = vsub.f32 1.5, %v1494
    %v1496 = vmul.f32 %v1491, %v1495
    %vm1497 = vweird.f32 %v1490
    %vm1498 = vweird.f32 %v1491
    %vm1499 = vmor %vm1497, %vm1498
    %v1500 = vsel %vm1499, %v1491, %v1496
    %v1501 = vmul.f32 %v1489, %v1500
    %v1502 = vld [vmem:[%s4] sm:$0x1]
    %v1503 = vmul.f32 %v1483, %v1501
    %v1504 = vsub.f32 %v1502, %v1503
    %v1505 = vld [vmem:[#allocation2] sm:$0xff]
    %v1506 = vld [vmem:[#allocation2 + $0x8] sm:$0xff]
    %v1507 = vld [vmem:[#allocation2 + $0x10] sm:$0xff]
    %v1508 = vld [vmem:[#allocation2 + $0x18] sm:$0xff]
    %v1509 = vld [vmem:[#allocation2 + $0x20] sm:$0xff]
    %v1510 = vld [vmem:[#allocation2 + $0x28] sm:$0xff]
    %v1511 = vld [vmem:[#allocation2 + $0x30] sm:$0xff]
    %v1512 = vld [vmem:[#allocation2 + $0x38] sm:$0xff]
    %v1513 = vld [vmem:[#allocation2 + $0x40] sm:$0xff]
    %v1514 = vld [vmem:[#allocation2 + $0x48] sm:$0xff]
    %v1515 = vld [vmem:[#allocation2 + $0x50] sm:$0xff]
    %v1516 = vld [vmem:[#allocation2 + $0x58] sm:$0xff]
    %v1517 = vld [vmem:[#allocation2 + $0x60] sm:$0xff]
    %v1518 = vld [vmem:[#allocation2 + $0x68] sm:$0xff]
    %v1519 = vld [vmem:[#allocation2 + $0x70] sm:$0xff]
    %v1520 = vld [vmem:[#allocation2 + $0x78] sm:$0xff]
    %v1521 = vld [vmem:[#allocation2 + $0x80] sm:$0xff]
    %v1522 = vld [vmem:[#allocation2 + $0x88] sm:$0xff]
    %v1523 = vld [vmem:[#allocation2 + $0x90] sm:$0xff]
    %v1524 = vld [vmem:[#allocation2 + $0x98] sm:$0xff]
    %v1525 = vld [vmem:[#allocation2 + $0xa0] sm:$0xff]
    %v1526 = vld [vmem:[#allocation2 + $0xa8] sm:$0xff]
    %v1527 = vld [vmem:[#allocation2 + $0xb0] sm:$0xff]
    %v1528 = vld [vmem:[#allocation2 + $0xb8] sm:$0xff]
    %v1529 = vld [vmem:[#allocation2 + $0xc0] sm:$0xff]
    %v1530 = vld [vmem:[#allocation2 + $0xc8] sm:$0xff]
    %v1531 = vld [vmem:[#allocation2 + $0xd0] sm:$0xff]
    %v1532 = vld [vmem:[#allocation2 + $0xd8] sm:$0xff]
    %v1533 = vld [vmem:[#allocation2 + $0xe0] sm:$0xff]
    %v1534 = vld [vmem:[#allocation2 + $0xe8] sm:$0xff]
    %v1535 = vld [vmem:[#allocation2 + $0xf0] sm:$0xff]
    %v1536 = vld [vmem:[#allocation2 + $0xf8] sm:$0xff]
    %v1537 = vld [vmem:[#allocation2 + $0x100] sm:$0xff]
    %v1538 = vld [vmem:[#allocation2 + $0x108] sm:$0xff]
    %v1539 = vld [vmem:[#allocation2 + $0x110] sm:$0xff]
    %v1540 = vld [vmem:[#allocation2 + $0x118] sm:$0xff]
    %v1541 = vld [vmem:[#allocation2 + $0x120] sm:$0xff]
    %v1542 = vld [vmem:[#allocation2 + $0x128] sm:$0xff]
    %v1543 = vld [vmem:[#allocation2 + $0x130] sm:$0xff]
    %v1544 = vld [vmem:[#allocation2 + $0x138] sm:$0xff]
    %v1545 = vld [vmem:[#allocation2 + $0x140] sm:$0xff]
    %v1546 = vld [vmem:[#allocation2 + $0x148] sm:$0xff]
    %v1547 = vld [vmem:[#allocation2 + $0x150] sm:$0xff]
    %v1548 = vld [vmem:[#allocation2 + $0x158] sm:$0xff]
    %v1550 = vperm.slane %v1501, 0
    %v1552 = vmul.f32 %v1505, %v1550
    %v1553 = vmul.f32 %v1506, %v1550
    %v1554 = vmul.f32 %v1507, %v1550
    %v1555 = vmul.f32 %v1508, %v1550
    %v1556 = vmul.f32 %v1509, %v1550
    %v1557 = vmul.f32 %v1510, %v1550
    %v1558 = vmul.f32 %v1511, %v1550
    %v1559 = vmul.f32 %v1512, %v1550
    %v1560 = vmul.f32 %v1513, %v1550
    %v1561 = vmul.f32 %v1514, %v1550
    %v1562 = vmul.f32 %v1515, %v1550
    %v1563 = vmul.f32 %v1516, %v1550
    %v1564 = vmul.f32 %v1517, %v1550
    %v1565 = vmul.f32 %v1518, %v1550
    %v1566 = vmul.f32 %v1519, %v1550
    %v1567 = vmul.f32 %v1520, %v1550
    %v1568 = vmul.f32 %v1521, %v1550
    %v1569 = vmul.f32 %v1522, %v1550
    %v1570 = vmul.f32 %v1523, %v1550
    %v1571 = vmul.f32 %v1524, %v1550
    %v1572 = vmul.f32 %v1525, %v1550
    %v1573 = vmul.f32 %v1526, %v1550
    %v1574 = vmul.f32 %v1527, %v1550
    %v1575 = vmul.f32 %v1528, %v1550
    %v1576 = vmul.f32 %v1529, %v1550
    %v1577 = vmul.f32 %v1530, %v1550
    %v1578 = vmul.f32 %v1531, %v1550
    %v1579 = vmul.f32 %v1532, %v1550
    %v1580 = vmul.f32 %v1533, %v1550
    %v1581 = vmul.f32 %v1534, %v1550
    %v1582 = vmul.f32 %v1535, %v1550
    %v1583 = vmul.f32 %v1536, %v1550
    %v1584 = vmul.f32 %v1537, %v1550
    %v1585 = vmul.f32 %v1538, %v1550
    %v1586 = vmul.f32 %v1539, %v1550
    %v1587 = vmul.f32 %v1540, %v1550
    %v1588 = vmul.f32 %v1541, %v1550
    %v1589 = vmul.f32 %v1542, %v1550
    %v1590 = vmul.f32 %v1543, %v1550
    %v1591 = vmul.f32 %v1544, %v1550
    %v1592 = vmul.f32 %v1545, %v1550
    %v1593 = vmul.f32 %v1546, %v1550
    %v1594 = vmul.f32 %v1547, %v1550
    %v1595 = vmul.f32 %v1548, %v1550
    %v1597 = vperm.slane %v1504, 0
    %v1599 = vadd.f32 %v1552, %v1597
    %v1600 = vadd.f32 %v1553, %v1597
    %v1601 = vadd.f32 %v1554, %v1597
    %v1602 = vadd.f32 %v1555, %v1597
    %v1603 = vadd.f32 %v1556, %v1597
    %v1604 = vadd.f32 %v1557, %v1597
    %v1605 = vadd.f32 %v1558, %v1597
    %v1606 = vadd.f32 %v1559, %v1597
    %v1607 = vadd.f32 %v1560, %v1597
    %v1608 = vadd.f32 %v1561, %v1597
    %v1609 = vadd.f32 %v1562, %v1597
    %v1610 = vadd.f32 %v1563, %v1597
    %v1611 = vadd.f32 %v1564, %v1597
    %v1612 = vadd.f32 %v1565, %v1597
    %v1613 = vadd.f32 %v1566, %v1597
    %v1614 = vadd.f32 %v1567, %v1597
    %v1615 = vadd.f32 %v1568, %v1597
    %v1616 = vadd.f32 %v1569, %v1597
    %v1617 = vadd.f32 %v1570, %v1597
    %v1618 = vadd.f32 %v1571, %v1597
    %v1619 = vadd.f32 %v1572, %v1597
    %v1620 = vadd.f32 %v1573, %v1597
    %v1621 = vadd.f32 %v1574, %v1597
    %v1622 = vadd.f32 %v1575, %v1597
    %v1623 = vadd.f32 %v1576, %v1597
    %v1624 = vadd.f32 %v1577, %v1597
    %v1625 = vadd.f32 %v1578, %v1597
    %v1626 = vadd.f32 %v1579, %v1597
    %v1627 = vadd.f32 %v1580, %v1597
    %v1628 = vadd.f32 %v1581, %v1597
    %v1629 = vadd.f32 %v1582, %v1597
    %v1630 = vadd.f32 %v1583, %v1597
    %v1631 = vadd.f32 %v1584, %v1597
    %v1632 = vadd.f32 %v1585, %v1597
    %v1633 = vadd.f32 %v1586, %v1597
    %v1634 = vadd.f32 %v1587, %v1597
    %v1635 = vadd.f32 %v1588, %v1597
    %v1636 = vadd.f32 %v1589, %v1597
    %v1637 = vadd.f32 %v1590, %v1597
    %v1638 = vadd.f32 %v1591, %v1597
    %v1639 = vadd.f32 %v1592, %v1597
    %v1640 = vadd.f32 %v1593, %v1597
    %v1641 = vadd.f32 %v1594, %v1597
    %v1642 = vadd.f32 %v1595, %v1597
    %v1643 = vmax.f32 %v1599, 0.0
    %v1644 = vmax.f32 %v1600, 0.0
    %v1645 = vmax.f32 %v1601, 0.0
    %v1646 = vmax.f32 %v1602, 0.0
    %v1647 = vmax.f32 %v1603, 0.0
    %v1648 = vmax.f32 %v1604, 0.0
    %v1649 = vmax.f32 %v1605, 0.0
    %v1650 = vmax.f32 %v1606, 0.0
    %v1651 = vmax.f32 %v1607, 0.0
    %v1652 = vmax.f32 %v1608, 0.0
    %v1653 = vmax.f32 %v1609, 0.0
    %v1654 = vmax.f32 %v1610, 0.0
    %v1655 = vmax.f32 %v1611, 0.0
    %v1656 = vmax.f32 %v1612, 0.0
    %v1657 = vmax.f32 %v1613, 0.0
    %v1658 = vmax.f32 %v1614, 0.0
    %v1659 = vmax.f32 %v1615, 0.0
    %v1660 = vmax.f32 %v1616, 0.0
    %v1661 = vmax.f32 %v1617, 0.0
    %v1662 = vmax.f32 %v1618, 0.0
    %v1663 = vmax.f32 %v1619, 0.0
    %v1664 = vmax.f32 %v1620, 0.0
    %v1665 = vmax.f32 %v1621, 0.0
    %v1666 = vmax.f32 %v1622, 0.0
    %v1667 = vmax.f32 %v1623, 0.0
    %v1668 = vmax.f32 %v1624, 0.0
    %v1669 = vmax.f32 %v1625, 0.0
    %v1670 = vmax.f32 %v1626, 0.0
    %v1671 = vmax.f32 %v1627, 0.0
    %v1672 = vmax.f32 %v1628, 0.0
    %v1673 = vmax.f32 %v1629, 0.0
    %v1674 = vmax.f32 %v1630, 0.0
    %v1675 = vmax.f32 %v1631, 0.0
    %v1676 = vmax.f32 %v1632, 0.0
    %v1677 = vmax.f32 %v1633, 0.0
    %v1678 = vmax.f32 %v1634, 0.0
    %v1679 = vmax.f32 %v1635, 0.0
    %v1680 = vmax.f32 %v1636, 0.0
    %v1681 = vmax.f32 %v1637, 0.0
    %v1682 = vmax.f32 %v1638, 0.0
    %v1683 = vmax.f32 %v1639, 0.0
    %v1684 = vmax.f32 %v1640, 0.0
    %v1685 = vmax.f32 %v1641, 0.0
    %v1686 = vmax.f32 %v1642, 0.0
    %v1687 = vpack.c.bf16 %v1643, %v1643
    %v1688 = vpack.c.bf16 %v1644, %v1644
    %v1689 = vpack.c.bf16 %v1645, %v1645
    %v1690 = vpack.c.bf16 %v1646, %v1646
    %v1691 = vpack.c.bf16 %v1647, %v1647
    %v1692 = vpack.c.bf16 %v1648, %v1648
    %v1693 = vpack.c.bf16 %v1649, %v1649
    %v1694 = vpack.c.bf16 %v1650, %v1650
    %v1695 = vpack.c.bf16 %v1651, %v1651
    %v1696 = vpack.c.bf16 %v1652, %v1652
    %v1697 = vpack.c.bf16 %v1653, %v1653
    %v1698 = vpack.c.bf16 %v1654, %v1654
    %v1699 = vpack.c.bf16 %v1655, %v1655
    %v1700 = vpack.c.bf16 %v1656, %v1656
    %v1701 = vpack.c.bf16 %v1657, %v1657
    %v1702 = vpack.c.bf16 %v1658, %v1658
    %v1703 = vpack.c.bf16 %v1659, %v1659
    %v1704 = vpack.c.bf16 %v1660, %v1660
    %v1705 = vpack.c.bf16 %v1661, %v1661
    %v1706 = vpack.c.bf16 %v1662, %v1662
    %v1707 = vpack.c.bf16 %v1663, %v1663
    %v1708 = vpack.c.bf16 %v1664, %v1664
    %v1709 = vpack.c.bf16 %v1665, %v1665
    %v1710 = vpack.c.bf16 %v1666, %v1666
    %v1711 = vpack.c.bf16 %v1667, %v1667
    %v1712 = vpack.c.bf16 %v1668, %v1668
    %v1713 = vpack.c.bf16 %v1669, %v1669
    %v1714 = vpack.c.bf16 %v1670, %v1670
    %v1715 = vpack.c.bf16 %v1671, %v1671
    %v1716 = vpack.c.bf16 %v1672, %v1672
    %v1717 = vpack.c.bf16 %v1673, %v1673
    %v1718 = vpack.c.bf16 %v1674, %v1674
    %v1719 = vpack.c.bf16 %v1675, %v1675
    %v1720 = vpack.c.bf16 %v1676, %v1676
    %v1721 = vpack.c.bf16 %v1677, %v1677
    %v1722 = vpack.c.bf16 %v1678, %v1678
    %v1723 = vpack.c.bf16 %v1679, %v1679
    %v1724 = vpack.c.bf16 %v1680, %v1680
    %v1725 = vpack.c.bf16 %v1681, %v1681
    %v1726 = vpack.c.bf16 %v1682, %v1682
    %v1727 = vpack.c.bf16 %v1683, %v1683
    %v1728 = vpack.c.bf16 %v1684, %v1684
    %v1729 = vpack.c.bf16 %v1685, %v1685
    %v1730 = vpack.c.bf16 %v1686, %v1686
    %1731 = vst [vmem:[%s5] sm:$0xf] %v1687
    %1732 = vst [vmem:[%s5 + $0x4] sm:$0xf] %v1688
    %1733 = vst [vmem:[%s5 + $0x8] sm:$0xf] %v1689
    %1734 = vst [vmem:[%s5 + $0xc] sm:$0xf] %v1690
    %1735 = vst [vmem:[%s5 + $0x10] sm:$0xf] %v1691
    %1736 = vst [vmem:[%s5 + $0x14] sm:$0xf] %v1692
    %1737 = vst [vmem:[%s5 + $0x18] sm:$0xf] %v1693
    %1738 = vst [vmem:[%s5 + $0x1c] sm:$0xf] %v1694
    %1739 = vst [vmem:[%s5 + $0x20] sm:$0xf] %v1695
    %1740 = vst [vmem:[%s5 + $0x24] sm:$0xf] %v1696
    %1741 = vst [vmem:[%s5 + $0x28] sm:$0xf] %v1697
    %1742 = vst [vmem:[%s5 + $0x2c] sm:$0xf] %v1698
    %1743 = vst [vmem:[%s5 + $0x30] sm:$0xf] %v1699
    %1744 = vst [vmem:[%s5 + $0x34] sm:$0xf] %v1700
    %1745 = vst [vmem:[%s5 + $0x38] sm:$0xf] %v1701
    %1746 = vst [vmem:[%s5 + $0x3c] sm:$0xf] %v1702
    %1747 = vst [vmem:[%s5 + $0x40] sm:$0xf] %v1703
    %1748 = vst [vmem:[%s5 + $0x44] sm:$0xf] %v1704
    %1749 = vst [vmem:[%s5 + $0x48] sm:$0xf] %v1705
    %1750 = vst [vmem:[%s5 + $0x4c] sm:$0xf] %v1706
    %1751 = vst [vmem:[%s5 + $0x50] sm:$0xf] %v1707
    %1752 = vst [vmem:[%s5 + $0x54] sm:$0xf] %v1708
    %1753 = vst [vmem:[%s5 + $0x58] sm:$0xf] %v1709
    %1754 = vst [vmem:[%s5 + $0x5c] sm:$0xf] %v1710
    %1755 = vst [vmem:[%s5 + $0x60] sm:$0xf] %v1711
    %1756 = vst [vmem:[%s5 + $0x64] sm:$0xf] %v1712
    %1757 = vst [vmem:[%s5 + $0x68] sm:$0xf] %v1713
    %1758 = vst [vmem:[%s5 + $0x6c] sm:$0xf] %v1714
    %1759 = vst [vmem:[%s5 + $0x70] sm:$0xf] %v1715
    %1760 = vst [vmem:[%s5 + $0x74] sm:$0xf] %v1716
    %1761 = vst [vmem:[%s5 + $0x78] sm:$0xf] %v1717
    %1762 = vst [vmem:[%s5 + $0x7c] sm:$0xf] %v1718
    %1763 = vst [vmem:[%s5 + $0x80] sm:$0xf] %v1719
    %1764 = vst [vmem:[%s5 + $0x84] sm:$0xf] %v1720
    %1765 = vst [vmem:[%s5 + $0x88] sm:$0xf] %v1721
    %1766 = vst [vmem:[%s5 + $0x8c] sm:$0xf] %v1722
    %1767 = vst [vmem:[%s5 + $0x90] sm:$0xf] %v1723
    %1768 = vst [vmem:[%s5 + $0x94] sm:$0xf] %v1724
    %1769 = vst [vmem:[%s5 + $0x98] sm:$0xf] %v1725
    %1770 = vst [vmem:[%s5 + $0x9c] sm:$0xf] %v1726
    %1771 = vst [vmem:[%s5 + $0xa0] sm:$0xf] %v1727
    %1772 = vst [vmem:[%s5 + $0xa4] sm:$0xf] %v1728
    %1773 = vst [vmem:[%s5 + $0xa8] sm:$0xf] %v1729
    %1774 = vst [vmem:[%s5 + $0xac] sm:$0xf] %v1730
  $region29: #{generator_forward.6} parent=0 // pred_fallthru
    _
  // Predicated region
  $region30: #{generator_forward.6} parent=0 // pred_check
    _
  $region31: #{generator_forward.6} parent=0 // pred_check_branch
    %1776 = sbr.rel (0) target = $region33
  $region32: #{generator_forward.6} parent=0 // pred_region
    _
  $region33: #{generator_forward.6} parent=0 // pred_fallthru
    _
  // Predicated region
  $region34: #{generator_forward.6} parent=0 // pred_check
    _
  $region35: #{generator_forward.6} parent=0 // pred_check_branch
    %1778 = sbr.rel (0) target = $region37
  $region36: #{generator_forward.6} parent=0 // pred_region
    _
  $region37: #{generator_forward.6} parent=0 // pred_fallthru
    _

// kernel: generator_forward.7
$region0: #{generator_forward.7}
  #allocation0 [shape = 'u32[]', space=smem, size = 0x4, offset = 0x4, fixed_abs, tag = 'smem constant byte address 0x4 - core index']
  #allocation1 [shape = 'u32[72,128]{1,0:T(1,128)}', space=vmem, size = 0x9000, scoped, tag = 'internal scratch']
  %s0 = inlined_call_operand.vmem [shape: bf16[512,256], index: 0, kind: input, shape index: {}]
  %s1 = inlined_call_operand.vmem [shape: bf16[256,128], index: 1, kind: input, shape index: {}]
  %s2 = inlined_call_operand.vmem [shape: f32[1,128], index: 2, kind: input, shape index: {}]
  %s3 = inlined_call_operand.vmem [shape: f32[512,128], index: 3, kind: output, shape index: {}]
  %s4 = sld [smem:[#allocation0]]
  $region45: #{generator_forward.7} parent=0
    _
  %s6 = ssub.s32 1, %s4
  %s7 = scalar_select 0, %s6, %s4
  loop: start=0, step=1, limit=4
  $region2: #{generator_forward.7} parent=0 // loop_pre_header
    _
  $region3: #{generator_forward.7} parent=0 // loop_header
    %s9 = sphi 0, %s13
    %p10 = scmp.ge.s32.totalorder %s9, 4
    %s19 = sphi 0, %s21
    %s22 = sphi 0, %s19
    %s23 = sphi 0, %s22
    %s39 = sphi 0, %s23
    %s43 = sphi 0, %s43
    %s45 = sphi 0, %s43
    %s46 = sphi 0, %s45
    %s60 = sphi 0, %s46
    %s64 = sphi 0, %s64
    %s66 = sphi 0, %s64
    %s67 = sphi 0, %s66
    %s81 = sphi 0, %s67
    %s87 = sphi 0, %s89
    %s90 = sphi 0, %s87
    %s91 = sphi 0, %s90
    %s107 = sphi 0, %s91
  $region4: #{generator_forward.7} parent=0 // loop_header_branch
    %12 = sbr.rel (%p10) target = $region8
  $region5: #{generator_forward.7} parent=0 // loop_body
    %s14 = ssub.s32 %s9, 1
    %s15 = ssub.s32 %s9, 2
    %s16 = sadd.s32 %s9, 1
    %s17 = ssub.s32 %s9, %s16
    %p18 = scmp.eq.s32.totalorder %s17, 0
    %s20 = sadd.s32 %s19, 1
    %s21 = scalar_select %p18, %s19, %s20
    %p24 = pneg %p18
    %p25 = scmp.eq.s32.totalorder %s9, 1
    %p26 = por %p24, %p25
    %p27 = scmp.ne.s32.totalorder %s19, %s22
    %p28 = scmp.eq.s32.totalorder %s9, 0
    %p29 = por %p27, %p28
    %p30 = scmp.ne.s32.totalorder %s19, %s22
    %p31 = scmp.eq.s32.totalorder %s14, 1
    %p32 = por %p30, %p31
    %p33 = scmp.ne.s32.totalorder %s22, %s23
    %p34 = scmp.eq.s32.totalorder %s14, 0
    %p35 = por %p33, %p34
    %p36 = scmp.ne.s32.totalorder %s22, %s23
    %p37 = scmp.eq.s32.totalorder %s15, 1
    %p38 = por %p36, %p37
    %p40 = scmp.ne.s32.totalorder %s23, %s39
    %p41 = scmp.eq.s32.totalorder %s15, 0
    %p42 = por %p40, %p41
    %s44 = sadd.s32 %s43, 1
    %p47 = scmp.eq.s32.totalorder %s9, 1
    %p48 = scmp.ne.s32.totalorder %s43, %s45
    %p49 = scmp.eq.s32.totalorder %s9, 0
    %p50 = por %p48, %p49
    %p51 = scmp.ne.s32.totalorder %s43, %s45
    %p52 = scmp.eq.s32.totalorder %s14, 1
    %p53 = por %p51, %p52
    %p54 = scmp.ne.s32.totalorder %s45, %s46
    %p55 = scmp.eq.s32.totalorder %s14, 0
    %p56 = por %p54, %p55
    %p57 = scmp.ne.s32.totalorder %s45, %s46
    %p58 = scmp.eq.s32.totalorder %s15, 1
    %p59 = por %p57, %p58
    %p61 = scmp.ne.s32.totalorder %s46, %s60
    %p62 = scmp.eq.s32.totalorder %s15, 0
    %p63 = por %p61, %p62
    %s65 = sadd.s32 %s64, 1
    %p68 = scmp.eq.s32.totalorder %s9, 1
    %p69 = scmp.ne.s32.totalorder %s64, %s66
    %p70 = scmp.eq.s32.totalorder %s9, 0
    %p71 = por %p69, %p70
    %p72 = scmp.ne.s32.totalorder %s64, %s66
    %p73 = scmp.eq.s32.totalorder %s14, 1
    %p74 = por %p72, %p73
    %p75 = scmp.ne.s32.totalorder %s66, %s67
    %p76 = scmp.eq.s32.totalorder %s14, 0
    %p77 = por %p75, %p76
    %p78 = scmp.ne.s32.totalorder %s66, %s67
    %p79 = scmp.eq.s32.totalorder %s15, 1
    %p80 = por %p78, %p79
    %p82 = scmp.ne.s32.totalorder %s67, %s81
    %p83 = scmp.eq.s32.totalorder %s15, 0
    %p84 = por %p82, %p83
    %s85 = ssub.s32 %s9, %s16
    %p86 = scmp.eq.s32.totalorder %s85, 0
    %s88 = sadd.s32 %s87, 1
    %s89 = scalar_select %p86, %s87, %s88
    %p92 = pneg %p86
    %p93 = scmp.eq.s32.totalorder %s9, 1
    %p94 = por %p92, %p93
    %p95 = scmp.ne.s32.totalorder %s87, %s90
    %p96 = scmp.eq.s32.totalorder %s9, 0
    %p97 = por %p95, %p96
    %p98 = scmp.ne.s32.totalorder %s87, %s90
    %p99 = scmp.eq.s32.totalorder %s14, 1
    %p100 = por %p98, %p99
    %p101 = scmp.ne.s32.totalorder %s90, %s91
    %p102 = scmp.eq.s32.totalorder %s14, 0
    %p103 = por %p101, %p102
    %p104 = scmp.ne.s32.totalorder %s90, %s91
    %p105 = scmp.eq.s32.totalorder %s15, 1
    %p106 = por %p104, %p105
    %p108 = scmp.ne.s32.totalorder %s91, %s107
    %p109 = scmp.eq.s32.totalorder %s15, 0
    %p110 = por %p108, %p109
    %p111 = scmp.le.s32.totalorder 1, %s9
    %p112 = scmp.lt.s32.totalorder %s9, 3
    %p113 = pnand %p111, %p112
    %p114 = pneg %p113
    // Predicated region
    $region9: #{generator_forward.7} parent=5 // pred_check
      _
    $region10: #{generator_forward.7} parent=5 // pred_check_branch
      %116 = sbr.rel (%p113) target = $region12
    $region11: #{generator_forward.7} parent=5 // pred_region
      %s117 = ssub.s32 %s9, 1
      // Predicated region
      $region13: #{generator_forward.7} parent=11 // pred_check
        %p118 = pneg %p56
      $region14: #{generator_forward.7} parent=11 // pred_check_branch
        %120 = sbr.rel (%p118) target = $region16
      $region15: #{generator_forward.7} parent=11 // pred_region
        _
      $region16: #{generator_forward.7} parent=11 // pred_fallthru
        _
      // Predicated region
      $region17: #{generator_forward.7} parent=11 // pred_check
        %p121 = pneg %p77
      $region18: #{generator_forward.7} parent=11 // pred_check_branch
        %123 = sbr.rel (%p121) target = $region20
      $region19: #{generator_forward.7} parent=11 // pred_region
        _
      $region20: #{generator_forward.7} parent=11 // pred_fallthru
        _
    $region12: #{generator_forward.7} parent=5 // pred_fallthru
      _
    %p124 = scmp.lt.s32.totalorder %s9, 2
    // Predicated region
    $region21: #{generator_forward.7} parent=5 // pred_check
      %p125 = pneg %p124
    $region22: #{generator_forward.7} parent=5 // pred_check_branch
      %127 = sbr.rel (%p125) target = $region24
    $region23: #{generator_forward.7} parent=5 // pred_region
      // Predicated region
      $region25: #{generator_forward.7} parent=23 // pred_check
        %p128 = pneg %p29
      $region26: #{generator_forward.7} parent=23 // pred_check_branch
        %130 = sbr.rel (%p128) target = $region28
      $region27: #{generator_forward.7} parent=23 // pred_region
        %s131 = smul.u32 32, %s9
        %p132 = scmp.lt.s32.totalorder %s131, 63
        %s133 = scalar_select %p132, %s131, 63
        %s134 = smul.addr %s133, 2
        %s135 = smul.addr %s134, 4
        %s136 = scalar_lea.vmem %s0, %s135
        %s137 = smul.u32 32, %s9
      $region28: #{generator_forward.7} parent=23 // pred_fallthru
        _
    $region24: #{generator_forward.7} parent=5 // pred_fallthru
      _
    %p138 = scmp.le.s32.totalorder 1, %s9
    %p139 = scmp.lt.s32.totalorder %s9, 3
    %p140 = pnand %p138, %p139
    %p141 = pneg %p140
    // Predicated region
    $region29: #{generator_forward.7} parent=5 // pred_check
      _
    $region30: #{generator_forward.7} parent=5 // pred_check_branch
      %143 = sbr.rel (%p140) target = $region32
    $region31: #{generator_forward.7} parent=5 // pred_region
      %s144 = ssub.s32 %s9, 1
      %s145 = smul.u32 32, %s14
      %p146 = scmp.lt.s32.totalorder %s145, 63
      %s147 = scalar_select %p146, %s145, 63
      %s148 = smul.addr %s147, 2
      %s149 = smul.addr %s148, 4
      %s150 = scalar_lea.vmem %s0, %s149
      %p151 = pneg %p35
      %p152 = pneg %p32
      %p153 = pneg %p56
      %p154 = pneg %p53
      %p155 = pneg %p77
      %p156 = pneg %p74
      %p157 = pneg %p103
      %p158 = pneg %p100
      %s159 = smul.u32 32, %s14
      %p160 = scmp.lt.s32.totalorder %s159, 63
      %s161 = scalar_select %p160, %s159, 63
      %s162 = smul.addr %s161, 8
      %s163 = scalar_lea.vmem %s3, %s162
      %s164 = smul.u32 32, %s14
      %p165 = scmp.lt.s32.totalorder %s164, 63
      %s166 = scalar_select %p165, %s164, 63
      %s167 = smul.addr %s166, 2
      %s168 = smul.addr %s167, 4
      %s169 = scalar_lea.vmem %s0, %s168
      %s170 = smul.u32 32, %s14
      %s171 = smul.u32 32, %s14
      %p172 = scmp.lt.s32.totalorder %s171, 63
      %s173 = scalar_select %p172, %s171, 63
      %s174 = smul.addr %s173, 8
      %s175 = scalar_lea.vmem %s3, %s174
      %s176 = smul.u32 32, %s14
      %v177 = vld [vmem:[%s169] sm:$0xff]
      %v178 = vld [vmem:[%s169 + $0x8] sm:$0xff]
      %v179 = vld [vmem:[%s169 + $0x10] sm:$0xff]
      %v180 = vld [vmem:[%s169 + $0x18] sm:$0xff]
      %v181 = vld [vmem:[%s169 + $0x20] sm:$0xff]
      %v182 = vld [vmem:[%s169 + $0x28] sm:$0xff]
      %v183 = vld [vmem:[%s169 + $0x30] sm:$0xff]
      %v184 = vld [vmem:[%s169 + $0x38] sm:$0xff]
      %v185 = vld [vmem:[%s169 + $0x40] sm:$0xff]
      %v186 = vld [vmem:[%s169 + $0x48] sm:$0xff]
      %v187 = vld [vmem:[%s169 + $0x50] sm:$0xff]
      %v188 = vld [vmem:[%s169 + $0x58] sm:$0xff]
      %v189 = vld [vmem:[%s169 + $0x60] sm:$0xff]
      %v190 = vld [vmem:[%s169 + $0x68] sm:$0xff]
      %v191 = vld [vmem:[%s169 + $0x70] sm:$0xff]
      %v192 = vld [vmem:[%s169 + $0x78] sm:$0xff]
      %v193 = vld [vmem:[%s169 + $0x80] sm:$0xff]
      %v194 = vld [vmem:[%s169 + $0x88] sm:$0xff]
      %v195 = vld [vmem:[%s169 + $0x90] sm:$0xff]
      %v196 = vld [vmem:[%s169 + $0x98] sm:$0xff]
      %v197 = vld [vmem:[%s169 + $0xa0] sm:$0xff]
      %v198 = vld [vmem:[%s169 + $0xa8] sm:$0xff]
      %v199 = vld [vmem:[%s169 + $0xb0] sm:$0xff]
      %v200 = vld [vmem:[%s169 + $0xb8] sm:$0xff]
      %v201 = vld [vmem:[%s169 + $0xc0] sm:$0xff]
      %v202 = vld [vmem:[%s169 + $0xc8] sm:$0xff]
      %v203 = vld [vmem:[%s169 + $0xd0] sm:$0xff]
      %v204 = vld [vmem:[%s169 + $0xd8] sm:$0xff]
      %v205 = vld [vmem:[%s169 + $0xe0] sm:$0xff]
      %v206 = vld [vmem:[%s169 + $0xe8] sm:$0xff]
      %v207 = vld [vmem:[%s169 + $0xf0] sm:$0xff]
      %v208 = vld [vmem:[%s169 + $0xf8] sm:$0xff]
      %v209 = vld [vmem:[%s1] sm:$0xf]
      %v210 = vld [vmem:[%s1 + $0x4] sm:$0xf]
      %v211 = vld [vmem:[%s1 + $0x8] sm:$0xf]
      %v212 = vld [vmem:[%s1 + $0xc] sm:$0xf]
      %v213 = vld [vmem:[%s1 + $0x10] sm:$0xf]
      %v214 = vld [vmem:[%s1 + $0x14] sm:$0xf]
      %v215 = vld [vmem:[%s1 + $0x18] sm:$0xf]
      %v216 = vld [vmem:[%s1 + $0x1c] sm:$0xf]
      %v217 = vld [vmem:[%s1 + $0x20] sm:$0xf]
      %v218 = vld [vmem:[%s1 + $0x24] sm:$0xf]
      %v219 = vld [vmem:[%s1 + $0x28] sm:$0xf]
      %v220 = vld [vmem:[%s1 + $0x2c] sm:$0xf]
      %v221 = vld [vmem:[%s1 + $0x30] sm:$0xf]
      %v222 = vld [vmem:[%s1 + $0x34] sm:$0xf]
      %v223 = vld [vmem:[%s1 + $0x38] sm:$0xf]
      %v224 = vld [vmem:[%s1 + $0x3c] sm:$0xf]
      %v225 = vld [vmem:[%s1 + $0x40] sm:$0xf]
      %v226 = vld [vmem:[%s1 + $0x44] sm:$0xf]
      %v227 = vld [vmem:[%s1 + $0x48] sm:$0xf]
      %v228 = vld [vmem:[%s1 + $0x4c] sm:$0xf]
      %v229 = vld [vmem:[%s1 + $0x50] sm:$0xf]
      %v230 = vld [vmem:[%s1 + $0x54] sm:$0xf]
      %v231 = vld [vmem:[%s1 + $0x58] sm:$0xf]
      %v232 = vld [vmem:[%s1 + $0x5c] sm:$0xf]
      %v233 = vld [vmem:[%s1 + $0x60] sm:$0xf]
      %v234 = vld [vmem:[%s1 + $0x64] sm:$0xf]
      %v235 = vld [vmem:[%s1 + $0x68] sm:$0xf]
      %v236 = vld [vmem:[%s1 + $0x6c] sm:$0xf]
      %v237 = vld [vmem:[%s1 + $0x70] sm:$0xf]
      %v238 = vld [vmem:[%s1 + $0x74] sm:$0xf]
      %v239 = vld [vmem:[%s1 + $0x78] sm:$0xf]
      %v240 = vld [vmem:[%s1 + $0x7c] sm:$0xf]
      %v241 = vld [vmem:[%s2] sm:$0x1]
      %v243 = vperm.slane %v241, 0
      %v277 = vunpack.c.l.b16 %v177
      %v278 = vunpack.c.h.b16 %v177
      %v279 = vunpack.c.l.b16 %v178
      %v280 = vunpack.c.h.b16 %v178
      %v281 = vunpack.c.l.b16 %v179
      %v282 = vunpack.c.h.b16 %v179
      %v283 = vunpack.c.l.b16 %v180
      %v284 = vunpack.c.h.b16 %v180
      %v285 = vunpack.c.l.b16 %v181
      %v286 = vunpack.c.h.b16 %v181
      %v287 = vunpack.c.l.b16 %v182
      %v288 = vunpack.c.h.b16 %v182
      %v289 = vunpack.c.l.b16 %v183
      %v290 = vunpack.c.h.b16 %v183
      %v291 = vunpack.c.l.b16 %v184
      %v292 = vunpack.c.h.b16 %v184
      %v293 = vunpack.c.l.b16 %v185
      %v294 = vunpack.c.h.b16 %v185
      %v295 = vunpack.c.l.b16 %v186
      %v296 = vunpack.c.h.b16 %v186
      %v297 = vunpack.c.l.b16 %v187
      %v298 = vunpack.c.h.b16 %v187
      %v299 = vunpack.c.l.b16 %v188
      %v300 = vunpack.c.h.b16 %v188
      %v301 = vunpack.c.l.b16 %v189
      %v302 = vunpack.c.h.b16 %v189
      %v303 = vunpack.c.l.b16 %v190
      %v304 = vunpack.c.h.b16 %v190
      %v305 = vunpack.c.l.b16 %v191
      %v306 = vunpack.c.h.b16 %v191
      %v307 = vunpack.c.l.b16 %v192
      %v308 = vunpack.c.h.b16 %v192
      %v309 = vunpack.c.l.b16 %v193
      %v310 = vunpack.c.h.b16 %v193
      %v311 = vunpack.c.l.b16 %v194
      %v312 = vunpack.c.h.b16 %v194
      %v313 = vunpack.c.l.b16 %v195
      %v314 = vunpack.c.h.b16 %v195
      %v315 = vunpack.c.l.b16 %v196
      %v316 = vunpack.c.h.b16 %v196
      %v317 = vunpack.c.l.b16 %v197
      %v318 = vunpack.c.h.b16 %v197
      %v319 = vunpack.c.l.b16 %v198
      %v320 = vunpack.c.h.b16 %v198
      %v321 = vunpack.c.l.b16 %v199
      %v322 = vunpack.c.h.b16 %v199
      %v323 = vunpack.c.l.b16 %v200
      %v324 = vunpack.c.h.b16 %v200
      %v325 = vunpack.c.l.b16 %v201
      %v326 = vunpack.c.h.b16 %v201
      %v327 = vunpack.c.l.b16 %v202
      %v328 = vunpack.c.h.b16 %v202
      %v329 = vunpack.c.l.b16 %v203
      %v330 = vunpack.c.h.b16 %v203
      %v331 = vunpack.c.l.b16 %v204
      %v332 = vunpack.c.h.b16 %v204
      %v333 = vunpack.c.l.b16 %v205
      %v334 = vunpack.c.h.b16 %v205
      %v335 = vunpack.c.l.b16 %v206
      %v336 = vunpack.c.h.b16 %v206
      %v337 = vunpack.c.l.b16 %v207
      %v338 = vunpack.c.h.b16 %v207
      %v339 = vunpack.c.l.b16 %v208
      %v340 = vunpack.c.h.b16 %v208
      %v341 = vpack.c.b16 %v279, %v277
      %v342 = vpack.c.b16 %v280, %v278
      %v343 = vpack.c.b16 %v283, %v281
      %v344 = vpack.c.b16 %v284, %v282
      %v345 = vpack.c.b16 %v287, %v285
      %v346 = vpack.c.b16 %v288, %v286
      %v347 = vpack.c.b16 %v291, %v289
      %v348 = vpack.c.b16 %v292, %v290
      %v349 = vpack.c.b16 %v295, %v293
      %v350 = vpack.c.b16 %v296, %v294
      %v351 = vpack.c.b16 %v299, %v297
      %v352 = vpack.c.b16 %v300, %v298
      %v353 = vpack.c.b16 %v303, %v301
      %v354 = vpack.c.b16 %v304, %v302
      %v355 = vpack.c.b16 %v307, %v305
      %v356 = vpack.c.b16 %v308, %v306
      %v357 = vpack.c.b16 %v311, %v309
      %v358 = vpack.c.b16 %v312, %v310
      %v359 = vpack.c.b16 %v315, %v313
      %v360 = vpack.c.b16 %v316, %v314
      %v361 = vpack.c.b16 %v319, %v317
      %v362 = vpack.c.b16 %v320, %v318
      %v363 = vpack.c.b16 %v323, %v321
      %v364 = vpack.c.b16 %v324, %v322
      %v365 = vpack.c.b16 %v327, %v325
      %v366 = vpack.c.b16 %v328, %v326
      %v367 = vpack.c.b16 %v331, %v329
      %v368 = vpack.c.b16 %v332, %v330
      %v369 = vpack.c.b16 %v335, %v333
      %v370 = vpack.c.b16 %v336, %v334
      %v371 = vpack.c.b16 %v339, %v337
      %v372 = vpack.c.b16 %v340, %v338
      %v437 = vunpack.c.l.b16 %v209
      %v438 = vunpack.c.l.b16 %v210
      %v439 = vunpack.c.l.b16 %v211
      %v440 = vunpack.c.l.b16 %v212
      %v441 = vunpack.c.l.b16 %v213
      %v442 = vunpack.c.l.b16 %v214
      %v443 = vunpack.c.l.b16 %v215
      %v444 = vunpack.c.l.b16 %v216
      %v445 = vunpack.c.l.b16 %v217
      %v446 = vunpack.c.l.b16 %v218
      %v447 = vunpack.c.l.b16 %v219
      %v448 = vunpack.c.l.b16 %v220
      %v449 = vunpack.c.l.b16 %v221
      %v450 = vunpack.c.l.b16 %v222
      %v451 = vunpack.c.l.b16 %v223
      %v452 = vunpack.c.l.b16 %v224
      %v453 = vunpack.c.l.b16 %v225
      %v454 = vunpack.c.l.b16 %v226
      %v455 = vunpack.c.l.b16 %v227
      %v456 = vunpack.c.l.b16 %v228
      %v457 = vunpack.c.l.b16 %v229
      %v458 = vunpack.c.l.b16 %v230
      %v459 = vunpack.c.l.b16 %v231
      %v460 = vunpack.c.l.b16 %v232
      %v461 = vunpack.c.l.b16 %v233
      %v462 = vunpack.c.l.b16 %v234
      %v463 = vunpack.c.l.b16 %v235
      %v464 = vunpack.c.l.b16 %v236
      %v465 = vunpack.c.l.b16 %v237
      %v466 = vunpack.c.l.b16 %v238
      %v467 = vunpack.c.l.b16 %v239
      %v468 = vunpack.c.l.b16 %v240
      %v469 = vpack.c.b16 %v438, %v437
      %v470 = vpack.c.b16 %v440, %v439
      %v471 = vpack.c.b16 %v442, %v441
      %v472 = vpack.c.b16 %v444, %v443
      %v473 = vpack.c.b16 %v446, %v445
      %v474 = vpack.c.b16 %v448, %v447
      %v475 = vpack.c.b16 %v450, %v449
      %v476 = vpack.c.b16 %v452, %v451
      %v477 = vpack.c.b16 %v454, %v453
      %v478 = vpack.c.b16 %v456, %v455
      %v479 = vpack.c.b16 %v458, %v457
      %v480 = vpack.c.b16 %v460, %v459
      %v481 = vpack.c.b16 %v462, %v461
      %v482 = vpack.c.b16 %v464, %v463
      %v483 = vpack.c.b16 %v466, %v465
      %v484 = vpack.c.b16 %v468, %v467
      %501 = vmatpush.bf16.msra.mxu0 %v476
      %502 = vmatpush.bf16.msra.mxu0 %v475
      %503 = vmatpush.bf16.msra.mxu0 %v474
      %504 = vmatpush.bf16.msra.mxu0 %v473
      %505 = vmatpush.bf16.msra.mxu0 %v472
      %506 = vmatpush.bf16.msra.mxu0 %v471
      %507 = vmatpush.bf16.msra.mxu0 %v470
      %508 = vmatpush.bf16.msra.mxu0 %v469
      %509 = vmatmul.bf16.gmra.mxu0 %v341
      %v510 = vpop.f32.mrf.mxu0
      %v511 = vadd.f32 %v243, %v510
      %v512 = vpop.f32.mrf.mxu0
      %v513 = vadd.f32 %v243, %v512
      %514 = vmatmul.bf16.gmra.mxu0 %v343
      %v515 = vpop.f32.mrf.mxu0
      %v516 = vadd.f32 %v243, %v515
      %v517 = vpop.f32.mrf.mxu0
      %v518 = vadd.f32 %v243, %v517
      %519 = vmatmul.bf16.gmra.mxu0 %v345
      %v520 = vpop.f32.mrf.mxu0
      %v521 = vadd.f32 %v243, %v520
      %v522 = vpop.f32.mrf.mxu0
      %v523 = vadd.f32 %v243, %v522
      %524 = vmatmul.bf16.gmra.mxu0 %v347
      %v525 = vpop.f32.mrf.mxu0
      %v526 = vadd.f32 %v243, %v525
      %v527 = vpop.f32.mrf.mxu0
      %v528 = vadd.f32 %v243, %v527
      %529 = vmatmul.bf16.gmra.mxu0 %v349
      %v530 = vpop.f32.mrf.mxu0
      %v531 = vadd.f32 %v243, %v530
      %v532 = vpop.f32.mrf.mxu0
      %v533 = vadd.f32 %v243, %v532
      %534 = vmatmul.bf16.gmra.mxu0 %v351
      %v535 = vpop.f32.mrf.mxu0
      %v536 = vadd.f32 %v243, %v535
      %v537 = vpop.f32.mrf.mxu0
      %v538 = vadd.f32 %v243, %v537
      %539 = vmatmul.bf16.gmra.mxu0 %v353
      %v540 = vpop.f32.mrf.mxu0
      %v541 = vadd.f32 %v243, %v540
      %v542 = vpop.f32.mrf.mxu0
      %v543 = vadd.f32 %v243, %v542
      %544 = vmatmul.bf16.gmra.mxu0 %v355
      %v545 = vpop.f32.mrf.mxu0
      %v546 = vadd.f32 %v243, %v545
      %v547 = vpop.f32.mrf.mxu0
      %v548 = vadd.f32 %v243, %v547
      %549 = vmatmul.bf16.gmra.mxu0 %v357
      %v550 = vpop.f32.mrf.mxu0
      %v551 = vadd.f32 %v243, %v550
      %v552 = vpop.f32.mrf.mxu0
      %v553 = vadd.f32 %v243, %v552
      %554 = vmatmul.bf16.gmra.mxu0 %v359
      %v555 = vpop.f32.mrf.mxu0
      %v556 = vadd.f32 %v243, %v555
      %v557 = vpop.f32.mrf.mxu0
      %v558 = vadd.f32 %v243, %v557
      %559 = vmatmul.bf16.gmra.mxu0 %v361
      %v560 = vpop.f32.mrf.mxu0
      %v561 = vadd.f32 %v243, %v560
      %v562 = vpop.f32.mrf.mxu0
      %v563 = vadd.f32 %v243, %v562
      %564 = vmatmul.bf16.gmra.mxu0 %v363
      %v565 = vpop.f32.mrf.mxu0
      %v566 = vadd.f32 %v243, %v565
      %v567 = vpop.f32.mrf.mxu0
      %v568 = vadd.f32 %v243, %v567
      %569 = vmatmul.bf16.gmra.mxu0 %v365
      %v570 = vpop.f32.mrf.mxu0
      %v571 = vadd.f32 %v243, %v570
      %v572 = vpop.f32.mrf.mxu0
      %v573 = vadd.f32 %v243, %v572
      %574 = vmatmul.bf16.gmra.mxu0 %v367
      %v575 = vpop.f32.mrf.mxu0
      %v576 = vadd.f32 %v243, %v575
      %v577 = vpop.f32.mrf.mxu0
      %v578 = vadd.f32 %v243, %v577
      %579 = vmatmul.bf16.gmra.mxu0 %v369
      %v580 = vpop.f32.mrf.mxu0
      %v581 = vadd.f32 %v243, %v580
      %v582 = vpop.f32.mrf.mxu0
      %v583 = vadd.f32 %v243, %v582
      %584 = vmatmul.bf16.gmra.mxu0 %v371
      %v585 = vpop.f32.mrf.mxu0
      %v586 = vadd.f32 %v243, %v585
      %v587 = vpop.f32.mrf.mxu0
      %v588 = vadd.f32 %v243, %v587
      %589 = vdwg.mxu0
      %590 = vmatpush.bf16.msra.mxu0 %v484
      %591 = vmatpush.bf16.msra.mxu0 %v483
      %592 = vmatpush.bf16.msra.mxu0 %v482
      %593 = vmatpush.bf16.msra.mxu0 %v481
      %594 = vmatpush.bf16.msra.mxu0 %v480
      %595 = vmatpush.bf16.msra.mxu0 %v479
      %596 = vmatpush.bf16.msra.mxu0 %v478
      %597 = vmatpush.bf16.msra.mxu0 %v477
      %598 = vmatmul.bf16.gmra.mxu0 %v342
      %v599 = vpop.f32.mrf.mxu0
      %v600 = vadd.f32 %v511, %v599
      %v601 = vpop.f32.mrf.mxu0
      %v602 = vadd.f32 %v513, %v601
      %603 = vmatmul.bf16.gmra.mxu0 %v344
      %v604 = vpop.f32.mrf.mxu0
      %v605 = vadd.f32 %v516, %v604
      %v606 = vpop.f32.mrf.mxu0
      %v607 = vadd.f32 %v518, %v606
      %608 = vmatmul.bf16.gmra.mxu0 %v346
      %v609 = vpop.f32.mrf.mxu0
      %v610 = vadd.f32 %v521, %v609
      %v611 = vpop.f32.mrf.mxu0
      %v612 = vadd.f32 %v523, %v611
      %613 = vmatmul.bf16.gmra.mxu0 %v348
      %v614 = vpop.f32.mrf.mxu0
      %v615 = vadd.f32 %v526, %v614
      %v616 = vpop.f32.mrf.mxu0
      %v617 = vadd.f32 %v528, %v616
      %618 = vmatmul.bf16.gmra.mxu0 %v350
      %v619 = vpop.f32.mrf.mxu0
      %v620 = vadd.f32 %v531, %v619
      %v621 = vpop.f32.mrf.mxu0
      %v622 = vadd.f32 %v533, %v621
      %623 = vmatmul.bf16.gmra.mxu0 %v352
      %v624 = vpop.f32.mrf.mxu0
      %v625 = vadd.f32 %v536, %v624
      %v626 = vpop.f32.mrf.mxu0
      %v627 = vadd.f32 %v538, %v626
      %628 = vmatmul.bf16.gmra.mxu0 %v354
      %v629 = vpop.f32.mrf.mxu0
      %v630 = vadd.f32 %v541, %v629
      %v631 = vpop.f32.mrf.mxu0
      %v632 = vadd.f32 %v543, %v631
      %633 = vmatmul.bf16.gmra.mxu0 %v356
      %v634 = vpop.f32.mrf.mxu0
      %v635 = vadd.f32 %v546, %v634
      %v636 = vpop.f32.mrf.mxu0
      %v637 = vadd.f32 %v548, %v636
      %638 = vmatmul.bf16.gmra.mxu0 %v358
      %v639 = vpop.f32.mrf.mxu0
      %v640 = vadd.f32 %v551, %v639
      %v641 = vpop.f32.mrf.mxu0
      %v642 = vadd.f32 %v553, %v641
      %643 = vmatmul.bf16.gmra.mxu0 %v360
      %v644 = vpop.f32.mrf.mxu0
      %v645 = vadd.f32 %v556, %v644
      %v646 = vpop.f32.mrf.mxu0
      %v647 = vadd.f32 %v558, %v646
      %648 = vmatmul.bf16.gmra.mxu0 %v362
      %v649 = vpop.f32.mrf.mxu0
      %v650 = vadd.f32 %v561, %v649
      %v651 = vpop.f32.mrf.mxu0
      %v652 = vadd.f32 %v563, %v651
      %653 = vmatmul.bf16.gmra.mxu0 %v364
      %v654 = vpop.f32.mrf.mxu0
      %v655 = vadd.f32 %v566, %v654
      %v656 = vpop.f32.mrf.mxu0
      %v657 = vadd.f32 %v568, %v656
      %658 = vmatmul.bf16.gmra.mxu0 %v366
      %v659 = vpop.f32.mrf.mxu0
      %v660 = vadd.f32 %v571, %v659
      %v661 = vpop.f32.mrf.mxu0
      %v662 = vadd.f32 %v573, %v661
      %663 = vmatmul.bf16.gmra.mxu0 %v368
      %v664 = vpop.f32.mrf.mxu0
      %v665 = vadd.f32 %v576, %v664
      %v666 = vpop.f32.mrf.mxu0
      %v667 = vadd.f32 %v578, %v666
      %668 = vmatmul.bf16.gmra.mxu0 %v370
      %v669 = vpop.f32.mrf.mxu0
      %v670 = vadd.f32 %v581, %v669
      %v671 = vpop.f32.mrf.mxu0
      %v672 = vadd.f32 %v583, %v671
      %673 = vmatmul.bf16.gmra.mxu0 %v372
      %v674 = vpop.f32.mrf.mxu0
      %v675 = vadd.f32 %v586, %v674
      %v676 = vpop.f32.mrf.mxu0
      %v677 = vadd.f32 %v588, %v676
      %678 = vdwg.mxu0
      %v679 = vtanh.pop %v600
      %v680 = vtanh.pop %v602
      %v681 = vtanh.pop %v605
      %v682 = vtanh.pop %v607
      %v683 = vtanh.pop %v610
      %v684 = vtanh.pop %v612
      %v685 = vtanh.pop %v615
      %v686 = vtanh.pop %v617
      %v687 = vtanh.pop %v620
      %v688 = vtanh.pop %v622
      %v689 = vtanh.pop %v625
      %v690 = vtanh.pop %v627
      %v691 = vtanh.pop %v630
      %v692 = vtanh.pop %v632
      %v693 = vtanh.pop %v635
      %v694 = vtanh.pop %v637
      %v695 = vtanh.pop %v640
      %v696 = vtanh.pop %v642
      %v697 = vtanh.pop %v645
      %v698 = vtanh.pop %v647
      %v699 = vtanh.pop %v650
      %v700 = vtanh.pop %v652
      %v701 = vtanh.pop %v655
      %v702 = vtanh.pop %v657
      %v703 = vtanh.pop %v660
      %v704 = vtanh.pop %v662
      %v705 = vtanh.pop %v665
      %v706 = vtanh.pop %v667
      %v707 = vtanh.pop %v670
      %v708 = vtanh.pop %v672
      %v709 = vtanh.pop %v675
      %v710 = vtanh.pop %v677
      %711 = vst [vmem:[%s175] sm:$0xff] %v679
      %712 = vst [vmem:[%s175 + $0x8] sm:$0xff] %v680
      %713 = vst [vmem:[%s175 + $0x10] sm:$0xff] %v681
      %714 = vst [vmem:[%s175 + $0x18] sm:$0xff] %v682
      %715 = vst [vmem:[%s175 + $0x20] sm:$0xff] %v683
      %716 = vst [vmem:[%s175 + $0x28] sm:$0xff] %v684
      %717 = vst [vmem:[%s175 + $0x30] sm:$0xff] %v685
      %718 = vst [vmem:[%s175 + $0x38] sm:$0xff] %v686
      %719 = vst [vmem:[%s175 + $0x40] sm:$0xff] %v687
      %720 = vst [vmem:[%s175 + $0x48] sm:$0xff] %v688
      %721 = vst [vmem:[%s175 + $0x50] sm:$0xff] %v689
      %722 = vst [vmem:[%s175 + $0x58] sm:$0xff] %v690
      %723 = vst [vmem:[%s175 + $0x60] sm:$0xff] %v691
      %724 = vst [vmem:[%s175 + $0x68] sm:$0xff] %v692
      %725 = vst [vmem:[%s175 + $0x70] sm:$0xff] %v693
      %726 = vst [vmem:[%s175 + $0x78] sm:$0xff] %v694
      %727 = vst [vmem:[%s175 + $0x80] sm:$0xff] %v695
      %728 = vst [vmem:[%s175 + $0x88] sm:$0xff] %v696
      %729 = vst [vmem:[%s175 + $0x90] sm:$0xff] %v697
      %730 = vst [vmem:[%s175 + $0x98] sm:$0xff] %v698
      %731 = vst [vmem:[%s175 + $0xa0] sm:$0xff] %v699
      %732 = vst [vmem:[%s175 + $0xa8] sm:$0xff] %v700
      %733 = vst [vmem:[%s175 + $0xb0] sm:$0xff] %v701
      %734 = vst [vmem:[%s175 + $0xb8] sm:$0xff] %v702
      %735 = vst [vmem:[%s175 + $0xc0] sm:$0xff] %v703
      %736 = vst [vmem:[%s175 + $0xc8] sm:$0xff] %v704
      %737 = vst [vmem:[%s175 + $0xd0] sm:$0xff] %v705
      %738 = vst [vmem:[%s175 + $0xd8] sm:$0xff] %v706
      %739 = vst [vmem:[%s175 + $0xe0] sm:$0xff] %v707
      %740 = vst [vmem:[%s175 + $0xe8] sm:$0xff] %v708
      %741 = vst [vmem:[%s175 + $0xf0] sm:$0xff] %v709
      %742 = vst [vmem:[%s175 + $0xf8] sm:$0xff] %v710
      %s743 = smul.u32 32, %s14
      %p744 = scmp.lt.s32.totalorder %s743, 63
      %s745 = scalar_select %p744, %s743, 63
      %s746 = smul.addr %s745, 8
      %s747 = scalar_lea.vmem %s3, %s746
      // Predicated region
      $region33: #{generator_forward.7} parent=31 // pred_check
        %p748 = pneg %p100
      $region34: #{generator_forward.7} parent=31 // pred_check_branch
        %750 = sbr.rel (%p748) target = $region36
      $region35: #{generator_forward.7} parent=31 // pred_region
        %s751 = smul.u32 32, %s14
      $region36: #{generator_forward.7} parent=31 // pred_fallthru
        _
    $region32: #{generator_forward.7} parent=5 // pred_fallthru
      _
    %p752 = scmp.le.s32.totalorder 2, %s9
    // Predicated region
    $region37: #{generator_forward.7} parent=5 // pred_check
      %p753 = pneg %p752
    $region38: #{generator_forward.7} parent=5 // pred_check_branch
      %755 = sbr.rel (%p753) target = $region40
    $region39: #{generator_forward.7} parent=5 // pred_region
      %s756 = ssub.s32 %s9, 2
      // Predicated region
      $region41: #{generator_forward.7} parent=39 // pred_check
        %p757 = pneg %p106
      $region42: #{generator_forward.7} parent=39 // pred_check_branch
        %759 = sbr.rel (%p757) target = $region44
      $region43: #{generator_forward.7} parent=39 // pred_region
        %s760 = smul.u32 32, %s15
        %p761 = scmp.lt.s32.totalorder %s760, 63
        %s762 = scalar_select %p761, %s760, 63
        %s763 = smul.addr %s762, 8
        %s764 = scalar_lea.vmem %s3, %s763
      $region44: #{generator_forward.7} parent=39 // pred_fallthru
        _
    $region40: #{generator_forward.7} parent=5 // pred_fallthru
      _
  $region6: #{generator_forward.7} parent=0 // loop_footer
    %s13 = sadd.s32 1, %s9
  $region7: #{generator_forward.7} parent=0 // loop_footer_branch
    %8 = sbr.rel target = $region3
  $region8: #{generator_forward.7} parent=0 // loop_exit
    _

</llo_original>
